<compile_context>
chip_gen: v7x
topology: tpu7x:2x2x1
jax: 0.10.0
libtpu: 0.0.40
codegen_flags: <defaults>
</compile_context>

<pallas_src>
import jax
import jax.numpy as jnp
from jax.experimental import pallas as pl
from jax.experimental.pallas import tpu as pltpu

EPS = 1e-5


def fused_kernel(x_ref, r_ref, w1_ref, g1_ref, b1_ref, w2_ref, g2_ref, b2_ref,
                 o_ref):
    # Layout: channels on sublanes, spatial positions on lanes.
    #   x_ref, r_ref, o_ref : (C, P)  with P = N*H*W   (f32)
    #   w1_ref, w2_ref      : (Cout, Cin)              (bf16, native conv layout)
    #   g*/b*               : (C, 1)                   (f32)
    x = x_ref[...].astype(jnp.bfloat16)

    # ---- conv2d61 (1x1): y[co, p] = sum_ci W1[co, ci] * x[ci, p]  (MXU, f32 acc)
    y = jnp.dot(w1_ref[...], x, preferred_element_type=jnp.float32)

    # ---- batchnorm2d61 (training-mode batch stats over N*H*W, biased variance),
    #      folded into one per-channel scale/bias FMA.
    mu1 = jnp.mean(y, axis=1, keepdims=True)
    var1 = jnp.mean(y * y, axis=1, keepdims=True) - mu1 * mu1
    s1 = g1_ref[...] * jax.lax.rsqrt(var1 + EPS)          # rsqrt -> EUP slot
    c1 = b1_ref[...] - mu1 * s1
    y = y * s1 + c1

    # ---- residual add + ReLU
    y = jnp.maximum(y + r_ref[...], 0.0)

    # ---- conv2d62 (1x1)
    z = jnp.dot(w2_ref[...], y.astype(jnp.bfloat16),
                preferred_element_type=jnp.float32)

    # ---- batchnorm2d62 (folded, f32 stats)
    mu2 = jnp.mean(z, axis=1, keepdims=True)
    var2 = jnp.mean(z * z, axis=1, keepdims=True) - mu2 * mu2
    s2 = g2_ref[...] * jax.lax.rsqrt(var2 + EPS)
    c2 = b2_ref[...] - mu2 * s2
    o_ref[...] = z * s2 + c2


def fused_block(x197, x191, w1, g1, b1, w2, g2, b2):
    """x197, x191: NCHW float32 (N must be 1).
    w1, w2: (Cout, Cin) conv1x1 weights (bf16 recommended, pre-cast once).
    Returns NCHW float32 of the same shape."""
    n, c, h, w = x197.shape
    assert n == 1, "kernel supports N=1 (matches the reference module)"
    p = n * h * w

    # Free reshapes only — no transposes, no padding (400 channels = 50*8 sublanes).
    x_cp = x197.reshape(c, p)
    r_cp = x191.reshape(c, p)

    vmem = pl.BlockSpec(memory_space=pltpu.MemorySpace.VMEM)
    out_cp = pl.pallas_call(
        fused_kernel,
        out_shape=jax.ShapeDtypeStruct((c, p), jnp.float32),
        in_specs=[vmem] * 8,
        out_specs=vmem,
    )(x_cp, r_cp,
      w1, g1.reshape(c, 1), b1.reshape(c, 1),
      w2, g2.reshape(c, 1), b2.reshape(c, 1))

    return out_cp.reshape(n, c, h, w)


if __name__ == "__main__":
    N, C, H, W = 1, 400, 7, 7

    key = jax.random.PRNGKey(0)
    k_x197, k_x191, k_w1, k_w2 = jax.random.split(key, 4)

    # Inputs (match the reference torch.randn([1, 400, 7, 7]) shapes)
    x197 = jax.random.normal(k_x197, (N, C, H, W), dtype=jnp.float32)
    x191 = jax.random.normal(k_x191, (N, C, H, W), dtype=jnp.float32)

    # Conv weights in native PyTorch layout (Cout, Cin), 1x1 spatial dims squeezed.
    # One-time weight prep (outside jit): cast to bf16 for the MXU; matmul
    # accumulation and BN math remain f32 inside the kernel.
    scale = 1.0 / jnp.sqrt(jnp.float32(C))
    w1 = (jax.random.normal(k_w1, (C, C), dtype=jnp.float32) * scale).astype(jnp.bfloat16)
    w2 = (jax.random.normal(k_w2, (C, C), dtype=jnp.float32) * scale).astype(jnp.bfloat16)

    # BatchNorm affine params: PyTorch default init (gamma=1, beta=0).
    g1 = jnp.ones((C,), dtype=jnp.float32)
    b1 = jnp.zeros((C,), dtype=jnp.float32)
    g2 = jnp.ones((C,), dtype=jnp.float32)
    b2 = jnp.zeros((C,), dtype=jnp.float32)

    out = jax.jit(fused_block)(x197, x191, w1, g1, b1, w2, g2, b2)
    jax.block_until_ready(out)

    assert out.shape == (N, C, H, W), out.shape
    assert bool(jnp.all(jnp.isfinite(out)))
    print("KERNEL_OK")
</pallas_src>

<mosaic_0001>
module attributes {stable_mosaic.version = 11 : i64} {
  func.func @fused_kernel(%arg0: memref<400x49xf32, #tpu.memory_space<vmem>>, %arg1: memref<400x49xf32, #tpu.memory_space<vmem>>, %arg2: memref<400x400xbf16, #tpu.memory_space<vmem>>, %arg3: memref<400x1xf32, #tpu.memory_space<vmem>>, %arg4: memref<400x1xf32, #tpu.memory_space<vmem>>, %arg5: memref<400x400xbf16, #tpu.memory_space<vmem>>, %arg6: memref<400x1xf32, #tpu.memory_space<vmem>>, %arg7: memref<400x1xf32, #tpu.memory_space<vmem>>, %arg8: memref<400x49xf32, #tpu.memory_space<vmem>>) attributes {dimension_semantics = [], scalar_prefetch = 0 : i64, scratch_operands = 0 : i64, tpu.core_type = #tpu.core_type<tc>} {
    %c0 = arith.constant 0 : index
    %c0_0 = arith.constant 0 : index
    %0 = vector.load %arg0[%c0, %c0_0] : memref<400x49xf32, #tpu.memory_space<vmem>>, vector<400x49xf32>
    %1 = arith.truncf %0 : vector<400x49xf32> to vector<400x49xbf16>
    %c0_1 = arith.constant 0 : index
    %c0_2 = arith.constant 0 : index
    %2 = vector.load %arg2[%c0_1, %c0_2] : memref<400x400xbf16, #tpu.memory_space<vmem>>, vector<400x400xbf16>
    %cst = arith.constant dense<0.000000e+00> : vector<400x49xf32>
    %3 = tpu.matmul %2, %1, %cst {dimension_numbers = #tpu.dot_dimension_numbers<[1], [0], [0], [1], [0, 0, 1, 1], [], []>} : vector<400x400xbf16>, vector<400x49xbf16>, vector<400x49xf32> -> vector<400x49xf32>
    %cst_3 = arith.constant dense<0.000000e+00> : vector<400xf32>
    %4 = vector.multi_reduction <add>, %3, %cst_3 [1] : vector<400x49xf32> to vector<400xf32>
    %5 = vector.shape_cast %4 : vector<400xf32> to vector<400x1xf32>
    %cst_4 = arith.constant 4.900000e+01 : f32
    %6 = vector.broadcast %cst_4 : f32 to vector<400x1xf32>
    %7 = arith.divf %5, %6 : vector<400x1xf32>
    %8 = arith.mulf %3, %3 : vector<400x49xf32>
    %cst_5 = arith.constant dense<0.000000e+00> : vector<400xf32>
    %9 = vector.multi_reduction <add>, %8, %cst_5 [1] : vector<400x49xf32> to vector<400xf32>
    %10 = vector.shape_cast %9 : vector<400xf32> to vector<400x1xf32>
    %cst_6 = arith.constant 4.900000e+01 : f32
    %11 = vector.broadcast %cst_6 : f32 to vector<400x1xf32>
    %12 = arith.divf %10, %11 : vector<400x1xf32>
    %13 = arith.mulf %7, %7 : vector<400x1xf32>
    %14 = arith.subf %12, %13 : vector<400x1xf32>
    %c0_7 = arith.constant 0 : index
    %c0_8 = arith.constant 0 : index
    %15 = vector.load %arg3[%c0_7, %c0_8] : memref<400x1xf32, #tpu.memory_space<vmem>>, vector<400x1xf32>
    %cst_9 = arith.constant 9.99999974E-6 : f32
    %16 = vector.broadcast %cst_9 : f32 to vector<400x1xf32>
    %17 = arith.addf %14, %16 : vector<400x1xf32>
    %18 = math.rsqrt %17 : vector<400x1xf32>
    %19 = arith.mulf %15, %18 : vector<400x1xf32>
    %c0_10 = arith.constant 0 : index
    %c0_11 = arith.constant 0 : index
    %20 = vector.load %arg4[%c0_10, %c0_11] : memref<400x1xf32, #tpu.memory_space<vmem>>, vector<400x1xf32>
    %21 = arith.mulf %7, %19 : vector<400x1xf32>
    %22 = arith.subf %20, %21 : vector<400x1xf32>
    %23 = vector.broadcast %19 : vector<400x1xf32> to vector<400x49xf32>
    %24 = arith.mulf %3, %23 : vector<400x49xf32>
    %25 = vector.broadcast %22 : vector<400x1xf32> to vector<400x49xf32>
    %26 = arith.addf %24, %25 : vector<400x49xf32>
    %c0_12 = arith.constant 0 : index
    %c0_13 = arith.constant 0 : index
    %27 = vector.load %arg1[%c0_12, %c0_13] : memref<400x49xf32, #tpu.memory_space<vmem>>, vector<400x49xf32>
    %28 = arith.addf %26, %27 : vector<400x49xf32>
    %cst_14 = arith.constant 0.000000e+00 : f32
    %29 = vector.broadcast %cst_14 : f32 to vector<400x49xf32>
    %30 = arith.maximumf %28, %29 : vector<400x49xf32>
    %c0_15 = arith.constant 0 : index
    %c0_16 = arith.constant 0 : index
    %31 = vector.load %arg5[%c0_15, %c0_16] : memref<400x400xbf16, #tpu.memory_space<vmem>>, vector<400x400xbf16>
    %32 = arith.truncf %30 : vector<400x49xf32> to vector<400x49xbf16>
    %cst_17 = arith.constant dense<0.000000e+00> : vector<400x49xf32>
    %33 = tpu.matmul %31, %32, %cst_17 {dimension_numbers = #tpu.dot_dimension_numbers<[1], [0], [0], [1], [0, 0, 1, 1], [], []>} : vector<400x400xbf16>, vector<400x49xbf16>, vector<400x49xf32> -> vector<400x49xf32>
    %cst_18 = arith.constant dense<0.000000e+00> : vector<400xf32>
    %34 = vector.multi_reduction <add>, %33, %cst_18 [1] : vector<400x49xf32> to vector<400xf32>
    %35 = vector.shape_cast %34 : vector<400xf32> to vector<400x1xf32>
    %cst_19 = arith.constant 4.900000e+01 : f32
    %36 = vector.broadcast %cst_19 : f32 to vector<400x1xf32>
    %37 = arith.divf %35, %36 : vector<400x1xf32>
    %38 = arith.mulf %33, %33 : vector<400x49xf32>
    %cst_20 = arith.constant dense<0.000000e+00> : vector<400xf32>
    %39 = vector.multi_reduction <add>, %38, %cst_20 [1] : vector<400x49xf32> to vector<400xf32>
    %40 = vector.shape_cast %39 : vector<400xf32> to vector<400x1xf32>
    %cst_21 = arith.constant 4.900000e+01 : f32
    %41 = vector.broadcast %cst_21 : f32 to vector<400x1xf32>
    %42 = arith.divf %40, %41 : vector<400x1xf32>
    %43 = arith.mulf %37, %37 : vector<400x1xf32>
    %44 = arith.subf %42, %43 : vector<400x1xf32>
    %c0_22 = arith.constant 0 : index
    %c0_23 = arith.constant 0 : index
    %45 = vector.load %arg6[%c0_22, %c0_23] : memref<400x1xf32, #tpu.memory_space<vmem>>, vector<400x1xf32>
    %cst_24 = arith.constant 9.99999974E-6 : f32
    %46 = vector.broadcast %cst_24 : f32 to vector<400x1xf32>
    %47 = arith.addf %44, %46 : vector<400x1xf32>
    %48 = math.rsqrt %47 : vector<400x1xf32>
    %49 = arith.mulf %45, %48 : vector<400x1xf32>
    %c0_25 = arith.constant 0 : index
    %c0_26 = arith.constant 0 : index
    %50 = vector.load %arg7[%c0_25, %c0_26] : memref<400x1xf32, #tpu.memory_space<vmem>>, vector<400x1xf32>
    %51 = arith.mulf %37, %49 : vector<400x1xf32>
    %52 = arith.subf %50, %51 : vector<400x1xf32>
    %53 = vector.broadcast %49 : vector<400x1xf32> to vector<400x49xf32>
    %54 = arith.mulf %33, %53 : vector<400x49xf32>
    %55 = vector.broadcast %52 : vector<400x1xf32> to vector<400x49xf32>
    %56 = arith.addf %54, %55 : vector<400x49xf32>
    %c0_27 = arith.constant 0 : index
    %c0_28 = arith.constant 0 : index
    %57 = vector.load %arg8[%c0_27, %c0_28] : memref<400x49xf32, #tpu.memory_space<vmem>>, vector<400x49xf32>
    tpu.vector_store %arg8[%c0_27, %c0_28], %56 {strides = array<i32>} : memref<400x49xf32, #tpu.memory_space<vmem>>, vector<400x49xf32>,
    return
  }
}

</mosaic_0001>

<llo_original>
// kernel: fused_block.1
$region0: #{fused_block.1}
  #allocation0 [shape = 'u32[]', space=smem, size = 0x4, offset = 0x4, fixed_abs, tag = 'smem constant byte address 0x4 - core index']
  #allocation1 [shape = 'u32[144,128]{1,0:T(1,128)}', space=vmem, size = 0x12000, scoped, tag = 'internal scratch']
  %s0 = inlined_call_operand.vmem [shape: f32[400,49], index: 0, kind: input, shape index: {}]
  %s1 = inlined_call_operand.vmem [shape: f32[400,49], index: 1, kind: input, shape index: {}]
  %s2 = inlined_call_operand.vmem [shape: bf16[400,400], index: 2, kind: input, shape index: {}]
  %s3 = inlined_call_operand.vmem [shape: f32[400,1], index: 3, kind: input, shape index: {}]
  %s4 = inlined_call_operand.vmem [shape: f32[400,1], index: 4, kind: input, shape index: {}]
  %s5 = inlined_call_operand.vmem [shape: bf16[400,400], index: 5, kind: input, shape index: {}]
  %s6 = inlined_call_operand.vmem [shape: f32[400,1], index: 6, kind: input, shape index: {}]
  %s7 = inlined_call_operand.vmem [shape: f32[400,1], index: 7, kind: input, shape index: {}]
  %s8 = inlined_call_operand.vmem [shape: f32[400,49], index: 8, kind: output, shape index: {}]
  %s9 = sld [smem:[#allocation0]]
  $region42: #{fused_block.1} parent=0
    _
  %s11 = ssub.s32 1, %s9
  %s12 = scalar_select 0, %s11, %s9
  // Predicated region
  $region2: #{fused_block.1} parent=0 // pred_check
    _
  $region3: #{fused_block.1} parent=0 // pred_check_branch
    %14 = sbr.rel (0) target = $region5
  $region4: #{fused_block.1} parent=0 // pred_region
    _
  $region5: #{fused_block.1} parent=0 // pred_fallthru
    _
  // Predicated region
  $region6: #{fused_block.1} parent=0 // pred_check
    _
  $region7: #{fused_block.1} parent=0 // pred_check_branch
    %16 = sbr.rel (0) target = $region9
  $region8: #{fused_block.1} parent=0 // pred_region
    _
  $region9: #{fused_block.1} parent=0 // pred_fallthru
    _
  // Predicated region
  $region10: #{fused_block.1} parent=0 // pred_check
    _
  $region11: #{fused_block.1} parent=0 // pred_check_branch
    %18 = sbr.rel (0) target = $region13
  $region12: #{fused_block.1} parent=0 // pred_region
    _
  $region13: #{fused_block.1} parent=0 // pred_fallthru
    _
  // Predicated region
  $region14: #{fused_block.1} parent=0 // pred_check
    _
  $region15: #{fused_block.1} parent=0 // pred_check_branch
    %20 = sbr.rel (0) target = $region17
  $region16: #{fused_block.1} parent=0 // pred_region
    _
  $region17: #{fused_block.1} parent=0 // pred_fallthru
    _
  // Predicated region
  $region18: #{fused_block.1} parent=0 // pred_check
    _
  $region19: #{fused_block.1} parent=0 // pred_check_branch
    %22 = sbr.rel (0) target = $region21
  $region20: #{fused_block.1} parent=0 // pred_region
    _
  $region21: #{fused_block.1} parent=0 // pred_fallthru
    _
  // Predicated region
  $region22: #{fused_block.1} parent=0 // pred_check
    _
  $region23: #{fused_block.1} parent=0 // pred_check_branch
    %24 = sbr.rel (0) target = $region25
  $region24: #{fused_block.1} parent=0 // pred_region
    _
  $region25: #{fused_block.1} parent=0 // pred_fallthru
    _
  // Predicated region
  $region26: #{fused_block.1} parent=0 // pred_check
    _
  $region27: #{fused_block.1} parent=0 // pred_check_branch
    %26 = sbr.rel (0) target = $region29
  $region28: #{fused_block.1} parent=0 // pred_region
    _
  $region29: #{fused_block.1} parent=0 // pred_fallthru
    _
  // Predicated region
  $region30: #{fused_block.1} parent=0 // pred_check
    _
  $region31: #{fused_block.1} parent=0 // pred_check_branch
    %28 = sbr.rel (0) target = $region33
  $region32: #{fused_block.1} parent=0 // pred_region
    _
  $region33: #{fused_block.1} parent=0 // pred_fallthru
    _
  %v30 = vld [vmem:[%s0] sm:$0xff]
  %v31 = vld [vmem:[%s0 + $0x8] sm:$0xff]
  %v32 = vld [vmem:[%s0 + $0x10] sm:$0xff]
  %v33 = vld [vmem:[%s0 + $0x18] sm:$0xff]
  %v34 = vld [vmem:[%s0 + $0x20] sm:$0xff]
  %v35 = vld [vmem:[%s0 + $0x28] sm:$0xff]
  %v36 = vld [vmem:[%s0 + $0x30] sm:$0xff]
  %v37 = vld [vmem:[%s0 + $0x38] sm:$0xff]
  %v38 = vld [vmem:[%s0 + $0x40] sm:$0xff]
  %v39 = vld [vmem:[%s0 + $0x48] sm:$0xff]
  %v40 = vld [vmem:[%s0 + $0x50] sm:$0xff]
  %v41 = vld [vmem:[%s0 + $0x58] sm:$0xff]
  %v42 = vld [vmem:[%s0 + $0x60] sm:$0xff]
  %v43 = vld [vmem:[%s0 + $0x68] sm:$0xff]
  %v44 = vld [vmem:[%s0 + $0x70] sm:$0xff]
  %v45 = vld [vmem:[%s0 + $0x78] sm:$0xff]
  %v46 = vld [vmem:[%s0 + $0x80] sm:$0xff]
  %v47 = vld [vmem:[%s0 + $0x88] sm:$0xff]
  %v48 = vld [vmem:[%s0 + $0x90] sm:$0xff]
  %v49 = vld [vmem:[%s0 + $0x98] sm:$0xff]
  %v50 = vld [vmem:[%s0 + $0xa0] sm:$0xff]
  %v51 = vld [vmem:[%s0 + $0xa8] sm:$0xff]
  %v52 = vld [vmem:[%s0 + $0xb0] sm:$0xff]
  %v53 = vld [vmem:[%s0 + $0xb8] sm:$0xff]
  %v54 = vld [vmem:[%s0 + $0xc0] sm:$0xff]
  %v55 = vld [vmem:[%s0 + $0xc8] sm:$0xff]
  %v56 = vld [vmem:[%s0 + $0xd0] sm:$0xff]
  %v57 = vld [vmem:[%s0 + $0xd8] sm:$0xff]
  %v58 = vld [vmem:[%s0 + $0xe0] sm:$0xff]
  %v59 = vld [vmem:[%s0 + $0xe8] sm:$0xff]
  %v60 = vld [vmem:[%s0 + $0xf0] sm:$0xff]
  %v61 = vld [vmem:[%s0 + $0xf8] sm:$0xff]
  %v62 = vld [vmem:[%s0 + $0x100] sm:$0xff]
  %v63 = vld [vmem:[%s0 + $0x108] sm:$0xff]
  %v64 = vld [vmem:[%s0 + $0x110] sm:$0xff]
  %v65 = vld [vmem:[%s0 + $0x118] sm:$0xff]
  %v66 = vld [vmem:[%s0 + $0x120] sm:$0xff]
  %v67 = vld [vmem:[%s0 + $0x128] sm:$0xff]
  %v68 = vld [vmem:[%s0 + $0x130] sm:$0xff]
  %v69 = vld [vmem:[%s0 + $0x138] sm:$0xff]
  %v70 = vld [vmem:[%s0 + $0x140] sm:$0xff]
  %v71 = vld [vmem:[%s0 + $0x148] sm:$0xff]
  %v72 = vld [vmem:[%s0 + $0x150] sm:$0xff]
  %v73 = vld [vmem:[%s0 + $0x158] sm:$0xff]
  %v74 = vld [vmem:[%s0 + $0x160] sm:$0xff]
  %v75 = vld [vmem:[%s0 + $0x168] sm:$0xff]
  %v76 = vld [vmem:[%s0 + $0x170] sm:$0xff]
  %v77 = vld [vmem:[%s0 + $0x178] sm:$0xff]
  %v78 = vld [vmem:[%s0 + $0x180] sm:$0xff]
  %v79 = vld [vmem:[%s0 + $0x188] sm:$0xff]
  %v80 = vpack.c.bf16 %v31, %v30
  %v81 = vpack.c.bf16 %v33, %v32
  %v82 = vpack.c.bf16 %v35, %v34
  %v83 = vpack.c.bf16 %v37, %v36
  %v84 = vpack.c.bf16 %v39, %v38
  %v85 = vpack.c.bf16 %v41, %v40
  %v86 = vpack.c.bf16 %v43, %v42
  %v87 = vpack.c.bf16 %v45, %v44
  %v88 = vpack.c.bf16 %v47, %v46
  %v89 = vpack.c.bf16 %v49, %v48
  %v90 = vpack.c.bf16 %v51, %v50
  %v91 = vpack.c.bf16 %v53, %v52
  %v92 = vpack.c.bf16 %v55, %v54
  %v93 = vpack.c.bf16 %v57, %v56
  %v94 = vpack.c.bf16 %v59, %v58
  %v95 = vpack.c.bf16 %v61, %v60
  %v96 = vpack.c.bf16 %v63, %v62
  %v97 = vpack.c.bf16 %v65, %v64
  %v98 = vpack.c.bf16 %v67, %v66
  %v99 = vpack.c.bf16 %v69, %v68
  %v100 = vpack.c.bf16 %v71, %v70
  %v101 = vpack.c.bf16 %v73, %v72
  %v102 = vpack.c.bf16 %v75, %v74
  %v103 = vpack.c.bf16 %v77, %v76
  %v104 = vpack.c.bf16 %v79, %v78
  %v105 = vld [vmem:[%s2] sm:$0xff]
  %v106 = vld [vmem:[%s2 + $0x8] sm:$0xff]
  %v107 = vld [vmem:[%s2 + $0x10] sm:$0xff]
  %v108 = vld [vmem:[%s2 + $0x18] sm:$0xff]
  %v109 = vld [vmem:[%s2 + $0x20] sm:$0xff]
  %v110 = vld [vmem:[%s2 + $0x28] sm:$0xff]
  %v111 = vld [vmem:[%s2 + $0x30] sm:$0xff]
  %v112 = vld [vmem:[%s2 + $0x38] sm:$0xff]
  %v113 = vld [vmem:[%s2 + $0x40] sm:$0xff]
  %v114 = vld [vmem:[%s2 + $0x48] sm:$0xff]
  %v115 = vld [vmem:[%s2 + $0x50] sm:$0xff]
  %v116 = vld [vmem:[%s2 + $0x58] sm:$0xff]
  %v117 = vld [vmem:[%s2 + $0x60] sm:$0xff]
  %v118 = vld [vmem:[%s2 + $0x68] sm:$0xff]
  %v119 = vld [vmem:[%s2 + $0x70] sm:$0xff]
  %v120 = vld [vmem:[%s2 + $0x78] sm:$0xff]
  %v121 = vld [vmem:[%s2 + $0x80] sm:$0xff]
  %v122 = vld [vmem:[%s2 + $0x88] sm:$0xff]
  %v123 = vld [vmem:[%s2 + $0x90] sm:$0xff]
  %v124 = vld [vmem:[%s2 + $0x98] sm:$0xff]
  %v125 = vld [vmem:[%s2 + $0xa0] sm:$0xff]
  %v126 = vld [vmem:[%s2 + $0xa8] sm:$0xff]
  %v127 = vld [vmem:[%s2 + $0xb0] sm:$0xff]
  %v128 = vld [vmem:[%s2 + $0xb8] sm:$0xff]
  %v129 = vld [vmem:[%s2 + $0xc0] sm:$0xff]
  %v130 = vld [vmem:[%s2 + $0xc8] sm:$0xff]
  %v131 = vld [vmem:[%s2 + $0xd0] sm:$0xff]
  %v132 = vld [vmem:[%s2 + $0xd8] sm:$0xff]
  %v133 = vld [vmem:[%s2 + $0xe0] sm:$0xff]
  %v134 = vld [vmem:[%s2 + $0xe8] sm:$0xff]
  %v135 = vld [vmem:[%s2 + $0xf0] sm:$0xff]
  %v136 = vld [vmem:[%s2 + $0xf8] sm:$0xff]
  %v137 = vld [vmem:[%s2 + $0x100] sm:$0xff]
  %v138 = vld [vmem:[%s2 + $0x108] sm:$0xff]
  %v139 = vld [vmem:[%s2 + $0x110] sm:$0xff]
  %v140 = vld [vmem:[%s2 + $0x118] sm:$0xff]
  %v141 = vld [vmem:[%s2 + $0x120] sm:$0xff]
  %v142 = vld [vmem:[%s2 + $0x128] sm:$0xff]
  %v143 = vld [vmem:[%s2 + $0x130] sm:$0xff]
  %v144 = vld [vmem:[%s2 + $0x138] sm:$0xff]
  %v145 = vld [vmem:[%s2 + $0x140] sm:$0xff]
  %v146 = vld [vmem:[%s2 + $0x148] sm:$0xff]
  %v147 = vld [vmem:[%s2 + $0x150] sm:$0xff]
  %v148 = vld [vmem:[%s2 + $0x158] sm:$0xff]
  %v149 = vld [vmem:[%s2 + $0x160] sm:$0xff]
  %v150 = vld [vmem:[%s2 + $0x168] sm:$0xff]
  %v151 = vld [vmem:[%s2 + $0x170] sm:$0xff]
  %v152 = vld [vmem:[%s2 + $0x178] sm:$0xff]
  %v153 = vld [vmem:[%s2 + $0x180] sm:$0xff]
  %v154 = vld [vmem:[%s2 + $0x188] sm:$0xff]
  %v155 = vld [vmem:[%s2 + $0x190] sm:$0xff]
  %v156 = vld [vmem:[%s2 + $0x198] sm:$0xff]
  %v157 = vld [vmem:[%s2 + $0x1a0] sm:$0xff]
  %v158 = vld [vmem:[%s2 + $0x1a8] sm:$0xff]
  %v159 = vld [vmem:[%s2 + $0x1b0] sm:$0xff]
  %v160 = vld [vmem:[%s2 + $0x1b8] sm:$0xff]
  %v161 = vld [vmem:[%s2 + $0x1c0] sm:$0xff]
  %v162 = vld [vmem:[%s2 + $0x1c8] sm:$0xff]
  %v163 = vld [vmem:[%s2 + $0x1d0] sm:$0xff]
  %v164 = vld [vmem:[%s2 + $0x1d8] sm:$0xff]
  %v165 = vld [vmem:[%s2 + $0x1e0] sm:$0xff]
  %v166 = vld [vmem:[%s2 + $0x1e8] sm:$0xff]
  %v167 = vld [vmem:[%s2 + $0x1f0] sm:$0xff]
  %v168 = vld [vmem:[%s2 + $0x1f8] sm:$0xff]
  %v169 = vld [vmem:[%s2 + $0x200] sm:$0xff]
  %v170 = vld [vmem:[%s2 + $0x208] sm:$0xff]
  %v171 = vld [vmem:[%s2 + $0x210] sm:$0xff]
  %v172 = vld [vmem:[%s2 + $0x218] sm:$0xff]
  %v173 = vld [vmem:[%s2 + $0x220] sm:$0xff]
  %v174 = vld [vmem:[%s2 + $0x228] sm:$0xff]
  %v175 = vld [vmem:[%s2 + $0x230] sm:$0xff]
  %v176 = vld [vmem:[%s2 + $0x238] sm:$0xff]
  %v177 = vld [vmem:[%s2 + $0x240] sm:$0xff]
  %v178 = vld [vmem:[%s2 + $0x248] sm:$0xff]
  %v179 = vld [vmem:[%s2 + $0x250] sm:$0xff]
  %v180 = vld [vmem:[%s2 + $0x258] sm:$0xff]
  %v181 = vld [vmem:[%s2 + $0x260] sm:$0xff]
  %v182 = vld [vmem:[%s2 + $0x268] sm:$0xff]
  %v183 = vld [vmem:[%s2 + $0x270] sm:$0xff]
  %v184 = vld [vmem:[%s2 + $0x278] sm:$0xff]
  %v185 = vld [vmem:[%s2 + $0x280] sm:$0xff]
  %v186 = vld [vmem:[%s2 + $0x288] sm:$0xff]
  %v187 = vld [vmem:[%s2 + $0x290] sm:$0xff]
  %v188 = vld [vmem:[%s2 + $0x298] sm:$0xff]
  %v189 = vld [vmem:[%s2 + $0x2a0] sm:$0xff]
  %v190 = vld [vmem:[%s2 + $0x2a8] sm:$0xff]
  %v191 = vld [vmem:[%s2 + $0x2b0] sm:$0xff]
  %v192 = vld [vmem:[%s2 + $0x2b8] sm:$0xff]
  %v193 = vld [vmem:[%s2 + $0x2c0] sm:$0xff]
  %v194 = vld [vmem:[%s2 + $0x2c8] sm:$0xff]
  %v195 = vld [vmem:[%s2 + $0x2d0] sm:$0xff]
  %v196 = vld [vmem:[%s2 + $0x2d8] sm:$0xff]
  %v197 = vld [vmem:[%s2 + $0x2e0] sm:$0xff]
  %v198 = vld [vmem:[%s2 + $0x2e8] sm:$0xff]
  %v199 = vld [vmem:[%s2 + $0x2f0] sm:$0xff]
  %v200 = vld [vmem:[%s2 + $0x2f8] sm:$0xff]
  %v201 = vld [vmem:[%s2 + $0x300] sm:$0xff]
  %v202 = vld [vmem:[%s2 + $0x308] sm:$0xff]
  %v203 = vld [vmem:[%s2 + $0x310] sm:$0xff]
  %v204 = vld [vmem:[%s2 + $0x318] sm:$0xff]
  %v305 = vunpack.c.l.b16 %v105
  %v306 = vunpack.c.h.b16 %v105
  %v307 = vunpack.c.l.b16 %v106
  %v308 = vunpack.c.h.b16 %v106
  %v309 = vunpack.c.l.b16 %v107
  %v310 = vunpack.c.h.b16 %v107
  %v311 = vunpack.c.l.b16 %v108
  %v312 = vunpack.c.h.b16 %v108
  %v313 = vunpack.c.l.b16 %v109
  %v314 = vunpack.c.h.b16 %v109
  %v315 = vunpack.c.l.b16 %v110
  %v316 = vunpack.c.h.b16 %v110
  %v317 = vunpack.c.l.b16 %v111
  %v318 = vunpack.c.h.b16 %v111
  %v319 = vunpack.c.l.b16 %v112
  %v320 = vunpack.c.h.b16 %v112
  %v321 = vunpack.c.l.b16 %v113
  %v322 = vunpack.c.h.b16 %v113
  %v323 = vunpack.c.l.b16 %v114
  %v324 = vunpack.c.h.b16 %v114
  %v325 = vunpack.c.l.b16 %v115
  %v326 = vunpack.c.h.b16 %v115
  %v327 = vunpack.c.l.b16 %v116
  %v328 = vunpack.c.h.b16 %v116
  %v329 = vunpack.c.l.b16 %v117
  %v330 = vunpack.c.h.b16 %v117
  %v331 = vunpack.c.l.b16 %v118
  %v332 = vunpack.c.h.b16 %v118
  %v333 = vunpack.c.l.b16 %v119
  %v334 = vunpack.c.h.b16 %v119
  %v335 = vunpack.c.l.b16 %v120
  %v336 = vunpack.c.h.b16 %v120
  %v337 = vunpack.c.l.b16 %v121
  %v338 = vunpack.c.h.b16 %v121
  %v339 = vunpack.c.l.b16 %v122
  %v340 = vunpack.c.h.b16 %v122
  %v341 = vunpack.c.l.b16 %v123
  %v342 = vunpack.c.h.b16 %v123
  %v343 = vunpack.c.l.b16 %v124
  %v344 = vunpack.c.h.b16 %v124
  %v345 = vunpack.c.l.b16 %v125
  %v346 = vunpack.c.h.b16 %v125
  %v347 = vunpack.c.l.b16 %v126
  %v348 = vunpack.c.h.b16 %v126
  %v349 = vunpack.c.l.b16 %v127
  %v350 = vunpack.c.h.b16 %v127
  %v351 = vunpack.c.l.b16 %v128
  %v352 = vunpack.c.h.b16 %v128
  %v353 = vunpack.c.l.b16 %v129
  %v354 = vunpack.c.h.b16 %v129
  %v355 = vunpack.c.l.b16 %v130
  %v356 = vunpack.c.h.b16 %v130
  %v357 = vunpack.c.l.b16 %v131
  %v358 = vunpack.c.h.b16 %v131
  %v359 = vunpack.c.l.b16 %v132
  %v360 = vunpack.c.h.b16 %v132
  %v361 = vunpack.c.l.b16 %v133
  %v362 = vunpack.c.h.b16 %v133
  %v363 = vunpack.c.l.b16 %v134
  %v364 = vunpack.c.h.b16 %v134
  %v365 = vunpack.c.l.b16 %v135
  %v366 = vunpack.c.h.b16 %v135
  %v367 = vunpack.c.l.b16 %v136
  %v368 = vunpack.c.h.b16 %v136
  %v369 = vunpack.c.l.b16 %v137
  %v370 = vunpack.c.h.b16 %v137
  %v371 = vunpack.c.l.b16 %v138
  %v372 = vunpack.c.h.b16 %v138
  %v373 = vunpack.c.l.b16 %v139
  %v374 = vunpack.c.h.b16 %v139
  %v375 = vunpack.c.l.b16 %v140
  %v376 = vunpack.c.h.b16 %v140
  %v377 = vunpack.c.l.b16 %v141
  %v378 = vunpack.c.h.b16 %v141
  %v379 = vunpack.c.l.b16 %v142
  %v380 = vunpack.c.h.b16 %v142
  %v381 = vunpack.c.l.b16 %v143
  %v382 = vunpack.c.h.b16 %v143
  %v383 = vunpack.c.l.b16 %v144
  %v384 = vunpack.c.h.b16 %v144
  %v385 = vunpack.c.l.b16 %v145
  %v386 = vunpack.c.h.b16 %v145
  %v387 = vunpack.c.l.b16 %v146
  %v388 = vunpack.c.h.b16 %v146
  %v389 = vunpack.c.l.b16 %v147
  %v390 = vunpack.c.h.b16 %v147
  %v391 = vunpack.c.l.b16 %v148
  %v392 = vunpack.c.h.b16 %v148
  %v393 = vunpack.c.l.b16 %v149
  %v394 = vunpack.c.h.b16 %v149
  %v395 = vunpack.c.l.b16 %v150
  %v396 = vunpack.c.h.b16 %v150
  %v397 = vunpack.c.l.b16 %v151
  %v398 = vunpack.c.h.b16 %v151
  %v399 = vunpack.c.l.b16 %v152
  %v400 = vunpack.c.h.b16 %v152
  %v401 = vunpack.c.l.b16 %v153
  %v402 = vunpack.c.h.b16 %v153
  %v403 = vunpack.c.l.b16 %v154
  %v404 = vunpack.c.h.b16 %v154
  %v405 = vunpack.c.l.b16 %v155
  %v406 = vunpack.c.h.b16 %v155
  %v407 = vunpack.c.l.b16 %v156
  %v408 = vunpack.c.h.b16 %v156
  %v409 = vunpack.c.l.b16 %v157
  %v410 = vunpack.c.h.b16 %v157
  %v411 = vunpack.c.l.b16 %v158
  %v412 = vunpack.c.h.b16 %v158
  %v413 = vunpack.c.l.b16 %v159
  %v414 = vunpack.c.h.b16 %v159
  %v415 = vunpack.c.l.b16 %v160
  %v416 = vunpack.c.h.b16 %v160
  %v417 = vunpack.c.l.b16 %v161
  %v418 = vunpack.c.h.b16 %v161
  %v419 = vunpack.c.l.b16 %v162
  %v420 = vunpack.c.h.b16 %v162
  %v421 = vunpack.c.l.b16 %v163
  %v422 = vunpack.c.h.b16 %v163
  %v423 = vunpack.c.l.b16 %v164
  %v424 = vunpack.c.h.b16 %v164
  %v425 = vunpack.c.l.b16 %v165
  %v426 = vunpack.c.h.b16 %v165
  %v427 = vunpack.c.l.b16 %v166
  %v428 = vunpack.c.h.b16 %v166
  %v429 = vunpack.c.l.b16 %v167
  %v430 = vunpack.c.h.b16 %v167
  %v431 = vunpack.c.l.b16 %v168
  %v432 = vunpack.c.h.b16 %v168
  %v433 = vunpack.c.l.b16 %v169
  %v434 = vunpack.c.h.b16 %v169
  %v435 = vunpack.c.l.b16 %v170
  %v436 = vunpack.c.h.b16 %v170
  %v437 = vunpack.c.l.b16 %v171
  %v438 = vunpack.c.h.b16 %v171
  %v439 = vunpack.c.l.b16 %v172
  %v440 = vunpack.c.h.b16 %v172
  %v441 = vunpack.c.l.b16 %v173
  %v442 = vunpack.c.h.b16 %v173
  %v443 = vunpack.c.l.b16 %v174
  %v444 = vunpack.c.h.b16 %v174
  %v445 = vunpack.c.l.b16 %v175
  %v446 = vunpack.c.h.b16 %v175
  %v447 = vunpack.c.l.b16 %v176
  %v448 = vunpack.c.h.b16 %v176
  %v449 = vunpack.c.l.b16 %v177
  %v450 = vunpack.c.h.b16 %v177
  %v451 = vunpack.c.l.b16 %v178
  %v452 = vunpack.c.h.b16 %v178
  %v453 = vunpack.c.l.b16 %v179
  %v454 = vunpack.c.h.b16 %v179
  %v455 = vunpack.c.l.b16 %v180
  %v456 = vunpack.c.h.b16 %v180
  %v457 = vunpack.c.l.b16 %v181
  %v458 = vunpack.c.h.b16 %v181
  %v459 = vunpack.c.l.b16 %v182
  %v460 = vunpack.c.h.b16 %v182
  %v461 = vunpack.c.l.b16 %v183
  %v462 = vunpack.c.h.b16 %v183
  %v463 = vunpack.c.l.b16 %v184
  %v464 = vunpack.c.h.b16 %v184
  %v465 = vunpack.c.l.b16 %v185
  %v466 = vunpack.c.h.b16 %v185
  %v467 = vunpack.c.l.b16 %v186
  %v468 = vunpack.c.h.b16 %v186
  %v469 = vunpack.c.l.b16 %v187
  %v470 = vunpack.c.h.b16 %v187
  %v471 = vunpack.c.l.b16 %v188
  %v472 = vunpack.c.h.b16 %v188
  %v473 = vunpack.c.l.b16 %v189
  %v474 = vunpack.c.h.b16 %v189
  %v475 = vunpack.c.l.b16 %v190
  %v476 = vunpack.c.h.b16 %v190
  %v477 = vunpack.c.l.b16 %v191
  %v478 = vunpack.c.h.b16 %v191
  %v479 = vunpack.c.l.b16 %v192
  %v480 = vunpack.c.h.b16 %v192
  %v481 = vunpack.c.l.b16 %v193
  %v482 = vunpack.c.h.b16 %v193
  %v483 = vunpack.c.l.b16 %v194
  %v484 = vunpack.c.h.b16 %v194
  %v485 = vunpack.c.l.b16 %v195
  %v486 = vunpack.c.h.b16 %v195
  %v487 = vunpack.c.l.b16 %v196
  %v488 = vunpack.c.h.b16 %v196
  %v489 = vunpack.c.l.b16 %v197
  %v490 = vunpack.c.h.b16 %v197
  %v491 = vunpack.c.l.b16 %v198
  %v492 = vunpack.c.h.b16 %v198
  %v493 = vunpack.c.l.b16 %v199
  %v494 = vunpack.c.h.b16 %v199
  %v495 = vunpack.c.l.b16 %v200
  %v496 = vunpack.c.h.b16 %v200
  %v497 = vunpack.c.l.b16 %v201
  %v498 = vunpack.c.h.b16 %v201
  %v499 = vunpack.c.l.b16 %v202
  %v500 = vunpack.c.h.b16 %v202
  %v501 = vunpack.c.l.b16 %v203
  %v502 = vunpack.c.h.b16 %v203
  %v503 = vunpack.c.l.b16 %v204
  %v504 = vunpack.c.h.b16 %v204
  %v505 = vpack.c.b16 %v309, %v305
  %v506 = vpack.c.b16 %v310, %v306
  %v507 = vpack.c.b16 %v311, %v307
  %v508 = vpack.c.b16 %v312, %v308
  %v509 = vpack.c.b16 %v317, %v313
  %v510 = vpack.c.b16 %v318, %v314
  %v511 = vpack.c.b16 %v319, %v315
  %v512 = vpack.c.b16 %v320, %v316
  %v513 = vpack.c.b16 %v325, %v321
  %v514 = vpack.c.b16 %v326, %v322
  %v515 = vpack.c.b16 %v327, %v323
  %v516 = vpack.c.b16 %v328, %v324
  %v517 = vpack.c.b16 %v333, %v329
  %v518 = vpack.c.b16 %v334, %v330
  %v519 = vpack.c.b16 %v335, %v331
  %v520 = vpack.c.b16 %v336, %v332
  %v521 = vpack.c.b16 %v341, %v337
  %v522 = vpack.c.b16 %v342, %v338
  %v523 = vpack.c.b16 %v343, %v339
  %v524 = vpack.c.b16 %v344, %v340
  %v525 = vpack.c.b16 %v349, %v345
  %v526 = vpack.c.b16 %v350, %v346
  %v527 = vpack.c.b16 %v351, %v347
  %v528 = vpack.c.b16 %v352, %v348
  %v529 = vpack.c.b16 %v357, %v353
  %v530 = vpack.c.b16 %v358, %v354
  %v531 = vpack.c.b16 %v359, %v355
  %v532 = vpack.c.b16 %v360, %v356
  %v533 = vpack.c.b16 %v365, %v361
  %v534 = vpack.c.b16 %v366, %v362
  %v535 = vpack.c.b16 %v367, %v363
  %v536 = vpack.c.b16 %v368, %v364
  %v537 = vpack.c.b16 %v373, %v369
  %v538 = vpack.c.b16 %v374, %v370
  %v539 = vpack.c.b16 %v375, %v371
  %v540 = vpack.c.b16 %v376, %v372
  %v541 = vpack.c.b16 %v381, %v377
  %v542 = vpack.c.b16 %v382, %v378
  %v543 = vpack.c.b16 %v383, %v379
  %v544 = vpack.c.b16 %v384, %v380
  %v545 = vpack.c.b16 %v389, %v385
  %v546 = vpack.c.b16 %v390, %v386
  %v547 = vpack.c.b16 %v391, %v387
  %v548 = vpack.c.b16 %v392, %v388
  %v549 = vpack.c.b16 %v397, %v393
  %v550 = vpack.c.b16 %v398, %v394
  %v551 = vpack.c.b16 %v399, %v395
  %v552 = vpack.c.b16 %v400, %v396
  %v553 = vpack.c.b16 %v405, %v401
  %v554 = vpack.c.b16 %v406, %v402
  %v555 = vpack.c.b16 %v407, %v403
  %v556 = vpack.c.b16 %v408, %v404
  %v557 = vpack.c.b16 %v413, %v409
  %v558 = vpack.c.b16 %v414, %v410
  %v559 = vpack.c.b16 %v415, %v411
  %v560 = vpack.c.b16 %v416, %v412
  %v561 = vpack.c.b16 %v421, %v417
  %v562 = vpack.c.b16 %v422, %v418
  %v563 = vpack.c.b16 %v423, %v419
  %v564 = vpack.c.b16 %v424, %v420
  %v565 = vpack.c.b16 %v429, %v425
  %v566 = vpack.c.b16 %v430, %v426
  %v567 = vpack.c.b16 %v431, %v427
  %v568 = vpack.c.b16 %v432, %v428
  %v569 = vpack.c.b16 %v437, %v433
  %v570 = vpack.c.b16 %v438, %v434
  %v571 = vpack.c.b16 %v439, %v435
  %v572 = vpack.c.b16 %v440, %v436
  %v573 = vpack.c.b16 %v445, %v441
  %v574 = vpack.c.b16 %v446, %v442
  %v575 = vpack.c.b16 %v447, %v443
  %v576 = vpack.c.b16 %v448, %v444
  %v577 = vpack.c.b16 %v453, %v449
  %v578 = vpack.c.b16 %v454, %v450
  %v579 = vpack.c.b16 %v455, %v451
  %v580 = vpack.c.b16 %v456, %v452
  %v581 = vpack.c.b16 %v461, %v457
  %v582 = vpack.c.b16 %v462, %v458
  %v583 = vpack.c.b16 %v463, %v459
  %v584 = vpack.c.b16 %v464, %v460
  %v585 = vpack.c.b16 %v469, %v465
  %v586 = vpack.c.b16 %v470, %v466
  %v587 = vpack.c.b16 %v471, %v467
  %v588 = vpack.c.b16 %v472, %v468
  %v589 = vpack.c.b16 %v477, %v473
  %v590 = vpack.c.b16 %v478, %v474
  %v591 = vpack.c.b16 %v479, %v475
  %v592 = vpack.c.b16 %v480, %v476
  %v593 = vpack.c.b16 %v485, %v481
  %v594 = vpack.c.b16 %v486, %v482
  %v595 = vpack.c.b16 %v487, %v483
  %v596 = vpack.c.b16 %v488, %v484
  %v597 = vpack.c.b16 %v493, %v489
  %v598 = vpack.c.b16 %v494, %v490
  %v599 = vpack.c.b16 %v495, %v491
  %v600 = vpack.c.b16 %v496, %v492
  %v601 = vpack.c.b16 %v501, %v497
  %v602 = vpack.c.b16 %v502, %v498
  %v603 = vpack.c.b16 %v503, %v499
  %v604 = vpack.c.b16 %v504, %v500
  %vm680 = vcmask 130048
  %v682 = vsel %vm680, %v508, 0
  %v685 = vsel %vm680, %v512, 0
  %v688 = vsel %vm680, %v516, 0
  %v691 = vsel %vm680, %v520, 0
  %v694 = vsel %vm680, %v524, 0
  %v697 = vsel %vm680, %v528, 0
  %v700 = vsel %vm680, %v532, 0
  %v703 = vsel %vm680, %v536, 0
  %v706 = vsel %vm680, %v540, 0
  %v709 = vsel %vm680, %v544, 0
  %v712 = vsel %vm680, %v548, 0
  %v715 = vsel %vm680, %v552, 0
  %v718 = vsel %vm680, %v556, 0
  %v721 = vsel %vm680, %v560, 0
  %v724 = vsel %vm680, %v564, 0
  %v727 = vsel %vm680, %v568, 0
  %v730 = vsel %vm680, %v572, 0
  %v733 = vsel %vm680, %v576, 0
  %v736 = vsel %vm680, %v580, 0
  %v739 = vsel %vm680, %v584, 0
  %v742 = vsel %vm680, %v588, 0
  %v745 = vsel %vm680, %v592, 0
  %v748 = vsel %vm680, %v596, 0
  %v751 = vsel %vm680, %v600, 0
  %v754 = vsel %vm680, %v604, 0
  %756 = vmatprep.subr.bf16.mxu0 0
  %757 = vmatpush1.bf16.msra.mxu0 %v80
  %758 = vmatprep.subr.bf16.mxu0 0
  %759 = vmatpush1.bf16.msra.mxu0 %v81
  %760 = vmatprep.subr.bf16.mxu0 0
  %761 = vmatpush1.bf16.msra.mxu0 %v82
  %762 = vmatprep.subr.bf16.mxu0 0
  %763 = vmatpush1.bf16.msra.mxu0 %v83
  %764 = vmatprep.subr.bf16.mxu0 0
  %765 = vmatpush1.bf16.msra.mxu0 %v84
  %766 = vmatprep.subr.bf16.mxu0 0
  %767 = vmatpush1.bf16.msra.mxu0 %v85
  %768 = vmatprep.subr.bf16.mxu0 0
  %769 = vmatpush1.bf16.msra.mxu0 %v86
  %770 = vmatprep.subr.bf16.mxu0 0
  %771 = vmatpush1.bf16.msra.mxu0 %v87
  %772 = vmatprep.subr.bf16.mxu0 0
  %773 = vmatpush1.bf16.msra.mxu0 %v88
  %774 = vmatprep.subr.bf16.mxu0 0
  %775 = vmatpush1.bf16.msra.mxu0 %v89
  %776 = vmatprep.subr.bf16.mxu0 0
  %777 = vmatpush1.bf16.msra.mxu0 %v90
  %778 = vmatprep.subr.bf16.mxu0 0
  %779 = vmatpush1.bf16.msra.mxu0 %v91
  %780 = vmatprep.subr.bf16.mxu0 0
  %781 = vmatpush1.bf16.msra.mxu0 %v92
  %782 = vmatprep.subr.bf16.mxu0 0
  %783 = vmatpush1.bf16.msra.mxu0 %v93
  %784 = vmatprep.subr.bf16.mxu0 0
  %785 = vmatpush1.bf16.msra.mxu0 %v94
  %786 = vmatprep.subr.bf16.mxu0 0
  %787 = vmatpush1.bf16.msra.mxu0 %v95
  %788 = vmatprep.mubr.bf16.mxu0 %v506
  %789 = vmatmul.mubr.bf16.gmra.mrb[0].mxu0 %v505
  %v790 = vpop.f32.mrb[0].mxu0
  %v791 = vadd.f32 0.0, %v790
  %v792 = vpop.f32.mrb[0].mxu0
  %v793 = vpop.f32.mrb[0].mxu0
  %v794 = vadd.f32 0.0, %v793
  %v795 = vpop.f32.mrb[0].mxu0
  %796 = vmatprep.mubr.bf16.mxu0 %v510
  %797 = vmatmul.mubr.bf16.gmra.mrb[0].mxu0 %v509
  %v798 = vpop.f32.mrb[0].mxu0
  %v799 = vadd.f32 0.0, %v798
  %v800 = vpop.f32.mrb[0].mxu0
  %v801 = vpop.f32.mrb[0].mxu0
  %v802 = vadd.f32 0.0, %v801
  %v803 = vpop.f32.mrb[0].mxu0
  %804 = vmatprep.mubr.bf16.mxu0 %v514
  %805 = vmatmul.mubr.bf16.gmra.mrb[0].mxu0 %v513
  %v806 = vpop.f32.mrb[0].mxu0
  %v807 = vadd.f32 0.0, %v806
  %v808 = vpop.f32.mrb[0].mxu0
  %v809 = vpop.f32.mrb[0].mxu0
  %v810 = vadd.f32 0.0, %v809
  %v811 = vpop.f32.mrb[0].mxu0
  %812 = vmatprep.mubr.bf16.mxu0 %v518
  %813 = vmatmul.mubr.bf16.gmra.mrb[0].mxu0 %v517
  %v814 = vpop.f32.mrb[0].mxu0
  %v815 = vadd.f32 0.0, %v814
  %v816 = vpop.f32.mrb[0].mxu0
  %v817 = vpop.f32.mrb[0].mxu0
  %v818 = vadd.f32 0.0, %v817
  %v819 = vpop.f32.mrb[0].mxu0
  %820 = vmatprep.mubr.bf16.mxu0 %v522
  %821 = vmatmul.mubr.bf16.gmra.mrb[0].mxu0 %v521
  %v822 = vpop.f32.mrb[0].mxu0
  %v823 = vadd.f32 0.0, %v822
  %v824 = vpop.f32.mrb[0].mxu0
  %v825 = vpop.f32.mrb[0].mxu0
  %v826 = vadd.f32 0.0, %v825
  %v827 = vpop.f32.mrb[0].mxu0
  %828 = vmatprep.mubr.bf16.mxu0 %v526
  %829 = vmatmul.mubr.bf16.gmra.mrb[0].mxu0 %v525
  %v830 = vpop.f32.mrb[0].mxu0
  %v831 = vadd.f32 0.0, %v830
  %v832 = vpop.f32.mrb[0].mxu0
  %v833 = vpop.f32.mrb[0].mxu0
  %v834 = vadd.f32 0.0, %v833
  %v835 = vpop.f32.mrb[0].mxu0
  %836 = vmatprep.mubr.bf16.mxu0 %v530
  %837 = vmatmul.mubr.bf16.gmra.mrb[0].mxu0 %v529
  %v838 = vpop.f32.mrb[0].mxu0
  %v839 = vadd.f32 0.0, %v838
  %v840 = vpop.f32.mrb[0].mxu0
  %v841 = vpop.f32.mrb[0].mxu0
  %v842 = vadd.f32 0.0, %v841
  %v843 = vpop.f32.mrb[0].mxu0
  %844 = vmatprep.mubr.bf16.mxu0 %v534
  %845 = vmatmul.mubr.bf16.gmra.mrb[0].mxu0 %v533
  %v846 = vpop.f32.mrb[0].mxu0
  %v847 = vadd.f32 0.0, %v846
  %v848 = vpop.f32.mrb[0].mxu0
  %v849 = vpop.f32.mrb[0].mxu0
  %v850 = vadd.f32 0.0, %v849
  %v851 = vpop.f32.mrb[0].mxu0
  %852 = vmatprep.mubr.bf16.mxu0 %v538
  %853 = vmatmul.mubr.bf16.gmra.mrb[0].mxu0 %v537
  %v854 = vpop.f32.mrb[0].mxu0
  %v855 = vadd.f32 0.0, %v854
  %v856 = vpop.f32.mrb[0].mxu0
  %v857 = vpop.f32.mrb[0].mxu0
  %v858 = vadd.f32 0.0, %v857
  %v859 = vpop.f32.mrb[0].mxu0
  %860 = vmatprep.mubr.bf16.mxu0 %v542
  %861 = vmatmul.mubr.bf16.gmra.mrb[0].mxu0 %v541
  %v862 = vpop.f32.mrb[0].mxu0
  %v863 = vadd.f32 0.0, %v862
  %v864 = vpop.f32.mrb[0].mxu0
  %v865 = vpop.f32.mrb[0].mxu0
  %v866 = vadd.f32 0.0, %v865
  %v867 = vpop.f32.mrb[0].mxu0
  %868 = vmatprep.mubr.bf16.mxu0 %v546
  %869 = vmatmul.mubr.bf16.gmra.mrb[0].mxu0 %v545
  %v870 = vpop.f32.mrb[0].mxu0
  %v871 = vadd.f32 0.0, %v870
  %v872 = vpop.f32.mrb[0].mxu0
  %v873 = vpop.f32.mrb[0].mxu0
  %v874 = vadd.f32 0.0, %v873
  %v875 = vpop.f32.mrb[0].mxu0
  %876 = vmatprep.mubr.bf16.mxu0 %v550
  %877 = vmatmul.mubr.bf16.gmra.mrb[0].mxu0 %v549
  %v878 = vpop.f32.mrb[0].mxu0
  %v879 = vadd.f32 0.0, %v878
  %v880 = vpop.f32.mrb[0].mxu0
  %v881 = vpop.f32.mrb[0].mxu0
  %v882 = vadd.f32 0.0, %v881
  %v883 = vpop.f32.mrb[0].mxu0
  %884 = vmatprep.mubr.bf16.mxu0 %v554
  %885 = vmatmul.mubr.bf16.gmra.mrb[0].mxu0 %v553
  %v886 = vpop.f32.mrb[0].mxu0
  %v887 = vadd.f32 0.0, %v886
  %v888 = vpop.f32.mrb[0].mxu0
  %v889 = vpop.f32.mrb[0].mxu0
  %v890 = vadd.f32 0.0, %v889
  %v891 = vpop.f32.mrb[0].mxu0
  %892 = vmatprep.mubr.bf16.mxu0 %v558
  %893 = vmatmul.mubr.bf16.gmra.mrb[0].mxu0 %v557
  %v894 = vpop.f32.mrb[0].mxu0
  %v895 = vadd.f32 0.0, %v894
  %v896 = vpop.f32.mrb[0].mxu0
  %v897 = vpop.f32.mrb[0].mxu0
  %v898 = vadd.f32 0.0, %v897
  %v899 = vpop.f32.mrb[0].mxu0
  %900 = vmatprep.mubr.bf16.mxu0 %v562
  %901 = vmatmul.mubr.bf16.gmra.mrb[0].mxu0 %v561
  %v902 = vpop.f32.mrb[0].mxu0
  %v903 = vadd.f32 0.0, %v902
  %v904 = vpop.f32.mrb[0].mxu0
  %v905 = vpop.f32.mrb[0].mxu0
  %v906 = vadd.f32 0.0, %v905
  %v907 = vpop.f32.mrb[0].mxu0
  %908 = vmatprep.mubr.bf16.mxu0 %v566
  %909 = vmatmul.mubr.bf16.gmra.mrb[0].mxu0 %v565
  %v910 = vpop.f32.mrb[0].mxu0
  %v911 = vadd.f32 0.0, %v910
  %v912 = vpop.f32.mrb[0].mxu0
  %v913 = vpop.f32.mrb[0].mxu0
  %v914 = vadd.f32 0.0, %v913
  %v915 = vpop.f32.mrb[0].mxu0
  %916 = vmatprep.mubr.bf16.mxu0 %v570
  %917 = vmatmul.mubr.bf16.gmra.mrb[0].mxu0 %v569
  %v918 = vpop.f32.mrb[0].mxu0
  %v919 = vadd.f32 0.0, %v918
  %v920 = vpop.f32.mrb[0].mxu0
  %v921 = vpop.f32.mrb[0].mxu0
  %v922 = vadd.f32 0.0, %v921
  %v923 = vpop.f32.mrb[0].mxu0
  %924 = vmatprep.mubr.bf16.mxu0 %v574
  %925 = vmatmul.mubr.bf16.gmra.mrb[0].mxu0 %v573
  %v926 = vpop.f32.mrb[0].mxu0
  %v927 = vadd.f32 0.0, %v926
  %v928 = vpop.f32.mrb[0].mxu0
  %v929 = vpop.f32.mrb[0].mxu0
  %v930 = vadd.f32 0.0, %v929
  %v931 = vpop.f32.mrb[0].mxu0
  %932 = vmatprep.mubr.bf16.mxu0 %v578
  %933 = vmatmul.mubr.bf16.gmra.mrb[0].mxu0 %v577
  %v934 = vpop.f32.mrb[0].mxu0
  %v935 = vadd.f32 0.0, %v934
  %v936 = vpop.f32.mrb[0].mxu0
  %v937 = vpop.f32.mrb[0].mxu0
  %v938 = vadd.f32 0.0, %v937
  %v939 = vpop.f32.mrb[0].mxu0
  %940 = vmatprep.mubr.bf16.mxu0 %v582
  %941 = vmatmul.mubr.bf16.gmra.mrb[0].mxu0 %v581
  %v942 = vpop.f32.mrb[0].mxu0
  %v943 = vadd.f32 0.0, %v942
  %v944 = vpop.f32.mrb[0].mxu0
  %v945 = vpop.f32.mrb[0].mxu0
  %v946 = vadd.f32 0.0, %v945
  %v947 = vpop.f32.mrb[0].mxu0
  %948 = vmatprep.mubr.bf16.mxu0 %v586
  %949 = vmatmul.mubr.bf16.gmra.mrb[0].mxu0 %v585
  %v950 = vpop.f32.mrb[0].mxu0
  %v951 = vadd.f32 0.0, %v950
  %v952 = vpop.f32.mrb[0].mxu0
  %v953 = vpop.f32.mrb[0].mxu0
  %v954 = vadd.f32 0.0, %v953
  %v955 = vpop.f32.mrb[0].mxu0
  %956 = vmatprep.mubr.bf16.mxu0 %v590
  %957 = vmatmul.mubr.bf16.gmra.mrb[0].mxu0 %v589
  %v958 = vpop.f32.mrb[0].mxu0
  %v959 = vadd.f32 0.0, %v958
  %v960 = vpop.f32.mrb[0].mxu0
  %v961 = vpop.f32.mrb[0].mxu0
  %v962 = vadd.f32 0.0, %v961
  %v963 = vpop.f32.mrb[0].mxu0
  %964 = vmatprep.mubr.bf16.mxu0 %v594
  %965 = vmatmul.mubr.bf16.gmra.mrb[0].mxu0 %v593
  %v966 = vpop.f32.mrb[0].mxu0
  %v967 = vadd.f32 0.0, %v966
  %v968 = vpop.f32.mrb[0].mxu0
  %v969 = vpop.f32.mrb[0].mxu0
  %v970 = vadd.f32 0.0, %v969
  %v971 = vpop.f32.mrb[0].mxu0
  %972 = vmatprep.mubr.bf16.mxu0 %v598
  %973 = vmatmul.mubr.bf16.gmra.mrb[0].mxu0 %v597
  %v974 = vpop.f32.mrb[0].mxu0
  %v975 = vadd.f32 0.0, %v974
  %v976 = vpop.f32.mrb[0].mxu0
  %v977 = vpop.f32.mrb[0].mxu0
  %v978 = vadd.f32 0.0, %v977
  %v979 = vpop.f32.mrb[0].mxu0
  %980 = vmatprep.mubr.bf16.mxu0 %v602
  %981 = vmatmul.mubr.bf16.gmra.mrb[0].mxu0 %v601
  %v982 = vpop.f32.mrb[0].mxu0
  %v983 = vadd.f32 0.0, %v982
  %v984 = vpop.f32.mrb[0].mxu0
  %v985 = vpop.f32.mrb[0].mxu0
  %v986 = vadd.f32 0.0, %v985
  %v987 = vpop.f32.mrb[0].mxu0
  %988 = vdwg.mxu0
  %989 = vmatprep.subr.bf16.mxu0 0
  %990 = vmatpush1.bf16.msra.mxu0 %v96
  %991 = vmatprep.subr.bf16.mxu0 0
  %992 = vmatpush1.bf16.msra.mxu0 %v97
  %993 = vmatprep.subr.bf16.mxu0 0
  %994 = vmatpush1.bf16.msra.mxu0 %v98
  %995 = vmatprep.subr.bf16.mxu0 0
  %996 = vmatpush1.bf16.msra.mxu0 %v99
  %997 = vmatprep.subr.bf16.mxu0 0
  %998 = vmatpush1.bf16.msra.mxu0 %v100
  %999 = vmatprep.subr.bf16.mxu0 0
  %1000 = vmatpush1.bf16.msra.mxu0 %v101
  %1001 = vmatprep.subr.bf16.mxu0 0
  %1002 = vmatpush1.bf16.msra.mxu0 %v102
  %1003 = vmatprep.subr.bf16.mxu0 0
  %1004 = vmatpush1.bf16.msra.mxu0 %v103
  %1005 = vmatprep.subr.bf16.mxu0 0
  %1006 = vmatpush1.bf16.msra.mxu0 %v104
  %1007 = vmatprep.subr.bf16.mxu0 0
  %1008 = vmatpush1.bf16.msra.mxu0 0
  %1009 = vmatprep.subr.bf16.mxu0 0
  %1010 = vmatpush1.bf16.msra.mxu0 0
  %1011 = vmatprep.subr.bf16.mxu0 0
  %1012 = vmatpush1.bf16.msra.mxu0 0
  %1013 = vmatprep.subr.bf16.mxu0 0
  %1014 = vmatpush1.bf16.msra.mxu0 0
  %1015 = vmatprep.subr.bf16.mxu0 0
  %1016 = vmatpush1.bf16.msra.mxu0 0
  %1017 = vmatprep.subr.bf16.mxu0 0
  %1018 = vmatpush1.bf16.msra.mxu0 0
  %1019 = vmatprep.subr.bf16.mxu0 0
  %1020 = vmatpush1.bf16.msra.mxu0 0
  %1021 = vmatprep.mubr.bf16.mxu0 %v682
  %1022 = vmatmul.mubr.bf16.gmra.mrb[0].mxu0 %v507
  %v1023 = vpop.f32.mrb[0].mxu0
  %v1024 = vadd.f32 %v791, %v1023
  %v1025 = vpop.f32.mrb[0].mxu0
  %v1026 = vpop.f32.mrb[0].mxu0
  %v1027 = vadd.f32 %v794, %v1026
  %v1028 = vpop.f32.mrb[0].mxu0
  %1029 = vmatprep.mubr.bf16.mxu0 %v685
  %1030 = vmatmul.mubr.bf16.gmra.mrb[0].mxu0 %v511
  %v1031 = vpop.f32.mrb[0].mxu0
  %v1032 = vadd.f32 %v799, %v1031
  %v1033 = vpop.f32.mrb[0].mxu0
  %v1034 = vpop.f32.mrb[0].mxu0
  %v1035 = vadd.f32 %v802, %v1034
  %v1036 = vpop.f32.mrb[0].mxu0
  %1037 = vmatprep.mubr.bf16.mxu0 %v688
  %1038 = vmatmul.mubr.bf16.gmra.mrb[0].mxu0 %v515
  %v1039 = vpop.f32.mrb[0].mxu0
  %v1040 = vadd.f32 %v807, %v1039
  %v1041 = vpop.f32.mrb[0].mxu0
  %v1042 = vpop.f32.mrb[0].mxu0
  %v1043 = vadd.f32 %v810, %v1042
  %v1044 = vpop.f32.mrb[0].mxu0
  %1045 = vmatprep.mubr.bf16.mxu0 %v691
  %1046 = vmatmul.mubr.bf16.gmra.mrb[0].mxu0 %v519
  %v1047 = vpop.f32.mrb[0].mxu0
  %v1048 = vadd.f32 %v815, %v1047
  %v1049 = vpop.f32.mrb[0].mxu0
  %v1050 = vpop.f32.mrb[0].mxu0
  %v1051 = vadd.f32 %v818, %v1050
  %v1052 = vpop.f32.mrb[0].mxu0
  %1053 = vmatprep.mubr.bf16.mxu0 %v694
  %1054 = vmatmul.mubr.bf16.gmra.mrb[0].mxu0 %v523
  %v1055 = vpop.f32.mrb[0].mxu0
  %v1056 = vadd.f32 %v823, %v1055
  %v1057 = vpop.f32.mrb[0].mxu0
  %v1058 = vpop.f32.mrb[0].mxu0
  %v1059 = vadd.f32 %v826, %v1058
  %v1060 = vpop.f32.mrb[0].mxu0
  %1061 = vmatprep.mubr.bf16.mxu0 %v697
  %1062 = vmatmul.mubr.bf16.gmra.mrb[0].mxu0 %v527
  %v1063 = vpop.f32.mrb[0].mxu0
  %v1064 = vadd.f32 %v831, %v1063
  %v1065 = vpop.f32.mrb[0].mxu0
  %v1066 = vpop.f32.mrb[0].mxu0
  %v1067 = vadd.f32 %v834, %v1066
  %v1068 = vpop.f32.mrb[0].mxu0
  %1069 = vmatprep.mubr.bf16.mxu0 %v700
  %1070 = vmatmul.mubr.bf16.gmra.mrb[0].mxu0 %v531
  %v1071 = vpop.f32.mrb[0].mxu0
  %v1072 = vadd.f32 %v839, %v1071
  %v1073 = vpop.f32.mrb[0].mxu0
  %v1074 = vpop.f32.mrb[0].mxu0
  %v1075 = vadd.f32 %v842, %v1074
  %v1076 = vpop.f32.mrb[0].mxu0
  %1077 = vmatprep.mubr.bf16.mxu0 %v703
  %1078 = vmatmul.mubr.bf16.gmra.mrb[0].mxu0 %v535
  %v1079 = vpop.f32.mrb[0].mxu0
  %v1080 = vadd.f32 %v847, %v1079
  %v1081 = vpop.f32.mrb[0].mxu0
  %v1082 = vpop.f32.mrb[0].mxu0
  %v1083 = vadd.f32 %v850, %v1082
  %v1084 = vpop.f32.mrb[0].mxu0
  %1085 = vmatprep.mubr.bf16.mxu0 %v706
  %1086 = vmatmul.mubr.bf16.gmra.mrb[0].mxu0 %v539
  %v1087 = vpop.f32.mrb[0].mxu0
  %v1088 = vadd.f32 %v855, %v1087
  %v1089 = vpop.f32.mrb[0].mxu0
  %v1090 = vpop.f32.mrb[0].mxu0
  %v1091 = vadd.f32 %v858, %v1090
  %v1092 = vpop.f32.mrb[0].mxu0
  %1093 = vmatprep.mubr.bf16.mxu0 %v709
  %1094 = vmatmul.mubr.bf16.gmra.mrb[0].mxu0 %v543
  %v1095 = vpop.f32.mrb[0].mxu0
  %v1096 = vadd.f32 %v863, %v1095
  %v1097 = vpop.f32.mrb[0].mxu0
  %v1098 = vpop.f32.mrb[0].mxu0
  %v1099 = vadd.f32 %v866, %v1098
  %v1100 = vpop.f32.mrb[0].mxu0
  %1101 = vmatprep.mubr.bf16.mxu0 %v712
  %1102 = vmatmul.mubr.bf16.gmra.mrb[0].mxu0 %v547
  %v1103 = vpop.f32.mrb[0].mxu0
  %v1104 = vadd.f32 %v871, %v1103
  %v1105 = vpop.f32.mrb[0].mxu0
  %v1106 = vpop.f32.mrb[0].mxu0
  %v1107 = vadd.f32 %v874, %v1106
  %v1108 = vpop.f32.mrb[0].mxu0
  %1109 = vmatprep.mubr.bf16.mxu0 %v715
  %1110 = vmatmul.mubr.bf16.gmra.mrb[0].mxu0 %v551
  %v1111 = vpop.f32.mrb[0].mxu0
  %v1112 = vadd.f32 %v879, %v1111
  %v1113 = vpop.f32.mrb[0].mxu0
  %v1114 = vpop.f32.mrb[0].mxu0
  %v1115 = vadd.f32 %v882, %v1114
  %v1116 = vpop.f32.mrb[0].mxu0
  %1117 = vmatprep.mubr.bf16.mxu0 %v718
  %1118 = vmatmul.mubr.bf16.gmra.mrb[0].mxu0 %v555
  %v1119 = vpop.f32.mrb[0].mxu0
  %v1120 = vadd.f32 %v887, %v1119
  %v1121 = vpop.f32.mrb[0].mxu0
  %v1122 = vpop.f32.mrb[0].mxu0
  %v1123 = vadd.f32 %v890, %v1122
  %v1124 = vpop.f32.mrb[0].mxu0
  %1125 = vmatprep.mubr.bf16.mxu0 %v721
  %1126 = vmatmul.mubr.bf16.gmra.mrb[0].mxu0 %v559
  %v1127 = vpop.f32.mrb[0].mxu0
  %v1128 = vadd.f32 %v895, %v1127
  %v1129 = vpop.f32.mrb[0].mxu0
  %v1130 = vpop.f32.mrb[0].mxu0
  %v1131 = vadd.f32 %v898, %v1130
  %v1132 = vpop.f32.mrb[0].mxu0
  %1133 = vmatprep.mubr.bf16.mxu0 %v724
  %1134 = vmatmul.mubr.bf16.gmra.mrb[0].mxu0 %v563
  %v1135 = vpop.f32.mrb[0].mxu0
  %v1136 = vadd.f32 %v903, %v1135
  %v1137 = vpop.f32.mrb[0].mxu0
  %v1138 = vpop.f32.mrb[0].mxu0
  %v1139 = vadd.f32 %v906, %v1138
  %v1140 = vpop.f32.mrb[0].mxu0
  %1141 = vmatprep.mubr.bf16.mxu0 %v727
  %1142 = vmatmul.mubr.bf16.gmra.mrb[0].mxu0 %v567
  %v1143 = vpop.f32.mrb[0].mxu0
  %v1144 = vadd.f32 %v911, %v1143
  %v1145 = vpop.f32.mrb[0].mxu0
  %v1146 = vpop.f32.mrb[0].mxu0
  %v1147 = vadd.f32 %v914, %v1146
  %v1148 = vpop.f32.mrb[0].mxu0
  %1149 = vmatprep.mubr.bf16.mxu0 %v730
  %1150 = vmatmul.mubr.bf16.gmra.mrb[0].mxu0 %v571
  %v1151 = vpop.f32.mrb[0].mxu0
  %v1152 = vadd.f32 %v919, %v1151
  %v1153 = vpop.f32.mrb[0].mxu0
  %v1154 = vpop.f32.mrb[0].mxu0
  %v1155 = vadd.f32 %v922, %v1154
  %v1156 = vpop.f32.mrb[0].mxu0
  %1157 = vmatprep.mubr.bf16.mxu0 %v733
  %1158 = vmatmul.mubr.bf16.gmra.mrb[0].mxu0 %v575
  %v1159 = vpop.f32.mrb[0].mxu0
  %v1160 = vadd.f32 %v927, %v1159
  %v1161 = vpop.f32.mrb[0].mxu0
  %v1162 = vpop.f32.mrb[0].mxu0
  %v1163 = vadd.f32 %v930, %v1162
  %v1164 = vpop.f32.mrb[0].mxu0
  %1165 = vmatprep.mubr.bf16.mxu0 %v736
  %1166 = vmatmul.mubr.bf16.gmra.mrb[0].mxu0 %v579
  %v1167 = vpop.f32.mrb[0].mxu0
  %v1168 = vadd.f32 %v935, %v1167
  %v1169 = vpop.f32.mrb[0].mxu0
  %v1170 = vpop.f32.mrb[0].mxu0
  %v1171 = vadd.f32 %v938, %v1170
  %v1172 = vpop.f32.mrb[0].mxu0
  %1173 = vmatprep.mubr.bf16.mxu0 %v739
  %1174 = vmatmul.mubr.bf16.gmra.mrb[0].mxu0 %v583
  %v1175 = vpop.f32.mrb[0].mxu0
  %v1176 = vadd.f32 %v943, %v1175
  %v1177 = vpop.f32.mrb[0].mxu0
  %v1178 = vpop.f32.mrb[0].mxu0
  %v1179 = vadd.f32 %v946, %v1178
  %v1180 = vpop.f32.mrb[0].mxu0
  %1181 = vmatprep.mubr.bf16.mxu0 %v742
  %1182 = vmatmul.mubr.bf16.gmra.mrb[0].mxu0 %v587
  %v1183 = vpop.f32.mrb[0].mxu0
  %v1184 = vadd.f32 %v951, %v1183
  %v1185 = vpop.f32.mrb[0].mxu0
  %v1186 = vpop.f32.mrb[0].mxu0
  %v1187 = vadd.f32 %v954, %v1186
  %v1188 = vpop.f32.mrb[0].mxu0
  %1189 = vmatprep.mubr.bf16.mxu0 %v745
  %1190 = vmatmul.mubr.bf16.gmra.mrb[0].mxu0 %v591
  %v1191 = vpop.f32.mrb[0].mxu0
  %v1192 = vadd.f32 %v959, %v1191
  %v1193 = vpop.f32.mrb[0].mxu0
  %v1194 = vpop.f32.mrb[0].mxu0
  %v1195 = vadd.f32 %v962, %v1194
  %v1196 = vpop.f32.mrb[0].mxu0
  %1197 = vmatprep.mubr.bf16.mxu0 %v748
  %1198 = vmatmul.mubr.bf16.gmra.mrb[0].mxu0 %v595
  %v1199 = vpop.f32.mrb[0].mxu0
  %v1200 = vadd.f32 %v967, %v1199
  %v1201 = vpop.f32.mrb[0].mxu0
  %v1202 = vpop.f32.mrb[0].mxu0
  %v1203 = vadd.f32 %v970, %v1202
  %v1204 = vpop.f32.mrb[0].mxu0
  %1205 = vmatprep.mubr.bf16.mxu0 %v751
  %1206 = vmatmul.mubr.bf16.gmra.mrb[0].mxu0 %v599
  %v1207 = vpop.f32.mrb[0].mxu0
  %v1208 = vadd.f32 %v975, %v1207
  %v1209 = vpop.f32.mrb[0].mxu0
  %v1210 = vpop.f32.mrb[0].mxu0
  %v1211 = vadd.f32 %v978, %v1210
  %v1212 = vpop.f32.mrb[0].mxu0
  %1213 = vmatprep.mubr.bf16.mxu0 %v754
  %1214 = vmatmul.mubr.bf16.gmra.mrb[0].mxu0 %v603
  %v1215 = vpop.f32.mrb[0].mxu0
  %v1216 = vadd.f32 %v983, %v1215
  %v1217 = vpop.f32.mrb[0].mxu0
  %v1218 = vpop.f32.mrb[0].mxu0
  %v1219 = vadd.f32 %v986, %v1218
  %v1220 = vpop.f32.mrb[0].mxu0
  %1221 = vdwg.mxu0
  %vm1222 = vcmask 400384
  %v1223 = vsel %vm1222, %v1024, 0.0
  %1224 = vadd.xlane.f32.xlu0 %v1223
  %v1225 = vpop.xlane.xlu0 %1224
  %v1226 = vsel %vm1222, %v1027, 0.0
  %1227 = vadd.xlane.f32.xlu0 %v1226
  %v1228 = vpop.xlane.xlu0 %1227
  %v1229 = vsel %vm1222, %v1032, 0.0
  %1230 = vadd.xlane.f32.xlu0 %v1229
  %v1231 = vpop.xlane.xlu0 %1230
  %v1232 = vsel %vm1222, %v1035, 0.0
  %1233 = vadd.xlane.f32.xlu0 %v1232
  %v1234 = vpop.xlane.xlu0 %1233
  %v1235 = vsel %vm1222, %v1040, 0.0
  %1236 = vadd.xlane.f32.xlu0 %v1235
  %v1237 = vpop.xlane.xlu0 %1236
  %v1238 = vsel %vm1222, %v1043, 0.0
  %1239 = vadd.xlane.f32.xlu0 %v1238
  %v1240 = vpop.xlane.xlu0 %1239
  %v1241 = vsel %vm1222, %v1048, 0.0
  %1242 = vadd.xlane.f32.xlu0 %v1241
  %v1243 = vpop.xlane.xlu0 %1242
  %v1244 = vsel %vm1222, %v1051, 0.0
  %1245 = vadd.xlane.f32.xlu0 %v1244
  %v1246 = vpop.xlane.xlu0 %1245
  %v1247 = vsel %vm1222, %v1056, 0.0
  %1248 = vadd.xlane.f32.xlu0 %v1247
  %v1249 = vpop.xlane.xlu0 %1248
  %v1250 = vsel %vm1222, %v1059, 0.0
  %1251 = vadd.xlane.f32.xlu0 %v1250
  %v1252 = vpop.xlane.xlu0 %1251
  %v1253 = vsel %vm1222, %v1064, 0.0
  %1254 = vadd.xlane.f32.xlu0 %v1253
  %v1255 = vpop.xlane.xlu0 %1254
  %v1256 = vsel %vm1222, %v1067, 0.0
  %1257 = vadd.xlane.f32.xlu0 %v1256
  %v1258 = vpop.xlane.xlu0 %1257
  %v1259 = vsel %vm1222, %v1072, 0.0
  %1260 = vadd.xlane.f32.xlu0 %v1259
  %v1261 = vpop.xlane.xlu0 %1260
  %v1262 = vsel %vm1222, %v1075, 0.0
  %1263 = vadd.xlane.f32.xlu0 %v1262
  %v1264 = vpop.xlane.xlu0 %1263
  %v1265 = vsel %vm1222, %v1080, 0.0
  %1266 = vadd.xlane.f32.xlu0 %v1265
  %v1267 = vpop.xlane.xlu0 %1266
  %v1268 = vsel %vm1222, %v1083, 0.0
  %1269 = vadd.xlane.f32.xlu0 %v1268
  %v1270 = vpop.xlane.xlu0 %1269
  %v1271 = vsel %vm1222, %v1088, 0.0
  %1272 = vadd.xlane.f32.xlu0 %v1271
  %v1273 = vpop.xlane.xlu0 %1272
  %v1274 = vsel %vm1222, %v1091, 0.0
  %1275 = vadd.xlane.f32.xlu0 %v1274
  %v1276 = vpop.xlane.xlu0 %1275
  %v1277 = vsel %vm1222, %v1096, 0.0
  %1278 = vadd.xlane.f32.xlu0 %v1277
  %v1279 = vpop.xlane.xlu0 %1278
  %v1280 = vsel %vm1222, %v1099, 0.0
  %1281 = vadd.xlane.f32.xlu0 %v1280
  %v1282 = vpop.xlane.xlu0 %1281
  %v1283 = vsel %vm1222, %v1104, 0.0
  %1284 = vadd.xlane.f32.xlu0 %v1283
  %v1285 = vpop.xlane.xlu0 %1284
  %v1286 = vsel %vm1222, %v1107, 0.0
  %1287 = vadd.xlane.f32.xlu0 %v1286
  %v1288 = vpop.xlane.xlu0 %1287
  %v1289 = vsel %vm1222, %v1112, 0.0
  %1290 = vadd.xlane.f32.xlu0 %v1289
  %v1291 = vpop.xlane.xlu0 %1290
  %v1292 = vsel %vm1222, %v1115, 0.0
  %1293 = vadd.xlane.f32.xlu0 %v1292
  %v1294 = vpop.xlane.xlu0 %1293
  %v1295 = vsel %vm1222, %v1120, 0.0
  %1296 = vadd.xlane.f32.xlu0 %v1295
  %v1297 = vpop.xlane.xlu0 %1296
  %v1298 = vsel %vm1222, %v1123, 0.0
  %1299 = vadd.xlane.f32.xlu0 %v1298
  %v1300 = vpop.xlane.xlu0 %1299
  %v1301 = vsel %vm1222, %v1128, 0.0
  %1302 = vadd.xlane.f32.xlu0 %v1301
  %v1303 = vpop.xlane.xlu0 %1302
  %v1304 = vsel %vm1222, %v1131, 0.0
  %1305 = vadd.xlane.f32.xlu0 %v1304
  %v1306 = vpop.xlane.xlu0 %1305
  %v1307 = vsel %vm1222, %v1136, 0.0
  %1308 = vadd.xlane.f32.xlu0 %v1307
  %v1309 = vpop.xlane.xlu0 %1308
  %v1310 = vsel %vm1222, %v1139, 0.0
  %1311 = vadd.xlane.f32.xlu0 %v1310
  %v1312 = vpop.xlane.xlu0 %1311
  %v1313 = vsel %vm1222, %v1144, 0.0
  %1314 = vadd.xlane.f32.xlu0 %v1313
  %v1315 = vpop.xlane.xlu0 %1314
  %v1316 = vsel %vm1222, %v1147, 0.0
  %1317 = vadd.xlane.f32.xlu0 %v1316
  %v1318 = vpop.xlane.xlu0 %1317
  %v1319 = vsel %vm1222, %v1152, 0.0
  %1320 = vadd.xlane.f32.xlu0 %v1319
  %v1321 = vpop.xlane.xlu0 %1320
  %v1322 = vsel %vm1222, %v1155, 0.0
  %1323 = vadd.xlane.f32.xlu0 %v1322
  %v1324 = vpop.xlane.xlu0 %1323
  %v1325 = vsel %vm1222, %v1160, 0.0
  %1326 = vadd.xlane.f32.xlu0 %v1325
  %v1327 = vpop.xlane.xlu0 %1326
  %v1328 = vsel %vm1222, %v1163, 0.0
  %1329 = vadd.xlane.f32.xlu0 %v1328
  %v1330 = vpop.xlane.xlu0 %1329
  %v1331 = vsel %vm1222, %v1168, 0.0
  %1332 = vadd.xlane.f32.xlu0 %v1331
  %v1333 = vpop.xlane.xlu0 %1332
  %v1334 = vsel %vm1222, %v1171, 0.0
  %1335 = vadd.xlane.f32.xlu0 %v1334
  %v1336 = vpop.xlane.xlu0 %1335
  %v1337 = vsel %vm1222, %v1176, 0.0
  %1338 = vadd.xlane.f32.xlu0 %v1337
  %v1339 = vpop.xlane.xlu0 %1338
  %v1340 = vsel %vm1222, %v1179, 0.0
  %1341 = vadd.xlane.f32.xlu0 %v1340
  %v1342 = vpop.xlane.xlu0 %1341
  %v1343 = vsel %vm1222, %v1184, 0.0
  %1344 = vadd.xlane.f32.xlu0 %v1343
  %v1345 = vpop.xlane.xlu0 %1344
  %v1346 = vsel %vm1222, %v1187, 0.0
  %1347 = vadd.xlane.f32.xlu0 %v1346
  %v1348 = vpop.xlane.xlu0 %1347
  %v1349 = vsel %vm1222, %v1192, 0.0
  %1350 = vadd.xlane.f32.xlu0 %v1349
  %v1351 = vpop.xlane.xlu0 %1350
  %v1352 = vsel %vm1222, %v1195, 0.0
  %1353 = vadd.xlane.f32.xlu0 %v1352
  %v1354 = vpop.xlane.xlu0 %1353
  %v1355 = vsel %vm1222, %v1200, 0.0
  %1356 = vadd.xlane.f32.xlu0 %v1355
  %v1357 = vpop.xlane.xlu0 %1356
  %v1358 = vsel %vm1222, %v1203, 0.0
  %1359 = vadd.xlane.f32.xlu0 %v1358
  %v1360 = vpop.xlane.xlu0 %1359
  %v1361 = vsel %vm1222, %v1208, 0.0
  %1362 = vadd.xlane.f32.xlu0 %v1361
  %v1363 = vpop.xlane.xlu0 %1362
  %v1364 = vsel %vm1222, %v1211, 0.0
  %1365 = vadd.xlane.f32.xlu0 %v1364
  %v1366 = vpop.xlane.xlu0 %1365
  %v1367 = vsel %vm1222, %v1216, 0.0
  %1368 = vadd.xlane.f32.xlu0 %v1367
  %v1369 = vpop.xlane.xlu0 %1368
  %v1370 = vsel %vm1222, %v1219, 0.0
  %1371 = vadd.xlane.f32.xlu0 %v1370
  %v1372 = vpop.xlane.xlu0 %1371
  %v1373 = vrcp.pop 49.0
  %v1374 = vmul.f32 %v1225, %v1373
  %v1375 = vmul.f32 %v1228, %v1373
  %v1376 = vmul.f32 %v1231, %v1373
  %v1377 = vmul.f32 %v1234, %v1373
  %v1378 = vmul.f32 %v1237, %v1373
  %v1379 = vmul.f32 %v1240, %v1373
  %v1380 = vmul.f32 %v1243, %v1373
  %v1381 = vmul.f32 %v1246, %v1373
  %v1382 = vmul.f32 %v1249, %v1373
  %v1383 = vmul.f32 %v1252, %v1373
  %v1384 = vmul.f32 %v1255, %v1373
  %v1385 = vmul.f32 %v1258, %v1373
  %v1386 = vmul.f32 %v1261, %v1373
  %v1387 = vmul.f32 %v1264, %v1373
  %v1388 = vmul.f32 %v1267, %v1373
  %v1389 = vmul.f32 %v1270, %v1373
  %v1390 = vmul.f32 %v1273, %v1373
  %v1391 = vmul.f32 %v1276, %v1373
  %v1392 = vmul.f32 %v1279, %v1373
  %v1393 = vmul.f32 %v1282, %v1373
  %v1394 = vmul.f32 %v1285, %v1373
  %v1395 = vmul.f32 %v1288, %v1373
  %v1396 = vmul.f32 %v1291, %v1373
  %v1397 = vmul.f32 %v1294, %v1373
  %v1398 = vmul.f32 %v1297, %v1373
  %v1399 = vmul.f32 %v1300, %v1373
  %v1400 = vmul.f32 %v1303, %v1373
  %v1401 = vmul.f32 %v1306, %v1373
  %v1402 = vmul.f32 %v1309, %v1373
  %v1403 = vmul.f32 %v1312, %v1373
  %v1404 = vmul.f32 %v1315, %v1373
  %v1405 = vmul.f32 %v1318, %v1373
  %v1406 = vmul.f32 %v1321, %v1373
  %v1407 = vmul.f32 %v1324, %v1373
  %v1408 = vmul.f32 %v1327, %v1373
  %v1409 = vmul.f32 %v1330, %v1373
  %v1410 = vmul.f32 %v1333, %v1373
  %v1411 = vmul.f32 %v1336, %v1373
  %v1412 = vmul.f32 %v1339, %v1373
  %v1413 = vmul.f32 %v1342, %v1373
  %v1414 = vmul.f32 %v1345, %v1373
  %v1415 = vmul.f32 %v1348, %v1373
  %v1416 = vmul.f32 %v1351, %v1373
  %v1417 = vmul.f32 %v1354, %v1373
  %v1418 = vmul.f32 %v1357, %v1373
  %v1419 = vmul.f32 %v1360, %v1373
  %v1420 = vmul.f32 %v1363, %v1373
  %v1421 = vmul.f32 %v1366, %v1373
  %v1422 = vmul.f32 %v1369, %v1373
  %v1423 = vmul.f32 %v1372, %v1373
  %v1424 = vmul.f32 %v1024, %v1024
  %v1425 = vmul.f32 %v1027, %v1027
  %v1426 = vmul.f32 %v1032, %v1032
  %v1427 = vmul.f32 %v1035, %v1035
  %v1428 = vmul.f32 %v1040, %v1040
  %v1429 = vmul.f32 %v1043, %v1043
  %v1430 = vmul.f32 %v1048, %v1048
  %v1431 = vmul.f32 %v1051, %v1051
  %v1432 = vmul.f32 %v1056, %v1056
  %v1433 = vmul.f32 %v1059, %v1059
  %v1434 = vmul.f32 %v1064, %v1064
  %v1435 = vmul.f32 %v1067, %v1067
  %v1436 = vmul.f32 %v1072, %v1072
  %v1437 = vmul.f32 %v1075, %v1075
  %v1438 = vmul.f32 %v1080, %v1080
  %v1439 = vmul.f32 %v1083, %v1083
  %v1440 = vmul.f32 %v1088, %v1088
  %v1441 = vmul.f32 %v1091, %v1091
  %v1442 = vmul.f32 %v1096, %v1096
  %v1443 = vmul.f32 %v1099, %v1099
  %v1444 = vmul.f32 %v1104, %v1104
  %v1445 = vmul.f32 %v1107, %v1107
  %v1446 = vmul.f32 %v1112, %v1112
  %v1447 = vmul.f32 %v1115, %v1115
  %v1448 = vmul.f32 %v1120, %v1120
  %v1449 = vmul.f32 %v1123, %v1123
  %v1450 = vmul.f32 %v1128, %v1128
  %v1451 = vmul.f32 %v1131, %v1131
  %v1452 = vmul.f32 %v1136, %v1136
  %v1453 = vmul.f32 %v1139, %v1139
  %v1454 = vmul.f32 %v1144, %v1144
  %v1455 = vmul.f32 %v1147, %v1147
  %v1456 = vmul.f32 %v1152, %v1152
  %v1457 = vmul.f32 %v1155, %v1155
  %v1458 = vmul.f32 %v1160, %v1160
  %v1459 = vmul.f32 %v1163, %v1163
  %v1460 = vmul.f32 %v1168, %v1168
  %v1461 = vmul.f32 %v1171, %v1171
  %v1462 = vmul.f32 %v1176, %v1176
  %v1463 = vmul.f32 %v1179, %v1179
  %v1464 = vmul.f32 %v1184, %v1184
  %v1465 = vmul.f32 %v1187, %v1187
  %v1466 = vmul.f32 %v1192, %v1192
  %v1467 = vmul.f32 %v1195, %v1195
  %v1468 = vmul.f32 %v1200, %v1200
  %v1469 = vmul.f32 %v1203, %v1203
  %v1470 = vmul.f32 %v1208, %v1208
  %v1471 = vmul.f32 %v1211, %v1211
  %v1472 = vmul.f32 %v1216, %v1216
  %v1473 = vmul.f32 %v1219, %v1219
  %v1474 = vsel %vm1222, %v1424, 0.0
  %1475 = vadd.xlane.f32.xlu0 %v1474
  %v1476 = vpop.xlane.xlu0 %1475
  %v1477 = vsel %vm1222, %v1425, 0.0
  %1478 = vadd.xlane.f32.xlu0 %v1477
  %v1479 = vpop.xlane.xlu0 %1478
  %v1480 = vsel %vm1222, %v1426, 0.0
  %1481 = vadd.xlane.f32.xlu0 %v1480
  %v1482 = vpop.xlane.xlu0 %1481
  %v1483 = vsel %vm1222, %v1427, 0.0
  %1484 = vadd.xlane.f32.xlu0 %v1483
  %v1485 = vpop.xlane.xlu0 %1484
  %v1486 = vsel %vm1222, %v1428, 0.0
  %1487 = vadd.xlane.f32.xlu0 %v1486
  %v1488 = vpop.xlane.xlu0 %1487
  %v1489 = vsel %vm1222, %v1429, 0.0
  %1490 = vadd.xlane.f32.xlu0 %v1489
  %v1491 = vpop.xlane.xlu0 %1490
  %v1492 = vsel %vm1222, %v1430, 0.0
  %1493 = vadd.xlane.f32.xlu0 %v1492
  %v1494 = vpop.xlane.xlu0 %1493
  %v1495 = vsel %vm1222, %v1431, 0.0
  %1496 = vadd.xlane.f32.xlu0 %v1495
  %v1497 = vpop.xlane.xlu0 %1496
  %v1498 = vsel %vm1222, %v1432, 0.0
  %1499 = vadd.xlane.f32.xlu0 %v1498
  %v1500 = vpop.xlane.xlu0 %1499
  %v1501 = vsel %vm1222, %v1433, 0.0
  %1502 = vadd.xlane.f32.xlu0 %v1501
  %v1503 = vpop.xlane.xlu0 %1502
  %v1504 = vsel %vm1222, %v1434, 0.0
  %1505 = vadd.xlane.f32.xlu0 %v1504
  %v1506 = vpop.xlane.xlu0 %1505
  %v1507 = vsel %vm1222, %v1435, 0.0
  %1508 = vadd.xlane.f32.xlu0 %v1507
  %v1509 = vpop.xlane.xlu0 %1508
  %v1510 = vsel %vm1222, %v1436, 0.0
  %1511 = vadd.xlane.f32.xlu0 %v1510
  %v1512 = vpop.xlane.xlu0 %1511
  %v1513 = vsel %vm1222, %v1437, 0.0
  %1514 = vadd.xlane.f32.xlu0 %v1513
  %v1515 = vpop.xlane.xlu0 %1514
  %v1516 = vsel %vm1222, %v1438, 0.0
  %1517 = vadd.xlane.f32.xlu0 %v1516
  %v1518 = vpop.xlane.xlu0 %1517
  %v1519 = vsel %vm1222, %v1439, 0.0
  %1520 = vadd.xlane.f32.xlu0 %v1519
  %v1521 = vpop.xlane.xlu0 %1520
  %v1522 = vsel %vm1222, %v1440, 0.0
  %1523 = vadd.xlane.f32.xlu0 %v1522
  %v1524 = vpop.xlane.xlu0 %1523
  %v1525 = vsel %vm1222, %v1441, 0.0
  %1526 = vadd.xlane.f32.xlu0 %v1525
  %v1527 = vpop.xlane.xlu0 %1526
  %v1528 = vsel %vm1222, %v1442, 0.0
  %1529 = vadd.xlane.f32.xlu0 %v1528
  %v1530 = vpop.xlane.xlu0 %1529
  %v1531 = vsel %vm1222, %v1443, 0.0
  %1532 = vadd.xlane.f32.xlu0 %v1531
  %v1533 = vpop.xlane.xlu0 %1532
  %v1534 = vsel %vm1222, %v1444, 0.0
  %1535 = vadd.xlane.f32.xlu0 %v1534
  %v1536 = vpop.xlane.xlu0 %1535
  %v1537 = vsel %vm1222, %v1445, 0.0
  %1538 = vadd.xlane.f32.xlu0 %v1537
  %v1539 = vpop.xlane.xlu0 %1538
  %v1540 = vsel %vm1222, %v1446, 0.0
  %1541 = vadd.xlane.f32.xlu0 %v1540
  %v1542 = vpop.xlane.xlu0 %1541
  %v1543 = vsel %vm1222, %v1447, 0.0
  %1544 = vadd.xlane.f32.xlu0 %v1543
  %v1545 = vpop.xlane.xlu0 %1544
  %v1546 = vsel %vm1222, %v1448, 0.0
  %1547 = vadd.xlane.f32.xlu0 %v1546
  %v1548 = vpop.xlane.xlu0 %1547
  %v1549 = vsel %vm1222, %v1449, 0.0
  %1550 = vadd.xlane.f32.xlu0 %v1549
  %v1551 = vpop.xlane.xlu0 %1550
  %v1552 = vsel %vm1222, %v1450, 0.0
  %1553 = vadd.xlane.f32.xlu0 %v1552
  %v1554 = vpop.xlane.xlu0 %1553
  %v1555 = vsel %vm1222, %v1451, 0.0
  %1556 = vadd.xlane.f32.xlu0 %v1555
  %v1557 = vpop.xlane.xlu0 %1556
  %v1558 = vsel %vm1222, %v1452, 0.0
  %1559 = vadd.xlane.f32.xlu0 %v1558
  %v1560 = vpop.xlane.xlu0 %1559
  %v1561 = vsel %vm1222, %v1453, 0.0
  %1562 = vadd.xlane.f32.xlu0 %v1561
  %v1563 = vpop.xlane.xlu0 %1562
  %v1564 = vsel %vm1222, %v1454, 0.0
  %1565 = vadd.xlane.f32.xlu0 %v1564
  %v1566 = vpop.xlane.xlu0 %1565
  %v1567 = vsel %vm1222, %v1455, 0.0
  %1568 = vadd.xlane.f32.xlu0 %v1567
  %v1569 = vpop.xlane.xlu0 %1568
  %v1570 = vsel %vm1222, %v1456, 0.0
  %1571 = vadd.xlane.f32.xlu0 %v1570
  %v1572 = vpop.xlane.xlu0 %1571
  %v1573 = vsel %vm1222, %v1457, 0.0
  %1574 = vadd.xlane.f32.xlu0 %v1573
  %v1575 = vpop.xlane.xlu0 %1574
  %v1576 = vsel %vm1222, %v1458, 0.0
  %1577 = vadd.xlane.f32.xlu0 %v1576
  %v1578 = vpop.xlane.xlu0 %1577
  %v1579 = vsel %vm1222, %v1459, 0.0
  %1580 = vadd.xlane.f32.xlu0 %v1579
  %v1581 = vpop.xlane.xlu0 %1580
  %v1582 = vsel %vm1222, %v1460, 0.0
  %1583 = vadd.xlane.f32.xlu0 %v1582
  %v1584 = vpop.xlane.xlu0 %1583
  %v1585 = vsel %vm1222, %v1461, 0.0
  %1586 = vadd.xlane.f32.xlu0 %v1585
  %v1587 = vpop.xlane.xlu0 %1586
  %v1588 = vsel %vm1222, %v1462, 0.0
  %1589 = vadd.xlane.f32.xlu0 %v1588
  %v1590 = vpop.xlane.xlu0 %1589
  %v1591 = vsel %vm1222, %v1463, 0.0
  %1592 = vadd.xlane.f32.xlu0 %v1591
  %v1593 = vpop.xlane.xlu0 %1592
  %v1594 = vsel %vm1222, %v1464, 0.0
  %1595 = vadd.xlane.f32.xlu0 %v1594
  %v1596 = vpop.xlane.xlu0 %1595
  %v1597 = vsel %vm1222, %v1465, 0.0
  %1598 = vadd.xlane.f32.xlu0 %v1597
  %v1599 = vpop.xlane.xlu0 %1598
  %v1600 = vsel %vm1222, %v1466, 0.0
  %1601 = vadd.xlane.f32.xlu0 %v1600
  %v1602 = vpop.xlane.xlu0 %1601
  %v1603 = vsel %vm1222, %v1467, 0.0
  %1604 = vadd.xlane.f32.xlu0 %v1603
  %v1605 = vpop.xlane.xlu0 %1604
  %v1606 = vsel %vm1222, %v1468, 0.0
  %1607 = vadd.xlane.f32.xlu0 %v1606
  %v1608 = vpop.xlane.xlu0 %1607
  %v1609 = vsel %vm1222, %v1469, 0.0
  %1610 = vadd.xlane.f32.xlu0 %v1609
  %v1611 = vpop.xlane.xlu0 %1610
  %v1612 = vsel %vm1222, %v1470, 0.0
  %1613 = vadd.xlane.f32.xlu0 %v1612
  %v1614 = vpop.xlane.xlu0 %1613
  %v1615 = vsel %vm1222, %v1471, 0.0
  %1616 = vadd.xlane.f32.xlu0 %v1615
  %v1617 = vpop.xlane.xlu0 %1616
  %v1618 = vsel %vm1222, %v1472, 0.0
  %1619 = vadd.xlane.f32.xlu0 %v1618
  %v1620 = vpop.xlane.xlu0 %1619
  %v1621 = vsel %vm1222, %v1473, 0.0
  %1622 = vadd.xlane.f32.xlu0 %v1621
  %v1623 = vpop.xlane.xlu0 %1622
  %v1624 = vmul.f32 %v1476, %v1373
  %v1625 = vmul.f32 %v1479, %v1373
  %v1626 = vmul.f32 %v1482, %v1373
  %v1627 = vmul.f32 %v1485, %v1373
  %v1628 = vmul.f32 %v1488, %v1373
  %v1629 = vmul.f32 %v1491, %v1373
  %v1630 = vmul.f32 %v1494, %v1373
  %v1631 = vmul.f32 %v1497, %v1373
  %v1632 = vmul.f32 %v1500, %v1373
  %v1633 = vmul.f32 %v1503, %v1373
  %v1634 = vmul.f32 %v1506, %v1373
  %v1635 = vmul.f32 %v1509, %v1373
  %v1636 = vmul.f32 %v1512, %v1373
  %v1637 = vmul.f32 %v1515, %v1373
  %v1638 = vmul.f32 %v1518, %v1373
  %v1639 = vmul.f32 %v1521, %v1373
  %v1640 = vmul.f32 %v1524, %v1373
  %v1641 = vmul.f32 %v1527, %v1373
  %v1642 = vmul.f32 %v1530, %v1373
  %v1643 = vmul.f32 %v1533, %v1373
  %v1644 = vmul.f32 %v1536, %v1373
  %v1645 = vmul.f32 %v1539, %v1373
  %v1646 = vmul.f32 %v1542, %v1373
  %v1647 = vmul.f32 %v1545, %v1373
  %v1648 = vmul.f32 %v1548, %v1373
  %v1649 = vmul.f32 %v1551, %v1373
  %v1650 = vmul.f32 %v1554, %v1373
  %v1651 = vmul.f32 %v1557, %v1373
  %v1652 = vmul.f32 %v1560, %v1373
  %v1653 = vmul.f32 %v1563, %v1373
  %v1654 = vmul.f32 %v1566, %v1373
  %v1655 = vmul.f32 %v1569, %v1373
  %v1656 = vmul.f32 %v1572, %v1373
  %v1657 = vmul.f32 %v1575, %v1373
  %v1658 = vmul.f32 %v1578, %v1373
  %v1659 = vmul.f32 %v1581, %v1373
  %v1660 = vmul.f32 %v1584, %v1373
  %v1661 = vmul.f32 %v1587, %v1373
  %v1662 = vmul.f32 %v1590, %v1373
  %v1663 = vmul.f32 %v1593, %v1373
  %v1664 = vmul.f32 %v1596, %v1373
  %v1665 = vmul.f32 %v1599, %v1373
  %v1666 = vmul.f32 %v1602, %v1373
  %v1667 = vmul.f32 %v1605, %v1373
  %v1668 = vmul.f32 %v1608, %v1373
  %v1669 = vmul.f32 %v1611, %v1373
  %v1670 = vmul.f32 %v1614, %v1373
  %v1671 = vmul.f32 %v1617, %v1373
  %v1672 = vmul.f32 %v1620, %v1373
  %v1673 = vmul.f32 %v1623, %v1373
  %v1674 = vmul.f32 %v1374, %v1374
  %v1675 = vmul.f32 %v1375, %v1375
  %v1676 = vmul.f32 %v1376, %v1376
  %v1677 = vmul.f32 %v1377, %v1377
  %v1678 = vmul.f32 %v1378, %v1378
  %v1679 = vmul.f32 %v1379, %v1379
  %v1680 = vmul.f32 %v1380, %v1380
  %v1681 = vmul.f32 %v1381, %v1381
  %v1682 = vmul.f32 %v1382, %v1382
  %v1683 = vmul.f32 %v1383, %v1383
  %v1684 = vmul.f32 %v1384, %v1384
  %v1685 = vmul.f32 %v1385, %v1385
  %v1686 = vmul.f32 %v1386, %v1386
  %v1687 = vmul.f32 %v1387, %v1387
  %v1688 = vmul.f32 %v1388, %v1388
  %v1689 = vmul.f32 %v1389, %v1389
  %v1690 = vmul.f32 %v1390, %v1390
  %v1691 = vmul.f32 %v1391, %v1391
  %v1692 = vmul.f32 %v1392, %v1392
  %v1693 = vmul.f32 %v1393, %v1393
  %v1694 = vmul.f32 %v1394, %v1394
  %v1695 = vmul.f32 %v1395, %v1395
  %v1696 = vmul.f32 %v1396, %v1396
  %v1697 = vmul.f32 %v1397, %v1397
  %v1698 = vmul.f32 %v1398, %v1398
  %v1699 = vmul.f32 %v1399, %v1399
  %v1700 = vmul.f32 %v1400, %v1400
  %v1701 = vmul.f32 %v1401, %v1401
  %v1702 = vmul.f32 %v1402, %v1402
  %v1703 = vmul.f32 %v1403, %v1403
  %v1704 = vmul.f32 %v1404, %v1404
  %v1705 = vmul.f32 %v1405, %v1405
  %v1706 = vmul.f32 %v1406, %v1406
  %v1707 = vmul.f32 %v1407, %v1407
  %v1708 = vmul.f32 %v1408, %v1408
  %v1709 = vmul.f32 %v1409, %v1409
  %v1710 = vmul.f32 %v1410, %v1410
  %v1711 = vmul.f32 %v1411, %v1411
  %v1712 = vmul.f32 %v1412, %v1412
  %v1713 = vmul.f32 %v1413, %v1413
  %v1714 = vmul.f32 %v1414, %v1414
  %v1715 = vmul.f32 %v1415, %v1415
  %v1716 = vmul.f32 %v1416, %v1416
  %v1717 = vmul.f32 %v1417, %v1417
  %v1718 = vmul.f32 %v1418, %v1418
  %v1719 = vmul.f32 %v1419, %v1419
  %v1720 = vmul.f32 %v1420, %v1420
  %v1721 = vmul.f32 %v1421, %v1421
  %v1722 = vmul.f32 %v1422, %v1422
  %v1723 = vmul.f32 %v1423, %v1423
  %v1724 = vsub.f32 %v1624, %v1674
  %v1725 = vsub.f32 %v1625, %v1675
  %v1726 = vsub.f32 %v1626, %v1676
  %v1727 = vsub.f32 %v1627, %v1677
  %v1728 = vsub.f32 %v1628, %v1678
  %v1729 = vsub.f32 %v1629, %v1679
  %v1730 = vsub.f32 %v1630, %v1680
  %v1731 = vsub.f32 %v1631, %v1681
  %v1732 = vsub.f32 %v1632, %v1682
  %v1733 = vsub.f32 %v1633, %v1683
  %v1734 = vsub.f32 %v1634, %v1684
  %v1735 = vsub.f32 %v1635, %v1685
  %v1736 = vsub.f32 %v1636, %v1686
  %v1737 = vsub.f32 %v1637, %v1687
  %v1738 = vsub.f32 %v1638, %v1688
  %v1739 = vsub.f32 %v1639, %v1689
  %v1740 = vsub.f32 %v1640, %v1690
  %v1741 = vsub.f32 %v1641, %v1691
  %v1742 = vsub.f32 %v1642, %v1692
  %v1743 = vsub.f32 %v1643, %v1693
  %v1744 = vsub.f32 %v1644, %v1694
  %v1745 = vsub.f32 %v1645, %v1695
  %v1746 = vsub.f32 %v1646, %v1696
  %v1747 = vsub.f32 %v1647, %v1697
  %v1748 = vsub.f32 %v1648, %v1698
  %v1749 = vsub.f32 %v1649, %v1699
  %v1750 = vsub.f32 %v1650, %v1700
  %v1751 = vsub.f32 %v1651, %v1701
  %v1752 = vsub.f32 %v1652, %v1702
  %v1753 = vsub.f32 %v1653, %v1703
  %v1754 = vsub.f32 %v1654, %v1704
  %v1755 = vsub.f32 %v1655, %v1705
  %v1756 = vsub.f32 %v1656, %v1706
  %v1757 = vsub.f32 %v1657, %v1707
  %v1758 = vsub.f32 %v1658, %v1708
  %v1759 = vsub.f32 %v1659, %v1709
  %v1760 = vsub.f32 %v1660, %v1710
  %v1761 = vsub.f32 %v1661, %v1711
  %v1762 = vsub.f32 %v1662, %v1712
  %v1763 = vsub.f32 %v1663, %v1713
  %v1764 = vsub.f32 %v1664, %v1714
  %v1765 = vsub.f32 %v1665, %v1715
  %v1766 = vsub.f32 %v1666, %v1716
  %v1767 = vsub.f32 %v1667, %v1717
  %v1768 = vsub.f32 %v1668, %v1718
  %v1769 = vsub.f32 %v1669, %v1719
  %v1770 = vsub.f32 %v1670, %v1720
  %v1771 = vsub.f32 %v1671, %v1721
  %v1772 = vsub.f32 %v1672, %v1722
  %v1773 = vsub.f32 %v1673, %v1723
  %v1774 = vld [vmem:[%s3] sm:$0xff]
  %v1775 = vld [vmem:[%s3 + $0x8] sm:$0xff]
  %v1776 = vld [vmem:[%s3 + $0x10] sm:$0xff]
  %v1777 = vld [vmem:[%s3 + $0x18] sm:$0xff]
  %v1778 = vld [vmem:[%s3 + $0x20] sm:$0xff]
  %v1779 = vld [vmem:[%s3 + $0x28] sm:$0xff]
  %v1780 = vld [vmem:[%s3 + $0x30] sm:$0xff]
  %v1781 = vld [vmem:[%s3 + $0x38] sm:$0xff]
  %v1782 = vld [vmem:[%s3 + $0x40] sm:$0xff]
  %v1783 = vld [vmem:[%s3 + $0x48] sm:$0xff]
  %v1784 = vld [vmem:[%s3 + $0x50] sm:$0xff]
  %v1785 = vld [vmem:[%s3 + $0x58] sm:$0xff]
  %v1786 = vld [vmem:[%s3 + $0x60] sm:$0xff]
  %v1787 = vld [vmem:[%s3 + $0x68] sm:$0xff]
  %v1788 = vld [vmem:[%s3 + $0x70] sm:$0xff]
  %v1789 = vld [vmem:[%s3 + $0x78] sm:$0xff]
  %v1790 = vld [vmem:[%s3 + $0x80] sm:$0xff]
  %v1791 = vld [vmem:[%s3 + $0x88] sm:$0xff]
  %v1792 = vld [vmem:[%s3 + $0x90] sm:$0xff]
  %v1793 = vld [vmem:[%s3 + $0x98] sm:$0xff]
  %v1794 = vld [vmem:[%s3 + $0xa0] sm:$0xff]
  %v1795 = vld [vmem:[%s3 + $0xa8] sm:$0xff]
  %v1796 = vld [vmem:[%s3 + $0xb0] sm:$0xff]
  %v1797 = vld [vmem:[%s3 + $0xb8] sm:$0xff]
  %v1798 = vld [vmem:[%s3 + $0xc0] sm:$0xff]
  %v1799 = vld [vmem:[%s3 + $0xc8] sm:$0xff]
  %v1800 = vld [vmem:[%s3 + $0xd0] sm:$0xff]
  %v1801 = vld [vmem:[%s3 + $0xd8] sm:$0xff]
  %v1802 = vld [vmem:[%s3 + $0xe0] sm:$0xff]
  %v1803 = vld [vmem:[%s3 + $0xe8] sm:$0xff]
  %v1804 = vld [vmem:[%s3 + $0xf0] sm:$0xff]
  %v1805 = vld [vmem:[%s3 + $0xf8] sm:$0xff]
  %v1806 = vld [vmem:[%s3 + $0x100] sm:$0xff]
  %v1807 = vld [vmem:[%s3 + $0x108] sm:$0xff]
  %v1808 = vld [vmem:[%s3 + $0x110] sm:$0xff]
  %v1809 = vld [vmem:[%s3 + $0x118] sm:$0xff]
  %v1810 = vld [vmem:[%s3 + $0x120] sm:$0xff]
  %v1811 = vld [vmem:[%s3 + $0x128] sm:$0xff]
  %v1812 = vld [vmem:[%s3 + $0x130] sm:$0xff]
  %v1813 = vld [vmem:[%s3 + $0x138] sm:$0xff]
  %v1814 = vld [vmem:[%s3 + $0x140] sm:$0xff]
  %v1815 = vld [vmem:[%s3 + $0x148] sm:$0xff]
  %v1816 = vld [vmem:[%s3 + $0x150] sm:$0xff]
  %v1817 = vld [vmem:[%s3 + $0x158] sm:$0xff]
  %v1818 = vld [vmem:[%s3 + $0x160] sm:$0xff]
  %v1819 = vld [vmem:[%s3 + $0x168] sm:$0xff]
  %v1820 = vld [vmem:[%s3 + $0x170] sm:$0xff]
  %v1821 = vld [vmem:[%s3 + $0x178] sm:$0xff]
  %v1822 = vld [vmem:[%s3 + $0x180] sm:$0xff]
  %v1823 = vld [vmem:[%s3 + $0x188] sm:$0xff]
  %v1824 = vadd.f32 %v1724, 1e-05
  %v1825 = vadd.f32 %v1725, 1e-05
  %v1826 = vadd.f32 %v1726, 1e-05
  %v1827 = vadd.f32 %v1727, 1e-05
  %v1828 = vadd.f32 %v1728, 1e-05
  %v1829 = vadd.f32 %v1729, 1e-05
  %v1830 = vadd.f32 %v1730, 1e-05
  %v1831 = vadd.f32 %v1731, 1e-05
  %v1832 = vadd.f32 %v1732, 1e-05
  %v1833 = vadd.f32 %v1733, 1e-05
  %v1834 = vadd.f32 %v1734, 1e-05
  %v1835 = vadd.f32 %v1735, 1e-05
  %v1836 = vadd.f32 %v1736, 1e-05
  %v1837 = vadd.f32 %v1737, 1e-05
  %v1838 = vadd.f32 %v1738, 1e-05
  %v1839 = vadd.f32 %v1739, 1e-05
  %v1840 = vadd.f32 %v1740, 1e-05
  %v1841 = vadd.f32 %v1741, 1e-05
  %v1842 = vadd.f32 %v1742, 1e-05
  %v1843 = vadd.f32 %v1743, 1e-05
  %v1844 = vadd.f32 %v1744, 1e-05
  %v1845 = vadd.f32 %v1745, 1e-05
  %v1846 = vadd.f32 %v1746, 1e-05
  %v1847 = vadd.f32 %v1747, 1e-05
  %v1848 = vadd.f32 %v1748, 1e-05
  %v1849 = vadd.f32 %v1749, 1e-05
  %v1850 = vadd.f32 %v1750, 1e-05
  %v1851 = vadd.f32 %v1751, 1e-05
  %v1852 = vadd.f32 %v1752, 1e-05
  %v1853 = vadd.f32 %v1753, 1e-05
  %v1854 = vadd.f32 %v1754, 1e-05
  %v1855 = vadd.f32 %v1755, 1e-05
  %v1856 = vadd.f32 %v1756, 1e-05
  %v1857 = vadd.f32 %v1757, 1e-05
  %v1858 = vadd.f32 %v1758, 1e-05
  %v1859 = vadd.f32 %v1759, 1e-05
  %v1860 = vadd.f32 %v1760, 1e-05
  %v1861 = vadd.f32 %v1761, 1e-05
  %v1862 = vadd.f32 %v1762, 1e-05
  %v1863 = vadd.f32 %v1763, 1e-05
  %v1864 = vadd.f32 %v1764, 1e-05
  %v1865 = vadd.f32 %v1765, 1e-05
  %v1866 = vadd.f32 %v1766, 1e-05
  %v1867 = vadd.f32 %v1767, 1e-05
  %v1868 = vadd.f32 %v1768, 1e-05
  %v1869 = vadd.f32 %v1769, 1e-05
  %v1870 = vadd.f32 %v1770, 1e-05
  %v1871 = vadd.f32 %v1771, 1e-05
  %v1872 = vadd.f32 %v1772, 1e-05
  %v1873 = vadd.f32 %v1773, 1e-05
  %v1874 = vrsqrt.pop %v1824
  %v1875 = vrsqrt.pop %v1825
  %v1876 = vrsqrt.pop %v1826
  %v1877 = vrsqrt.pop %v1827
  %v1878 = vrsqrt.pop %v1828
  %v1879 = vrsqrt.pop %v1829
  %v1880 = vrsqrt.pop %v1830
  %v1881 = vrsqrt.pop %v1831
  %v1882 = vrsqrt.pop %v1832
  %v1883 = vrsqrt.pop %v1833
  %v1884 = vrsqrt.pop %v1834
  %v1885 = vrsqrt.pop %v1835
  %v1886 = vrsqrt.pop %v1836
  %v1887 = vrsqrt.pop %v1837
  %v1888 = vrsqrt.pop %v1838
  %v1889 = vrsqrt.pop %v1839
  %v1890 = vrsqrt.pop %v1840
  %v1891 = vrsqrt.pop %v1841
  %v1892 = vrsqrt.pop %v1842
  %v1893 = vrsqrt.pop %v1843
  %v1894 = vrsqrt.pop %v1844
  %v1895 = vrsqrt.pop %v1845
  %v1896 = vrsqrt.pop %v1846
  %v1897 = vrsqrt.pop %v1847
  %v1898 = vrsqrt.pop %v1848
  %v1899 = vrsqrt.pop %v1849
  %v1900 = vrsqrt.pop %v1850
  %v1901 = vrsqrt.pop %v1851
  %v1902 = vrsqrt.pop %v1852
  %v1903 = vrsqrt.pop %v1853
  %v1904 = vrsqrt.pop %v1854
  %v1905 = vrsqrt.pop %v1855
  %v1906 = vrsqrt.pop %v1856
  %v1907 = vrsqrt.pop %v1857
  %v1908 = vrsqrt.pop %v1858
  %v1909 = vrsqrt.pop %v1859
  %v1910 = vrsqrt.pop %v1860
  %v1911 = vrsqrt.pop %v1861
  %v1912 = vrsqrt.pop %v1862
  %v1913 = vrsqrt.pop %v1863
  %v1914 = vrsqrt.pop %v1864
  %v1915 = vrsqrt.pop %v1865
  %v1916 = vrsqrt.pop %v1866
  %v1917 = vrsqrt.pop %v1867
  %v1918 = vrsqrt.pop %v1868
  %v1919 = vrsqrt.pop %v1869
  %v1920 = vrsqrt.pop %v1870
  %v1921 = vrsqrt.pop %v1871
  %v1922 = vrsqrt.pop %v1872
  %v1923 = vrsqrt.pop %v1873
  %v1924 = vmul.f32 %v1774, %v1874
  %v1925 = vmul.f32 %v1775, %v1875
  %v1926 = vmul.f32 %v1776, %v1876
  %v1927 = vmul.f32 %v1777, %v1877
  %v1928 = vmul.f32 %v1778, %v1878
  %v1929 = vmul.f32 %v1779, %v1879
  %v1930 = vmul.f32 %v1780, %v1880
  %v1931 = vmul.f32 %v1781, %v1881
  %v1932 = vmul.f32 %v1782, %v1882
  %v1933 = vmul.f32 %v1783, %v1883
  %v1934 = vmul.f32 %v1784, %v1884
  %v1935 = vmul.f32 %v1785, %v1885
  %v1936 = vmul.f32 %v1786, %v1886
  %v1937 = vmul.f32 %v1787, %v1887
  %v1938 = vmul.f32 %v1788, %v1888
  %v1939 = vmul.f32 %v1789, %v1889
  %v1940 = vmul.f32 %v1790, %v1890
  %v1941 = vmul.f32 %v1791, %v1891
  %v1942 = vmul.f32 %v1792, %v1892
  %v1943 = vmul.f32 %v1793, %v1893
  %v1944 = vmul.f32 %v1794, %v1894
  %v1945 = vmul.f32 %v1795, %v1895
  %v1946 = vmul.f32 %v1796, %v1896
  %v1947 = vmul.f32 %v1797, %v1897
  %v1948 = vmul.f32 %v1798, %v1898
  %v1949 = vmul.f32 %v1799, %v1899
  %v1950 = vmul.f32 %v1800, %v1900
  %v1951 = vmul.f32 %v1801, %v1901
  %v1952 = vmul.f32 %v1802, %v1902
  %v1953 = vmul.f32 %v1803, %v1903
  %v1954 = vmul.f32 %v1804, %v1904
  %v1955 = vmul.f32 %v1805, %v1905
  %v1956 = vmul.f32 %v1806, %v1906
  %v1957 = vmul.f32 %v1807, %v1907
  %v1958 = vmul.f32 %v1808, %v1908
  %v1959 = vmul.f32 %v1809, %v1909
  %v1960 = vmul.f32 %v1810, %v1910
  %v1961 = vmul.f32 %v1811, %v1911
  %v1962 = vmul.f32 %v1812, %v1912
  %v1963 = vmul.f32 %v1813, %v1913
  %v1964 = vmul.f32 %v1814, %v1914
  %v1965 = vmul.f32 %v1815, %v1915
  %v1966 = vmul.f32 %v1816, %v1916
  %v1967 = vmul.f32 %v1817, %v1917
  %v1968 = vmul.f32 %v1818, %v1918
  %v1969 = vmul.f32 %v1819, %v1919
  %v1970 = vmul.f32 %v1820, %v1920
  %v1971 = vmul.f32 %v1821, %v1921
  %v1972 = vmul.f32 %v1822, %v1922
  %v1973 = vmul.f32 %v1823, %v1923
  %v1974 = vld [vmem:[%s4] sm:$0xff]
  %v1975 = vld [vmem:[%s4 + $0x8] sm:$0xff]
  %v1976 = vld [vmem:[%s4 + $0x10] sm:$0xff]
  %v1977 = vld [vmem:[%s4 + $0x18] sm:$0xff]
  %v1978 = vld [vmem:[%s4 + $0x20] sm:$0xff]
  %v1979 = vld [vmem:[%s4 + $0x28] sm:$0xff]
  %v1980 = vld [vmem:[%s4 + $0x30] sm:$0xff]
  %v1981 = vld [vmem:[%s4 + $0x38] sm:$0xff]
  %v1982 = vld [vmem:[%s4 + $0x40] sm:$0xff]
  %v1983 = vld [vmem:[%s4 + $0x48] sm:$0xff]
  %v1984 = vld [vmem:[%s4 + $0x50] sm:$0xff]
  %v1985 = vld [vmem:[%s4 + $0x58] sm:$0xff]
  %v1986 = vld [vmem:[%s4 + $0x60] sm:$0xff]
  %v1987 = vld [vmem:[%s4 + $0x68] sm:$0xff]
  %v1988 = vld [vmem:[%s4 + $0x70] sm:$0xff]
  %v1989 = vld [vmem:[%s4 + $0x78] sm:$0xff]
  %v1990 = vld [vmem:[%s4 + $0x80] sm:$0xff]
  %v1991 = vld [vmem:[%s4 + $0x88] sm:$0xff]
  %v1992 = vld [vmem:[%s4 + $0x90] sm:$0xff]
  %v1993 = vld [vmem:[%s4 + $0x98] sm:$0xff]
  %v1994 = vld [vmem:[%s4 + $0xa0] sm:$0xff]
  %v1995 = vld [vmem:[%s4 + $0xa8] sm:$0xff]
  %v1996 = vld [vmem:[%s4 + $0xb0] sm:$0xff]
  %v1997 = vld [vmem:[%s4 + $0xb8] sm:$0xff]
  %v1998 = vld [vmem:[%s4 + $0xc0] sm:$0xff]
  %v1999 = vld [vmem:[%s4 + $0xc8] sm:$0xff]
  %v2000 = vld [vmem:[%s4 + $0xd0] sm:$0xff]
  %v2001 = vld [vmem:[%s4 + $0xd8] sm:$0xff]
  %v2002 = vld [vmem:[%s4 + $0xe0] sm:$0xff]
  %v2003 = vld [vmem:[%s4 + $0xe8] sm:$0xff]
  %v2004 = vld [vmem:[%s4 + $0xf0] sm:$0xff]
  %v2005 = vld [vmem:[%s4 + $0xf8] sm:$0xff]
  %v2006 = vld [vmem:[%s4 + $0x100] sm:$0xff]
  %v2007 = vld [vmem:[%s4 + $0x108] sm:$0xff]
  %v2008 = vld [vmem:[%s4 + $0x110] sm:$0xff]
  %v2009 = vld [vmem:[%s4 + $0x118] sm:$0xff]
  %v2010 = vld [vmem:[%s4 + $0x120] sm:$0xff]
  %v2011 = vld [vmem:[%s4 + $0x128] sm:$0xff]
  %v2012 = vld [vmem:[%s4 + $0x130] sm:$0xff]
  %v2013 = vld [vmem:[%s4 + $0x138] sm:$0xff]
  %v2014 = vld [vmem:[%s4 + $0x140] sm:$0xff]
  %v2015 = vld [vmem:[%s4 + $0x148] sm:$0xff]
  %v2016 = vld [vmem:[%s4 + $0x150] sm:$0xff]
  %v2017 = vld [vmem:[%s4 + $0x158] sm:$0xff]
  %v2018 = vld [vmem:[%s4 + $0x160] sm:$0xff]
  %v2019 = vld [vmem:[%s4 + $0x168] sm:$0xff]
  %v2020 = vld [vmem:[%s4 + $0x170] sm:$0xff]
  %v2021 = vld [vmem:[%s4 + $0x178] sm:$0xff]
  %v2022 = vld [vmem:[%s4 + $0x180] sm:$0xff]
  %v2023 = vld [vmem:[%s4 + $0x188] sm:$0xff]
  %v2024 = vmul.f32 %v1374, %v1924
  %v2025 = vmul.f32 %v1375, %v1925
  %v2026 = vmul.f32 %v1376, %v1926
  %v2027 = vmul.f32 %v1377, %v1927
  %v2028 = vmul.f32 %v1378, %v1928
  %v2029 = vmul.f32 %v1379, %v1929
  %v2030 = vmul.f32 %v1380, %v1930
  %v2031 = vmul.f32 %v1381, %v1931
  %v2032 = vmul.f32 %v1382, %v1932
  %v2033 = vmul.f32 %v1383, %v1933
  %v2034 = vmul.f32 %v1384, %v1934
  %v2035 = vmul.f32 %v1385, %v1935
  %v2036 = vmul.f32 %v1386, %v1936
  %v2037 = vmul.f32 %v1387, %v1937
  %v2038 = vmul.f32 %v1388, %v1938
  %v2039 = vmul.f32 %v1389, %v1939
  %v2040 = vmul.f32 %v1390, %v1940
  %v2041 = vmul.f32 %v1391, %v1941
  %v2042 = vmul.f32 %v1392, %v1942
  %v2043 = vmul.f32 %v1393, %v1943
  %v2044 = vmul.f32 %v1394, %v1944
  %v2045 = vmul.f32 %v1395, %v1945
  %v2046 = vmul.f32 %v1396, %v1946
  %v2047 = vmul.f32 %v1397, %v1947
  %v2048 = vmul.f32 %v1398, %v1948
  %v2049 = vmul.f32 %v1399, %v1949
  %v2050 = vmul.f32 %v1400, %v1950
  %v2051 = vmul.f32 %v1401, %v1951
  %v2052 = vmul.f32 %v1402, %v1952
  %v2053 = vmul.f32 %v1403, %v1953
  %v2054 = vmul.f32 %v1404, %v1954
  %v2055 = vmul.f32 %v1405, %v1955
  %v2056 = vmul.f32 %v1406, %v1956
  %v2057 = vmul.f32 %v1407, %v1957
  %v2058 = vmul.f32 %v1408, %v1958
  %v2059 = vmul.f32 %v1409, %v1959
  %v2060 = vmul.f32 %v1410, %v1960
  %v2061 = vmul.f32 %v1411, %v1961
  %v2062 = vmul.f32 %v1412, %v1962
  %v2063 = vmul.f32 %v1413, %v1963
  %v2064 = vmul.f32 %v1414, %v1964
  %v2065 = vmul.f32 %v1415, %v1965
  %v2066 = vmul.f32 %v1416, %v1966
  %v2067 = vmul.f32 %v1417, %v1967
  %v2068 = vmul.f32 %v1418, %v1968
  %v2069 = vmul.f32 %v1419, %v1969
  %v2070 = vmul.f32 %v1420, %v1970
  %v2071 = vmul.f32 %v1421, %v1971
  %v2072 = vmul.f32 %v1422, %v1972
  %v2073 = vmul.f32 %v1423, %v1973
  %v2074 = vsub.f32 %v1974, %v2024
  %v2075 = vsub.f32 %v1975, %v2025
  %v2076 = vsub.f32 %v1976, %v2026
  %v2077 = vsub.f32 %v1977, %v2027
  %v2078 = vsub.f32 %v1978, %v2028
  %v2079 = vsub.f32 %v1979, %v2029
  %v2080 = vsub.f32 %v1980, %v2030
  %v2081 = vsub.f32 %v1981, %v2031
  %v2082 = vsub.f32 %v1982, %v2032
  %v2083 = vsub.f32 %v1983, %v2033
  %v2084 = vsub.f32 %v1984, %v2034
  %v2085 = vsub.f32 %v1985, %v2035
  %v2086 = vsub.f32 %v1986, %v2036
  %v2087 = vsub.f32 %v1987, %v2037
  %v2088 = vsub.f32 %v1988, %v2038
  %v2089 = vsub.f32 %v1989, %v2039
  %v2090 = vsub.f32 %v1990, %v2040
  %v2091 = vsub.f32 %v1991, %v2041
  %v2092 = vsub.f32 %v1992, %v2042
  %v2093 = vsub.f32 %v1993, %v2043
  %v2094 = vsub.f32 %v1994, %v2044
  %v2095 = vsub.f32 %v1995, %v2045
  %v2096 = vsub.f32 %v1996, %v2046
  %v2097 = vsub.f32 %v1997, %v2047
  %v2098 = vsub.f32 %v1998, %v2048
  %v2099 = vsub.f32 %v1999, %v2049
  %v2100 = vsub.f32 %v2000, %v2050
  %v2101 = vsub.f32 %v2001, %v2051
  %v2102 = vsub.f32 %v2002, %v2052
  %v2103 = vsub.f32 %v2003, %v2053
  %v2104 = vsub.f32 %v2004, %v2054
  %v2105 = vsub.f32 %v2005, %v2055
  %v2106 = vsub.f32 %v2006, %v2056
  %v2107 = vsub.f32 %v2007, %v2057
  %v2108 = vsub.f32 %v2008, %v2058
  %v2109 = vsub.f32 %v2009, %v2059
  %v2110 = vsub.f32 %v2010, %v2060
  %v2111 = vsub.f32 %v2011, %v2061
  %v2112 = vsub.f32 %v2012, %v2062
  %v2113 = vsub.f32 %v2013, %v2063
  %v2114 = vsub.f32 %v2014, %v2064
  %v2115 = vsub.f32 %v2015, %v2065
  %v2116 = vsub.f32 %v2016, %v2066
  %v2117 = vsub.f32 %v2017, %v2067
  %v2118 = vsub.f32 %v2018, %v2068
  %v2119 = vsub.f32 %v2019, %v2069
  %v2120 = vsub.f32 %v2020, %v2070
  %v2121 = vsub.f32 %v2021, %v2071
  %v2122 = vsub.f32 %v2022, %v2072
  %v2123 = vsub.f32 %v2023, %v2073
  %2125 = vset.pattern.permute.xlu0 0
  %2126 = vperm.xlu0 %2125, %v1924
  %v2127 = vpop.permute.xlu0 %2126
  %2130 = vset.pattern.permute.xlu0 0
  %2131 = vperm.xlu0 %2130, %v1925
  %v2132 = vpop.permute.xlu0 %2131
  %2135 = vset.pattern.permute.xlu0 0
  %2136 = vperm.xlu0 %2135, %v1926
  %v2137 = vpop.permute.xlu0 %2136
  %2140 = vset.pattern.permute.xlu0 0
  %2141 = vperm.xlu0 %2140, %v1927
  %v2142 = vpop.permute.xlu0 %2141
  %2145 = vset.pattern.permute.xlu0 0
  %2146 = vperm.xlu0 %2145, %v1928
  %v2147 = vpop.permute.xlu0 %2146
  %2150 = vset.pattern.permute.xlu0 0
  %2151 = vperm.xlu0 %2150, %v1929
  %v2152 = vpop.permute.xlu0 %2151
  %2155 = vset.pattern.permute.xlu0 0
  %2156 = vperm.xlu0 %2155, %v1930
  %v2157 = vpop.permute.xlu0 %2156
  %2160 = vset.pattern.permute.xlu0 0
  %2161 = vperm.xlu0 %2160, %v1931
  %v2162 = vpop.permute.xlu0 %2161
  %2165 = vset.pattern.permute.xlu0 0
  %2166 = vperm.xlu0 %2165, %v1932
  %v2167 = vpop.permute.xlu0 %2166
  %2170 = vset.pattern.permute.xlu0 0
  %2171 = vperm.xlu0 %2170, %v1933
  %v2172 = vpop.permute.xlu0 %2171
  %2175 = vset.pattern.permute.xlu0 0
  %2176 = vperm.xlu0 %2175, %v1934
  %v2177 = vpop.permute.xlu0 %2176
  %2180 = vset.pattern.permute.xlu0 0
  %2181 = vperm.xlu0 %2180, %v1935
  %v2182 = vpop.permute.xlu0 %2181
  %2185 = vset.pattern.permute.xlu0 0
  %2186 = vperm.xlu0 %2185, %v1936
  %v2187 = vpop.permute.xlu0 %2186
  %2190 = vset.pattern.permute.xlu0 0
  %2191 = vperm.xlu0 %2190, %v1937
  %v2192 = vpop.permute.xlu0 %2191
  %2195 = vset.pattern.permute.xlu0 0
  %2196 = vperm.xlu0 %2195, %v1938
  %v2197 = vpop.permute.xlu0 %2196
  %2200 = vset.pattern.permute.xlu0 0
  %2201 = vperm.xlu0 %2200, %v1939
  %v2202 = vpop.permute.xlu0 %2201
  %2205 = vset.pattern.permute.xlu0 0
  %2206 = vperm.xlu0 %2205, %v1940
  %v2207 = vpop.permute.xlu0 %2206
  %2210 = vset.pattern.permute.xlu0 0
  %2211 = vperm.xlu0 %2210, %v1941
  %v2212 = vpop.permute.xlu0 %2211
  %2215 = vset.pattern.permute.xlu0 0
  %2216 = vperm.xlu0 %2215, %v1942
  %v2217 = vpop.permute.xlu0 %2216
  %2220 = vset.pattern.permute.xlu0 0
  %2221 = vperm.xlu0 %2220, %v1943
  %v2222 = vpop.permute.xlu0 %2221
  %2225 = vset.pattern.permute.xlu0 0
  %2226 = vperm.xlu0 %2225, %v1944
  %v2227 = vpop.permute.xlu0 %2226
  %2230 = vset.pattern.permute.xlu0 0
  %2231 = vperm.xlu0 %2230, %v1945
  %v2232 = vpop.permute.xlu0 %2231
  %2235 = vset.pattern.permute.xlu0 0
  %2236 = vperm.xlu0 %2235, %v1946
  %v2237 = vpop.permute.xlu0 %2236
  %2240 = vset.pattern.permute.xlu0 0
  %2241 = vperm.xlu0 %2240, %v1947
  %v2242 = vpop.permute.xlu0 %2241
  %2245 = vset.pattern.permute.xlu0 0
  %2246 = vperm.xlu0 %2245, %v1948
  %v2247 = vpop.permute.xlu0 %2246
  %2250 = vset.pattern.permute.xlu0 0
  %2251 = vperm.xlu0 %2250, %v1949
  %v2252 = vpop.permute.xlu0 %2251
  %2255 = vset.pattern.permute.xlu0 0
  %2256 = vperm.xlu0 %2255, %v1950
  %v2257 = vpop.permute.xlu0 %2256
  %2260 = vset.pattern.permute.xlu0 0
  %2261 = vperm.xlu0 %2260, %v1951
  %v2262 = vpop.permute.xlu0 %2261
  %2265 = vset.pattern.permute.xlu0 0
  %2266 = vperm.xlu0 %2265, %v1952
  %v2267 = vpop.permute.xlu0 %2266
  %2270 = vset.pattern.permute.xlu0 0
  %2271 = vperm.xlu0 %2270, %v1953
  %v2272 = vpop.permute.xlu0 %2271
  %2275 = vset.pattern.permute.xlu0 0
  %2276 = vperm.xlu0 %2275, %v1954
  %v2277 = vpop.permute.xlu0 %2276
  %2280 = vset.pattern.permute.xlu0 0
  %2281 = vperm.xlu0 %2280, %v1955
  %v2282 = vpop.permute.xlu0 %2281
  %2285 = vset.pattern.permute.xlu0 0
  %2286 = vperm.xlu0 %2285, %v1956
  %v2287 = vpop.permute.xlu0 %2286
  %2290 = vset.pattern.permute.xlu0 0
  %2291 = vperm.xlu0 %2290, %v1957
  %v2292 = vpop.permute.xlu0 %2291
  %2295 = vset.pattern.permute.xlu0 0
  %2296 = vperm.xlu0 %2295, %v1958
  %v2297 = vpop.permute.xlu0 %2296
  %2300 = vset.pattern.permute.xlu0 0
  %2301 = vperm.xlu0 %2300, %v1959
  %v2302 = vpop.permute.xlu0 %2301
  %2305 = vset.pattern.permute.xlu0 0
  %2306 = vperm.xlu0 %2305, %v1960
  %v2307 = vpop.permute.xlu0 %2306
  %2310 = vset.pattern.permute.xlu0 0
  %2311 = vperm.xlu0 %2310, %v1961
  %v2312 = vpop.permute.xlu0 %2311
  %2315 = vset.pattern.permute.xlu0 0
  %2316 = vperm.xlu0 %2315, %v1962
  %v2317 = vpop.permute.xlu0 %2316
  %2320 = vset.pattern.permute.xlu0 0
  %2321 = vperm.xlu0 %2320, %v1963
  %v2322 = vpop.permute.xlu0 %2321
  %2325 = vset.pattern.permute.xlu0 0
  %2326 = vperm.xlu0 %2325, %v1964
  %v2327 = vpop.permute.xlu0 %2326
  %2330 = vset.pattern.permute.xlu0 0
  %2331 = vperm.xlu0 %2330, %v1965
  %v2332 = vpop.permute.xlu0 %2331
  %2335 = vset.pattern.permute.xlu0 0
  %2336 = vperm.xlu0 %2335, %v1966
  %v2337 = vpop.permute.xlu0 %2336
  %2340 = vset.pattern.permute.xlu0 0
  %2341 = vperm.xlu0 %2340, %v1967
  %v2342 = vpop.permute.xlu0 %2341
  %2345 = vset.pattern.permute.xlu0 0
  %2346 = vperm.xlu0 %2345, %v1968
  %v2347 = vpop.permute.xlu0 %2346
  %2350 = vset.pattern.permute.xlu0 0
  %2351 = vperm.xlu0 %2350, %v1969
  %v2352 = vpop.permute.xlu0 %2351
  %2355 = vset.pattern.permute.xlu0 0
  %2356 = vperm.xlu0 %2355, %v1970
  %v2357 = vpop.permute.xlu0 %2356
  %2360 = vset.pattern.permute.xlu0 0
  %2361 = vperm.xlu0 %2360, %v1971
  %v2362 = vpop.permute.xlu0 %2361
  %2365 = vset.pattern.permute.xlu0 0
  %2366 = vperm.xlu0 %2365, %v1972
  %v2367 = vpop.permute.xlu0 %2366
  %2370 = vset.pattern.permute.xlu0 0
  %2371 = vperm.xlu0 %2370, %v1973
  %v2372 = vpop.permute.xlu0 %2371
  %v2374 = vmul.f32 %v1024, %v2127
  %v2375 = vmul.f32 %v1027, %v2132
  %v2376 = vmul.f32 %v1032, %v2137
  %v2377 = vmul.f32 %v1035, %v2142
  %v2378 = vmul.f32 %v1040, %v2147
  %v2379 = vmul.f32 %v1043, %v2152
  %v2380 = vmul.f32 %v1048, %v2157
  %v2381 = vmul.f32 %v1051, %v2162
  %v2382 = vmul.f32 %v1056, %v2167
  %v2383 = vmul.f32 %v1059, %v2172
  %v2384 = vmul.f32 %v1064, %v2177
  %v2385 = vmul.f32 %v1067, %v2182
  %v2386 = vmul.f32 %v1072, %v2187
  %v2387 = vmul.f32 %v1075, %v2192
  %v2388 = vmul.f32 %v1080, %v2197
  %v2389 = vmul.f32 %v1083, %v2202
  %v2390 = vmul.f32 %v1088, %v2207
  %v2391 = vmul.f32 %v1091, %v2212
  %v2392 = vmul.f32 %v1096, %v2217
  %v2393 = vmul.f32 %v1099, %v2222
  %v2394 = vmul.f32 %v1104, %v2227
  %v2395 = vmul.f32 %v1107, %v2232
  %v2396 = vmul.f32 %v1112, %v2237
  %v2397 = vmul.f32 %v1115, %v2242
  %v2398 = vmul.f32 %v1120, %v2247
  %v2399 = vmul.f32 %v1123, %v2252
  %v2400 = vmul.f32 %v1128, %v2257
  %v2401 = vmul.f32 %v1131, %v2262
  %v2402 = vmul.f32 %v1136, %v2267
  %v2403 = vmul.f32 %v1139, %v2272
  %v2404 = vmul.f32 %v1144, %v2277
  %v2405 = vmul.f32 %v1147, %v2282
  %v2406 = vmul.f32 %v1152, %v2287
  %v2407 = vmul.f32 %v1155, %v2292
  %v2408 = vmul.f32 %v1160, %v2297
  %v2409 = vmul.f32 %v1163, %v2302
  %v2410 = vmul.f32 %v1168, %v2307
  %v2411 = vmul.f32 %v1171, %v2312
  %v2412 = vmul.f32 %v1176, %v2317
  %v2413 = vmul.f32 %v1179, %v2322
  %v2414 = vmul.f32 %v1184, %v2327
  %v2415 = vmul.f32 %v1187, %v2332
  %v2416 = vmul.f32 %v1192, %v2337
  %v2417 = vmul.f32 %v1195, %v2342
  %v2418 = vmul.f32 %v1200, %v2347
  %v2419 = vmul.f32 %v1203, %v2352
  %v2420 = vmul.f32 %v1208, %v2357
  %v2421 = vmul.f32 %v1211, %v2362
  %v2422 = vmul.f32 %v1216, %v2367
  %v2423 = vmul.f32 %v1219, %v2372
  %2425 = vset.pattern.permute.xlu0 0
  %2426 = vperm.xlu0 %2425, %v2074
  %v2427 = vpop.permute.xlu0 %2426
  %2430 = vset.pattern.permute.xlu0 0
  %2431 = vperm.xlu0 %2430, %v2075
  %v2432 = vpop.permute.xlu0 %2431
  %2435 = vset.pattern.permute.xlu0 0
  %2436 = vperm.xlu0 %2435, %v2076
  %v2437 = vpop.permute.xlu0 %2436
  %2440 = vset.pattern.permute.xlu0 0
  %2441 = vperm.xlu0 %2440, %v2077
  %v2442 = vpop.permute.xlu0 %2441
  %2445 = vset.pattern.permute.xlu0 0
  %2446 = vperm.xlu0 %2445, %v2078
  %v2447 = vpop.permute.xlu0 %2446
  %2450 = vset.pattern.permute.xlu0 0
  %2451 = vperm.xlu0 %2450, %v2079
  %v2452 = vpop.permute.xlu0 %2451
  %2455 = vset.pattern.permute.xlu0 0
  %2456 = vperm.xlu0 %2455, %v2080
  %v2457 = vpop.permute.xlu0 %2456
  %2460 = vset.pattern.permute.xlu0 0
  %2461 = vperm.xlu0 %2460, %v2081
  %v2462 = vpop.permute.xlu0 %2461
  %2465 = vset.pattern.permute.xlu0 0
  %2466 = vperm.xlu0 %2465, %v2082
  %v2467 = vpop.permute.xlu0 %2466
  %2470 = vset.pattern.permute.xlu0 0
  %2471 = vperm.xlu0 %2470, %v2083
  %v2472 = vpop.permute.xlu0 %2471
  %2475 = vset.pattern.permute.xlu0 0
  %2476 = vperm.xlu0 %2475, %v2084
  %v2477 = vpop.permute.xlu0 %2476
  %2480 = vset.pattern.permute.xlu0 0
  %2481 = vperm.xlu0 %2480, %v2085
  %v2482 = vpop.permute.xlu0 %2481
  %2485 = vset.pattern.permute.xlu0 0
  %2486 = vperm.xlu0 %2485, %v2086
  %v2487 = vpop.permute.xlu0 %2486
  %2490 = vset.pattern.permute.xlu0 0
  %2491 = vperm.xlu0 %2490, %v2087
  %v2492 = vpop.permute.xlu0 %2491
  %2495 = vset.pattern.permute.xlu0 0
  %2496 = vperm.xlu0 %2495, %v2088
  %v2497 = vpop.permute.xlu0 %2496
  %2500 = vset.pattern.permute.xlu0 0
  %2501 = vperm.xlu0 %2500, %v2089
  %v2502 = vpop.permute.xlu0 %2501
  %2505 = vset.pattern.permute.xlu0 0
  %2506 = vperm.xlu0 %2505, %v2090
  %v2507 = vpop.permute.xlu0 %2506
  %2510 = vset.pattern.permute.xlu0 0
  %2511 = vperm.xlu0 %2510, %v2091
  %v2512 = vpop.permute.xlu0 %2511
  %2515 = vset.pattern.permute.xlu0 0
  %2516 = vperm.xlu0 %2515, %v2092
  %v2517 = vpop.permute.xlu0 %2516
  %2520 = vset.pattern.permute.xlu0 0
  %2521 = vperm.xlu0 %2520, %v2093
  %v2522 = vpop.permute.xlu0 %2521
  %2525 = vset.pattern.permute.xlu0 0
  %2526 = vperm.xlu0 %2525, %v2094
  %v2527 = vpop.permute.xlu0 %2526
  %2530 = vset.pattern.permute.xlu0 0
  %2531 = vperm.xlu0 %2530, %v2095
  %v2532 = vpop.permute.xlu0 %2531
  %2535 = vset.pattern.permute.xlu0 0
  %2536 = vperm.xlu0 %2535, %v2096
  %v2537 = vpop.permute.xlu0 %2536
  %2540 = vset.pattern.permute.xlu0 0
  %2541 = vperm.xlu0 %2540, %v2097
  %v2542 = vpop.permute.xlu0 %2541
  %2545 = vset.pattern.permute.xlu0 0
  %2546 = vperm.xlu0 %2545, %v2098
  %v2547 = vpop.permute.xlu0 %2546
  %2550 = vset.pattern.permute.xlu0 0
  %2551 = vperm.xlu0 %2550, %v2099
  %v2552 = vpop.permute.xlu0 %2551
  %2555 = vset.pattern.permute.xlu0 0
  %2556 = vperm.xlu0 %2555, %v2100
  %v2557 = vpop.permute.xlu0 %2556
  %2560 = vset.pattern.permute.xlu0 0
  %2561 = vperm.xlu0 %2560, %v2101
  %v2562 = vpop.permute.xlu0 %2561
  %2565 = vset.pattern.permute.xlu0 0
  %2566 = vperm.xlu0 %2565, %v2102
  %v2567 = vpop.permute.xlu0 %2566
  %2570 = vset.pattern.permute.xlu0 0
  %2571 = vperm.xlu0 %2570, %v2103
  %v2572 = vpop.permute.xlu0 %2571
  %2575 = vset.pattern.permute.xlu0 0
  %2576 = vperm.xlu0 %2575, %v2104
  %v2577 = vpop.permute.xlu0 %2576
  %2580 = vset.pattern.permute.xlu0 0
  %2581 = vperm.xlu0 %2580, %v2105
  %v2582 = vpop.permute.xlu0 %2581
  %2585 = vset.pattern.permute.xlu0 0
  %2586 = vperm.xlu0 %2585, %v2106
  %v2587 = vpop.permute.xlu0 %2586
  %2590 = vset.pattern.permute.xlu0 0
  %2591 = vperm.xlu0 %2590, %v2107
  %v2592 = vpop.permute.xlu0 %2591
  %2595 = vset.pattern.permute.xlu0 0
  %2596 = vperm.xlu0 %2595, %v2108
  %v2597 = vpop.permute.xlu0 %2596
  %2600 = vset.pattern.permute.xlu0 0
  %2601 = vperm.xlu0 %2600, %v2109
  %v2602 = vpop.permute.xlu0 %2601
  %2605 = vset.pattern.permute.xlu0 0
  %2606 = vperm.xlu0 %2605, %v2110
  %v2607 = vpop.permute.xlu0 %2606
  %2610 = vset.pattern.permute.xlu0 0
  %2611 = vperm.xlu0 %2610, %v2111
  %v2612 = vpop.permute.xlu0 %2611
  %2615 = vset.pattern.permute.xlu0 0
  %2616 = vperm.xlu0 %2615, %v2112
  %v2617 = vpop.permute.xlu0 %2616
  %2620 = vset.pattern.permute.xlu0 0
  %2621 = vperm.xlu0 %2620, %v2113
  %v2622 = vpop.permute.xlu0 %2621
  %2625 = vset.pattern.permute.xlu0 0
  %2626 = vperm.xlu0 %2625, %v2114
  %v2627 = vpop.permute.xlu0 %2626
  %2630 = vset.pattern.permute.xlu0 0
  %2631 = vperm.xlu0 %2630, %v2115
  %v2632 = vpop.permute.xlu0 %2631
  %2635 = vset.pattern.permute.xlu0 0
  %2636 = vperm.xlu0 %2635, %v2116
  %v2637 = vpop.permute.xlu0 %2636
  %2640 = vset.pattern.permute.xlu0 0
  %2641 = vperm.xlu0 %2640, %v2117
  %v2642 = vpop.permute.xlu0 %2641
  %2645 = vset.pattern.permute.xlu0 0
  %2646 = vperm.xlu0 %2645, %v2118
  %v2647 = vpop.permute.xlu0 %2646
  %2650 = vset.pattern.permute.xlu0 0
  %2651 = vperm.xlu0 %2650, %v2119
  %v2652 = vpop.permute.xlu0 %2651
  %2655 = vset.pattern.permute.xlu0 0
  %2656 = vperm.xlu0 %2655, %v2120
  %v2657 = vpop.permute.xlu0 %2656
  %2660 = vset.pattern.permute.xlu0 0
  %2661 = vperm.xlu0 %2660, %v2121
  %v2662 = vpop.permute.xlu0 %2661
  %2665 = vset.pattern.permute.xlu0 0
  %2666 = vperm.xlu0 %2665, %v2122
  %v2667 = vpop.permute.xlu0 %2666
  %2670 = vset.pattern.permute.xlu0 0
  %2671 = vperm.xlu0 %2670, %v2123
  %v2672 = vpop.permute.xlu0 %2671
  %v2674 = vadd.f32 %v2374, %v2427
  %v2675 = vadd.f32 %v2375, %v2432
  %v2676 = vadd.f32 %v2376, %v2437
  %v2677 = vadd.f32 %v2377, %v2442
  %v2678 = vadd.f32 %v2378, %v2447
  %v2679 = vadd.f32 %v2379, %v2452
  %v2680 = vadd.f32 %v2380, %v2457
  %v2681 = vadd.f32 %v2381, %v2462
  %v2682 = vadd.f32 %v2382, %v2467
  %v2683 = vadd.f32 %v2383, %v2472
  %v2684 = vadd.f32 %v2384, %v2477
  %v2685 = vadd.f32 %v2385, %v2482
  %v2686 = vadd.f32 %v2386, %v2487
  %v2687 = vadd.f32 %v2387, %v2492
  %v2688 = vadd.f32 %v2388, %v2497
  %v2689 = vadd.f32 %v2389, %v2502
  %v2690 = vadd.f32 %v2390, %v2507
  %v2691 = vadd.f32 %v2391, %v2512
  %v2692 = vadd.f32 %v2392, %v2517
  %v2693 = vadd.f32 %v2393, %v2522
  %v2694 = vadd.f32 %v2394, %v2527
  %v2695 = vadd.f32 %v2395, %v2532
  %v2696 = vadd.f32 %v2396, %v2537
  %v2697 = vadd.f32 %v2397, %v2542
  %v2698 = vadd.f32 %v2398, %v2547
  %v2699 = vadd.f32 %v2399, %v2552
  %v2700 = vadd.f32 %v2400, %v2557
  %v2701 = vadd.f32 %v2401, %v2562
  %v2702 = vadd.f32 %v2402, %v2567
  %v2703 = vadd.f32 %v2403, %v2572
  %v2704 = vadd.f32 %v2404, %v2577
  %v2705 = vadd.f32 %v2405, %v2582
  %v2706 = vadd.f32 %v2406, %v2587
  %v2707 = vadd.f32 %v2407, %v2592
  %v2708 = vadd.f32 %v2408, %v2597
  %v2709 = vadd.f32 %v2409, %v2602
  %v2710 = vadd.f32 %v2410, %v2607
  %v2711 = vadd.f32 %v2411, %v2612
  %v2712 = vadd.f32 %v2412, %v2617
  %v2713 = vadd.f32 %v2413, %v2622
  %v2714 = vadd.f32 %v2414, %v2627
  %v2715 = vadd.f32 %v2415, %v2632
  %v2716 = vadd.f32 %v2416, %v2637
  %v2717 = vadd.f32 %v2417, %v2642
  %v2718 = vadd.f32 %v2418, %v2647
  %v2719 = vadd.f32 %v2419, %v2652
  %v2720 = vadd.f32 %v2420, %v2657
  %v2721 = vadd.f32 %v2421, %v2662
  %v2722 = vadd.f32 %v2422, %v2667
  %v2723 = vadd.f32 %v2423, %v2672
  %v2724 = vld [vmem:[%s1] sm:$0xff]
  %v2725 = vld [vmem:[%s1 + $0x8] sm:$0xff]
  %v2726 = vld [vmem:[%s1 + $0x10] sm:$0xff]
  %v2727 = vld [vmem:[%s1 + $0x18] sm:$0xff]
  %v2728 = vld [vmem:[%s1 + $0x20] sm:$0xff]
  %v2729 = vld [vmem:[%s1 + $0x28] sm:$0xff]
  %v2730 = vld [vmem:[%s1 + $0x30] sm:$0xff]
  %v2731 = vld [vmem:[%s1 + $0x38] sm:$0xff]
  %v2732 = vld [vmem:[%s1 + $0x40] sm:$0xff]
  %v2733 = vld [vmem:[%s1 + $0x48] sm:$0xff]
  %v2734 = vld [vmem:[%s1 + $0x50] sm:$0xff]
  %v2735 = vld [vmem:[%s1 + $0x58] sm:$0xff]
  %v2736 = vld [vmem:[%s1 + $0x60] sm:$0xff]
  %v2737 = vld [vmem:[%s1 + $0x68] sm:$0xff]
  %v2738 = vld [vmem:[%s1 + $0x70] sm:$0xff]
  %v2739 = vld [vmem:[%s1 + $0x78] sm:$0xff]
  %v2740 = vld [vmem:[%s1 + $0x80] sm:$0xff]
  %v2741 = vld [vmem:[%s1 + $0x88] sm:$0xff]
  %v2742 = vld [vmem:[%s1 + $0x90] sm:$0xff]
  %v2743 = vld [vmem:[%s1 + $0x98] sm:$0xff]
  %v2744 = vld [vmem:[%s1 + $0xa0] sm:$0xff]
  %v2745 = vld [vmem:[%s1 + $0xa8] sm:$0xff]
  %v2746 = vld [vmem:[%s1 + $0xb0] sm:$0xff]
  %v2747 = vld [vmem:[%s1 + $0xb8] sm:$0xff]
  %v2748 = vld [vmem:[%s1 + $0xc0] sm:$0xff]
  %v2749 = vld [vmem:[%s1 + $0xc8] sm:$0xff]
  %v2750 = vld [vmem:[%s1 + $0xd0] sm:$0xff]
  %v2751 = vld [vmem:[%s1 + $0xd8] sm:$0xff]
  %v2752 = vld [vmem:[%s1 + $0xe0] sm:$0xff]
  %v2753 = vld [vmem:[%s1 + $0xe8] sm:$0xff]
  %v2754 = vld [vmem:[%s1 + $0xf0] sm:$0xff]
  %v2755 = vld [vmem:[%s1 + $0xf8] sm:$0xff]
  %v2756 = vld [vmem:[%s1 + $0x100] sm:$0xff]
  %v2757 = vld [vmem:[%s1 + $0x108] sm:$0xff]
  %v2758 = vld [vmem:[%s1 + $0x110] sm:$0xff]
  %v2759 = vld [vmem:[%s1 + $0x118] sm:$0xff]
  %v2760 = vld [vmem:[%s1 + $0x120] sm:$0xff]
  %v2761 = vld [vmem:[%s1 + $0x128] sm:$0xff]
  %v2762 = vld [vmem:[%s1 + $0x130] sm:$0xff]
  %v2763 = vld [vmem:[%s1 + $0x138] sm:$0xff]
  %v2764 = vld [vmem:[%s1 + $0x140] sm:$0xff]
  %v2765 = vld [vmem:[%s1 + $0x148] sm:$0xff]
  %v2766 = vld [vmem:[%s1 + $0x150] sm:$0xff]
  %v2767 = vld [vmem:[%s1 + $0x158] sm:$0xff]
  %v2768 = vld [vmem:[%s1 + $0x160] sm:$0xff]
  %v2769 = vld [vmem:[%s1 + $0x168] sm:$0xff]
  %v2770 = vld [vmem:[%s1 + $0x170] sm:$0xff]
  %v2771 = vld [vmem:[%s1 + $0x178] sm:$0xff]
  %v2772 = vld [vmem:[%s1 + $0x180] sm:$0xff]
  %v2773 = vld [vmem:[%s1 + $0x188] sm:$0xff]
  %v2774 = vadd.f32 %v2674, %v2724
  %v2775 = vadd.f32 %v2675, %v2725
  %v2776 = vadd.f32 %v2676, %v2726
  %v2777 = vadd.f32 %v2677, %v2727
  %v2778 = vadd.f32 %v2678, %v2728
  %v2779 = vadd.f32 %v2679, %v2729
  %v2780 = vadd.f32 %v2680, %v2730
  %v2781 = vadd.f32 %v2681, %v2731
  %v2782 = vadd.f32 %v2682, %v2732
  %v2783 = vadd.f32 %v2683, %v2733
  %v2784 = vadd.f32 %v2684, %v2734
  %v2785 = vadd.f32 %v2685, %v2735
  %v2786 = vadd.f32 %v2686, %v2736
  %v2787 = vadd.f32 %v2687, %v2737
  %v2788 = vadd.f32 %v2688, %v2738
  %v2789 = vadd.f32 %v2689, %v2739
  %v2790 = vadd.f32 %v2690, %v2740
  %v2791 = vadd.f32 %v2691, %v2741
  %v2792 = vadd.f32 %v2692, %v2742
  %v2793 = vadd.f32 %v2693, %v2743
  %v2794 = vadd.f32 %v2694, %v2744
  %v2795 = vadd.f32 %v2695, %v2745
  %v2796 = vadd.f32 %v2696, %v2746
  %v2797 = vadd.f32 %v2697, %v2747
  %v2798 = vadd.f32 %v2698, %v2748
  %v2799 = vadd.f32 %v2699, %v2749
  %v2800 = vadd.f32 %v2700, %v2750
  %v2801 = vadd.f32 %v2701, %v2751
  %v2802 = vadd.f32 %v2702, %v2752
  %v2803 = vadd.f32 %v2703, %v2753
  %v2804 = vadd.f32 %v2704, %v2754
  %v2805 = vadd.f32 %v2705, %v2755
  %v2806 = vadd.f32 %v2706, %v2756
  %v2807 = vadd.f32 %v2707, %v2757
  %v2808 = vadd.f32 %v2708, %v2758
  %v2809 = vadd.f32 %v2709, %v2759
  %v2810 = vadd.f32 %v2710, %v2760
  %v2811 = vadd.f32 %v2711, %v2761
  %v2812 = vadd.f32 %v2712, %v2762
  %v2813 = vadd.f32 %v2713, %v2763
  %v2814 = vadd.f32 %v2714, %v2764
  %v2815 = vadd.f32 %v2715, %v2765
  %v2816 = vadd.f32 %v2716, %v2766
  %v2817 = vadd.f32 %v2717, %v2767
  %v2818 = vadd.f32 %v2718, %v2768
  %v2819 = vadd.f32 %v2719, %v2769
  %v2820 = vadd.f32 %v2720, %v2770
  %v2821 = vadd.f32 %v2721, %v2771
  %v2822 = vadd.f32 %v2722, %v2772
  %v2823 = vadd.f32 %v2723, %v2773
  %v2824 = vmax.f32 %v2774, 0.0
  %v2825 = vmax.f32 %v2775, 0.0
  %v2826 = vmax.f32 %v2776, 0.0
  %v2827 = vmax.f32 %v2777, 0.0
  %v2828 = vmax.f32 %v2778, 0.0
  %v2829 = vmax.f32 %v2779, 0.0
  %v2830 = vmax.f32 %v2780, 0.0
  %v2831 = vmax.f32 %v2781, 0.0
  %v2832 = vmax.f32 %v2782, 0.0
  %v2833 = vmax.f32 %v2783, 0.0
  %v2834 = vmax.f32 %v2784, 0.0
  %v2835 = vmax.f32 %v2785, 0.0
  %v2836 = vmax.f32 %v2786, 0.0
  %v2837 = vmax.f32 %v2787, 0.0
  %v2838 = vmax.f32 %v2788, 0.0
  %v2839 = vmax.f32 %v2789, 0.0
  %v2840 = vmax.f32 %v2790, 0.0
  %v2841 = vmax.f32 %v2791, 0.0
  %v2842 = vmax.f32 %v2792, 0.0
  %v2843 = vmax.f32 %v2793, 0.0
  %v2844 = vmax.f32 %v2794, 0.0
  %v2845 = vmax.f32 %v2795, 0.0
  %v2846 = vmax.f32 %v2796, 0.0
  %v2847 = vmax.f32 %v2797, 0.0
  %v2848 = vmax.f32 %v2798, 0.0
  %v2849 = vmax.f32 %v2799, 0.0
  %v2850 = vmax.f32 %v2800, 0.0
  %v2851 = vmax.f32 %v2801, 0.0
  %v2852 = vmax.f32 %v2802, 0.0
  %v2853 = vmax.f32 %v2803, 0.0
  %v2854 = vmax.f32 %v2804, 0.0
  %v2855 = vmax.f32 %v2805, 0.0
  %v2856 = vmax.f32 %v2806, 0.0
  %v2857 = vmax.f32 %v2807, 0.0
  %v2858 = vmax.f32 %v2808, 0.0
  %v2859 = vmax.f32 %v2809, 0.0
  %v2860 = vmax.f32 %v2810, 0.0
  %v2861 = vmax.f32 %v2811, 0.0
  %v2862 = vmax.f32 %v2812, 0.0
  %v2863 = vmax.f32 %v2813, 0.0
  %v2864 = vmax.f32 %v2814, 0.0
  %v2865 = vmax.f32 %v2815, 0.0
  %v2866 = vmax.f32 %v2816, 0.0
  %v2867 = vmax.f32 %v2817, 0.0
  %v2868 = vmax.f32 %v2818, 0.0
  %v2869 = vmax.f32 %v2819, 0.0
  %v2870 = vmax.f32 %v2820, 0.0
  %v2871 = vmax.f32 %v2821, 0.0
  %v2872 = vmax.f32 %v2822, 0.0
  %v2873 = vmax.f32 %v2823, 0.0
  %v2874 = vld [vmem:[%s5] sm:$0xff]
  %v2875 = vld [vmem:[%s5 + $0x8] sm:$0xff]
  %v2876 = vld [vmem:[%s5 + $0x10] sm:$0xff]
  %v2877 = vld [vmem:[%s5 + $0x18] sm:$0xff]
  %v2878 = vld [vmem:[%s5 + $0x20] sm:$0xff]
  %v2879 = vld [vmem:[%s5 + $0x28] sm:$0xff]
  %v2880 = vld [vmem:[%s5 + $0x30] sm:$0xff]
  %v2881 = vld [vmem:[%s5 + $0x38] sm:$0xff]
  %v2882 = vld [vmem:[%s5 + $0x40] sm:$0xff]
  %v2883 = vld [vmem:[%s5 + $0x48] sm:$0xff]
  %v2884 = vld [vmem:[%s5 + $0x50] sm:$0xff]
  %v2885 = vld [vmem:[%s5 + $0x58] sm:$0xff]
  %v2886 = vld [vmem:[%s5 + $0x60] sm:$0xff]
  %v2887 = vld [vmem:[%s5 + $0x68] sm:$0xff]
  %v2888 = vld [vmem:[%s5 + $0x70] sm:$0xff]
  %v2889 = vld [vmem:[%s5 + $0x78] sm:$0xff]
  %v2890 = vld [vmem:[%s5 + $0x80] sm:$0xff]
  %v2891 = vld [vmem:[%s5 + $0x88] sm:$0xff]
  %v2892 = vld [vmem:[%s5 + $0x90] sm:$0xff]
  %v2893 = vld [vmem:[%s5 + $0x98] sm:$0xff]
  %v2894 = vld [vmem:[%s5 + $0xa0] sm:$0xff]
  %v2895 = vld [vmem:[%s5 + $0xa8] sm:$0xff]
  %v2896 = vld [vmem:[%s5 + $0xb0] sm:$0xff]
  %v2897 = vld [vmem:[%s5 + $0xb8] sm:$0xff]
  %v2898 = vld [vmem:[%s5 + $0xc0] sm:$0xff]
  %v2899 = vld [vmem:[%s5 + $0xc8] sm:$0xff]
  %v2900 = vld [vmem:[%s5 + $0xd0] sm:$0xff]
  %v2901 = vld [vmem:[%s5 + $0xd8] sm:$0xff]
  %v2902 = vld [vmem:[%s5 + $0xe0] sm:$0xff]
  %v2903 = vld [vmem:[%s5 + $0xe8] sm:$0xff]
  %v2904 = vld [vmem:[%s5 + $0xf0] sm:$0xff]
  %v2905 = vld [vmem:[%s5 + $0xf8] sm:$0xff]
  %v2906 = vld [vmem:[%s5 + $0x100] sm:$0xff]
  %v2907 = vld [vmem:[%s5 + $0x108] sm:$0xff]
  %v2908 = vld [vmem:[%s5 + $0x110] sm:$0xff]
  %v2909 = vld [vmem:[%s5 + $0x118] sm:$0xff]
  %v2910 = vld [vmem:[%s5 + $0x120] sm:$0xff]
  %v2911 = vld [vmem:[%s5 + $0x128] sm:$0xff]
  %v2912 = vld [vmem:[%s5 + $0x130] sm:$0xff]
  %v2913 = vld [vmem:[%s5 + $0x138] sm:$0xff]
  %v2914 = vld [vmem:[%s5 + $0x140] sm:$0xff]
  %v2915 = vld [vmem:[%s5 + $0x148] sm:$0xff]
  %v2916 = vld [vmem:[%s5 + $0x150] sm:$0xff]
  %v2917 = vld [vmem:[%s5 + $0x158] sm:$0xff]
  %v2918 = vld [vmem:[%s5 + $0x160] sm:$0xff]
  %v2919 = vld [vmem:[%s5 + $0x168] sm:$0xff]
  %v2920 = vld [vmem:[%s5 + $0x170] sm:$0xff]
  %v2921 = vld [vmem:[%s5 + $0x178] sm:$0xff]
  %v2922 = vld [vmem:[%s5 + $0x180] sm:$0xff]
  %v2923 = vld [vmem:[%s5 + $0x188] sm:$0xff]
  %v2924 = vld [vmem:[%s5 + $0x190] sm:$0xff]
  %v2925 = vld [vmem:[%s5 + $0x198] sm:$0xff]
  %v2926 = vld [vmem:[%s5 + $0x1a0] sm:$0xff]
  %v2927 = vld [vmem:[%s5 + $0x1a8] sm:$0xff]
  %v2928 = vld [vmem:[%s5 + $0x1b0] sm:$0xff]
  %v2929 = vld [vmem:[%s5 + $0x1b8] sm:$0xff]
  %v2930 = vld [vmem:[%s5 + $0x1c0] sm:$0xff]
  %v2931 = vld [vmem:[%s5 + $0x1c8] sm:$0xff]
  %v2932 = vld [vmem:[%s5 + $0x1d0] sm:$0xff]
  %v2933 = vld [vmem:[%s5 + $0x1d8] sm:$0xff]
  %v2934 = vld [vmem:[%s5 + $0x1e0] sm:$0xff]
  %v2935 = vld [vmem:[%s5 + $0x1e8] sm:$0xff]
  %v2936 = vld [vmem:[%s5 + $0x1f0] sm:$0xff]
  %v2937 = vld [vmem:[%s5 + $0x1f8] sm:$0xff]
  %v2938 = vld [vmem:[%s5 + $0x200] sm:$0xff]
  %v2939 = vld [vmem:[%s5 + $0x208] sm:$0xff]
  %v2940 = vld [vmem:[%s5 + $0x210] sm:$0xff]
  %v2941 = vld [vmem:[%s5 + $0x218] sm:$0xff]
  %v2942 = vld [vmem:[%s5 + $0x220] sm:$0xff]
  %v2943 = vld [vmem:[%s5 + $0x228] sm:$0xff]
  %v2944 = vld [vmem:[%s5 + $0x230] sm:$0xff]
  %v2945 = vld [vmem:[%s5 + $0x238] sm:$0xff]
  %v2946 = vld [vmem:[%s5 + $0x240] sm:$0xff]
  %v2947 = vld [vmem:[%s5 + $0x248] sm:$0xff]
  %v2948 = vld [vmem:[%s5 + $0x250] sm:$0xff]
  %v2949 = vld [vmem:[%s5 + $0x258] sm:$0xff]
  %v2950 = vld [vmem:[%s5 + $0x260] sm:$0xff]
  %v2951 = vld [vmem:[%s5 + $0x268] sm:$0xff]
  %v2952 = vld [vmem:[%s5 + $0x270] sm:$0xff]
  %v2953 = vld [vmem:[%s5 + $0x278] sm:$0xff]
  %v2954 = vld [vmem:[%s5 + $0x280] sm:$0xff]
  %v2955 = vld [vmem:[%s5 + $0x288] sm:$0xff]
  %v2956 = vld [vmem:[%s5 + $0x290] sm:$0xff]
  %v2957 = vld [vmem:[%s5 + $0x298] sm:$0xff]
  %v2958 = vld [vmem:[%s5 + $0x2a0] sm:$0xff]
  %v2959 = vld [vmem:[%s5 + $0x2a8] sm:$0xff]
  %v2960 = vld [vmem:[%s5 + $0x2b0] sm:$0xff]
  %v2961 = vld [vmem:[%s5 + $0x2b8] sm:$0xff]
  %v2962 = vld [vmem:[%s5 + $0x2c0] sm:$0xff]
  %v2963 = vld [vmem:[%s5 + $0x2c8] sm:$0xff]
  %v2964 = vld [vmem:[%s5 + $0x2d0] sm:$0xff]
  %v2965 = vld [vmem:[%s5 + $0x2d8] sm:$0xff]
  %v2966 = vld [vmem:[%s5 + $0x2e0] sm:$0xff]
  %v2967 = vld [vmem:[%s5 + $0x2e8] sm:$0xff]
  %v2968 = vld [vmem:[%s5 + $0x2f0] sm:$0xff]
  %v2969 = vld [vmem:[%s5 + $0x2f8] sm:$0xff]
  %v2970 = vld [vmem:[%s5 + $0x300] sm:$0xff]
  %v2971 = vld [vmem:[%s5 + $0x308] sm:$0xff]
  %v2972 = vld [vmem:[%s5 + $0x310] sm:$0xff]
  %v2973 = vld [vmem:[%s5 + $0x318] sm:$0xff]
  %v2974 = vpack.c.bf16 %v2825, %v2824
  %v2975 = vpack.c.bf16 %v2827, %v2826
  %v2976 = vpack.c.bf16 %v2829, %v2828
  %v2977 = vpack.c.bf16 %v2831, %v2830
  %v2978 = vpack.c.bf16 %v2833, %v2832
  %v2979 = vpack.c.bf16 %v2835, %v2834
  %v2980 = vpack.c.bf16 %v2837, %v2836
  %v2981 = vpack.c.bf16 %v2839, %v2838
  %v2982 = vpack.c.bf16 %v2841, %v2840
  %v2983 = vpack.c.bf16 %v2843, %v2842
  %v2984 = vpack.c.bf16 %v2845, %v2844
  %v2985 = vpack.c.bf16 %v2847, %v2846
  %v2986 = vpack.c.bf16 %v2849, %v2848
  %v2987 = vpack.c.bf16 %v2851, %v2850
  %v2988 = vpack.c.bf16 %v2853, %v2852
  %v2989 = vpack.c.bf16 %v2855, %v2854
  %v2990 = vpack.c.bf16 %v2857, %v2856
  %v2991 = vpack.c.bf16 %v2859, %v2858
  %v2992 = vpack.c.bf16 %v2861, %v2860
  %v2993 = vpack.c.bf16 %v2863, %v2862
  %v2994 = vpack.c.bf16 %v2865, %v2864
  %v2995 = vpack.c.bf16 %v2867, %v2866
  %v2996 = vpack.c.bf16 %v2869, %v2868
  %v2997 = vpack.c.bf16 %v2871, %v2870
  %v2998 = vpack.c.bf16 %v2873, %v2872
  %v3099 = vunpack.c.l.b16 %v2874
  %v3100 = vunpack.c.h.b16 %v2874
  %v3101 = vunpack.c.l.b16 %v2875
  %v3102 = vunpack.c.h.b16 %v2875
  %v3103 = vunpack.c.l.b16 %v2876
  %v3104 = vunpack.c.h.b16 %v2876
  %v3105 = vunpack.c.l.b16 %v2877
  %v3106 = vunpack.c.h.b16 %v2877
  %v3107 = vunpack.c.l.b16 %v2878
  %v3108 = vunpack.c.h.b16 %v2878
  %v3109 = vunpack.c.l.b16 %v2879
  %v3110 = vunpack.c.h.b16 %v2879
  %v3111 = vunpack.c.l.b16 %v2880
  %v3112 = vunpack.c.h.b16 %v2880
  %v3113 = vunpack.c.l.b16 %v2881
  %v3114 = vunpack.c.h.b16 %v2881
  %v3115 = vunpack.c.l.b16 %v2882
  %v3116 = vunpack.c.h.b16 %v2882
  %v3117 = vunpack.c.l.b16 %v2883
  %v3118 = vunpack.c.h.b16 %v2883
  %v3119 = vunpack.c.l.b16 %v2884
  %v3120 = vunpack.c.h.b16 %v2884
  %v3121 = vunpack.c.l.b16 %v2885
  %v3122 = vunpack.c.h.b16 %v2885
  %v3123 = vunpack.c.l.b16 %v2886
  %v3124 = vunpack.c.h.b16 %v2886
  %v3125 = vunpack.c.l.b16 %v2887
  %v3126 = vunpack.c.h.b16 %v2887
  %v3127 = vunpack.c.l.b16 %v2888
  %v3128 = vunpack.c.h.b16 %v2888
  %v3129 = vunpack.c.l.b16 %v2889
  %v3130 = vunpack.c.h.b16 %v2889
  %v3131 = vunpack.c.l.b16 %v2890
  %v3132 = vunpack.c.h.b16 %v2890
  %v3133 = vunpack.c.l.b16 %v2891
  %v3134 = vunpack.c.h.b16 %v2891
  %v3135 = vunpack.c.l.b16 %v2892
  %v3136 = vunpack.c.h.b16 %v2892
  %v3137 = vunpack.c.l.b16 %v2893
  %v3138 = vunpack.c.h.b16 %v2893
  %v3139 = vunpack.c.l.b16 %v2894
  %v3140 = vunpack.c.h.b16 %v2894
  %v3141 = vunpack.c.l.b16 %v2895
  %v3142 = vunpack.c.h.b16 %v2895
  %v3143 = vunpack.c.l.b16 %v2896
  %v3144 = vunpack.c.h.b16 %v2896
  %v3145 = vunpack.c.l.b16 %v2897
  %v3146 = vunpack.c.h.b16 %v2897
  %v3147 = vunpack.c.l.b16 %v2898
  %v3148 = vunpack.c.h.b16 %v2898
  %v3149 = vunpack.c.l.b16 %v2899
  %v3150 = vunpack.c.h.b16 %v2899
  %v3151 = vunpack.c.l.b16 %v2900
  %v3152 = vunpack.c.h.b16 %v2900
  %v3153 = vunpack.c.l.b16 %v2901
  %v3154 = vunpack.c.h.b16 %v2901
  %v3155 = vunpack.c.l.b16 %v2902
  %v3156 = vunpack.c.h.b16 %v2902
  %v3157 = vunpack.c.l.b16 %v2903
  %v3158 = vunpack.c.h.b16 %v2903
  %v3159 = vunpack.c.l.b16 %v2904
  %v3160 = vunpack.c.h.b16 %v2904
  %v3161 = vunpack.c.l.b16 %v2905
  %v3162 = vunpack.c.h.b16 %v2905
  %v3163 = vunpack.c.l.b16 %v2906
  %v3164 = vunpack.c.h.b16 %v2906
  %v3165 = vunpack.c.l.b16 %v2907
  %v3166 = vunpack.c.h.b16 %v2907
  %v3167 = vunpack.c.l.b16 %v2908
  %v3168 = vunpack.c.h.b16 %v2908
  %v3169 = vunpack.c.l.b16 %v2909
  %v3170 = vunpack.c.h.b16 %v2909
  %v3171 = vunpack.c.l.b16 %v2910
  %v3172 = vunpack.c.h.b16 %v2910
  %v3173 = vunpack.c.l.b16 %v2911
  %v3174 = vunpack.c.h.b16 %v2911
  %v3175 = vunpack.c.l.b16 %v2912
  %v3176 = vunpack.c.h.b16 %v2912
  %v3177 = vunpack.c.l.b16 %v2913
  %v3178 = vunpack.c.h.b16 %v2913
  %v3179 = vunpack.c.l.b16 %v2914
  %v3180 = vunpack.c.h.b16 %v2914
  %v3181 = vunpack.c.l.b16 %v2915
  %v3182 = vunpack.c.h.b16 %v2915
  %v3183 = vunpack.c.l.b16 %v2916
  %v3184 = vunpack.c.h.b16 %v2916
  %v3185 = vunpack.c.l.b16 %v2917
  %v3186 = vunpack.c.h.b16 %v2917
  %v3187 = vunpack.c.l.b16 %v2918
  %v3188 = vunpack.c.h.b16 %v2918
  %v3189 = vunpack.c.l.b16 %v2919
  %v3190 = vunpack.c.h.b16 %v2919
  %v3191 = vunpack.c.l.b16 %v2920
  %v3192 = vunpack.c.h.b16 %v2920
  %v3193 = vunpack.c.l.b16 %v2921
  %v3194 = vunpack.c.h.b16 %v2921
  %v3195 = vunpack.c.l.b16 %v2922
  %v3196 = vunpack.c.h.b16 %v2922
  %v3197 = vunpack.c.l.b16 %v2923
  %v3198 = vunpack.c.h.b16 %v2923
  %v3199 = vunpack.c.l.b16 %v2924
  %v3200 = vunpack.c.h.b16 %v2924
  %v3201 = vunpack.c.l.b16 %v2925
  %v3202 = vunpack.c.h.b16 %v2925
  %v3203 = vunpack.c.l.b16 %v2926
  %v3204 = vunpack.c.h.b16 %v2926
  %v3205 = vunpack.c.l.b16 %v2927
  %v3206 = vunpack.c.h.b16 %v2927
  %v3207 = vunpack.c.l.b16 %v2928
  %v3208 = vunpack.c.h.b16 %v2928
  %v3209 = vunpack.c.l.b16 %v2929
  %v3210 = vunpack.c.h.b16 %v2929
  %v3211 = vunpack.c.l.b16 %v2930
  %v3212 = vunpack.c.h.b16 %v2930
  %v3213 = vunpack.c.l.b16 %v2931
  %v3214 = vunpack.c.h.b16 %v2931
  %v3215 = vunpack.c.l.b16 %v2932
  %v3216 = vunpack.c.h.b16 %v2932
  %v3217 = vunpack.c.l.b16 %v2933
  %v3218 = vunpack.c.h.b16 %v2933
  %v3219 = vunpack.c.l.b16 %v2934
  %v3220 = vunpack.c.h.b16 %v2934
  %v3221 = vunpack.c.l.b16 %v2935
  %v3222 = vunpack.c.h.b16 %v2935
  %v3223 = vunpack.c.l.b16 %v2936
  %v3224 = vunpack.c.h.b16 %v2936
  %v3225 = vunpack.c.l.b16 %v2937
  %v3226 = vunpack.c.h.b16 %v2937
  %v3227 = vunpack.c.l.b16 %v2938
  %v3228 = vunpack.c.h.b16 %v2938
  %v3229 = vunpack.c.l.b16 %v2939
  %v3230 = vunpack.c.h.b16 %v2939
  %v3231 = vunpack.c.l.b16 %v2940
  %v3232 = vunpack.c.h.b16 %v2940
  %v3233 = vunpack.c.l.b16 %v2941
  %v3234 = vunpack.c.h.b16 %v2941
  %v3235 = vunpack.c.l.b16 %v2942
  %v3236 = vunpack.c.h.b16 %v2942
  %v3237 = vunpack.c.l.b16 %v2943
  %v3238 = vunpack.c.h.b16 %v2943
  %v3239 = vunpack.c.l.b16 %v2944
  %v3240 = vunpack.c.h.b16 %v2944
  %v3241 = vunpack.c.l.b16 %v2945
  %v3242 = vunpack.c.h.b16 %v2945
  %v3243 = vunpack.c.l.b16 %v2946
  %v3244 = vunpack.c.h.b16 %v2946
  %v3245 = vunpack.c.l.b16 %v2947
  %v3246 = vunpack.c.h.b16 %v2947
  %v3247 = vunpack.c.l.b16 %v2948
  %v3248 = vunpack.c.h.b16 %v2948
  %v3249 = vunpack.c.l.b16 %v2949
  %v3250 = vunpack.c.h.b16 %v2949
  %v3251 = vunpack.c.l.b16 %v2950
  %v3252 = vunpack.c.h.b16 %v2950
  %v3253 = vunpack.c.l.b16 %v2951
  %v3254 = vunpack.c.h.b16 %v2951
  %v3255 = vunpack.c.l.b16 %v2952
  %v3256 = vunpack.c.h.b16 %v2952
  %v3257 = vunpack.c.l.b16 %v2953
  %v3258 = vunpack.c.h.b16 %v2953
  %v3259 = vunpack.c.l.b16 %v2954
  %v3260 = vunpack.c.h.b16 %v2954
  %v3261 = vunpack.c.l.b16 %v2955
  %v3262 = vunpack.c.h.b16 %v2955
  %v3263 = vunpack.c.l.b16 %v2956
  %v3264 = vunpack.c.h.b16 %v2956
  %v3265 = vunpack.c.l.b16 %v2957
  %v3266 = vunpack.c.h.b16 %v2957
  %v3267 = vunpack.c.l.b16 %v2958
  %v3268 = vunpack.c.h.b16 %v2958
  %v3269 = vunpack.c.l.b16 %v2959
  %v3270 = vunpack.c.h.b16 %v2959
  %v3271 = vunpack.c.l.b16 %v2960
  %v3272 = vunpack.c.h.b16 %v2960
  %v3273 = vunpack.c.l.b16 %v2961
  %v3274 = vunpack.c.h.b16 %v2961
  %v3275 = vunpack.c.l.b16 %v2962
  %v3276 = vunpack.c.h.b16 %v2962
  %v3277 = vunpack.c.l.b16 %v2963
  %v3278 = vunpack.c.h.b16 %v2963
  %v3279 = vunpack.c.l.b16 %v2964
  %v3280 = vunpack.c.h.b16 %v2964
  %v3281 = vunpack.c.l.b16 %v2965
  %v3282 = vunpack.c.h.b16 %v2965
  %v3283 = vunpack.c.l.b16 %v2966
  %v3284 = vunpack.c.h.b16 %v2966
  %v3285 = vunpack.c.l.b16 %v2967
  %v3286 = vunpack.c.h.b16 %v2967
  %v3287 = vunpack.c.l.b16 %v2968
  %v3288 = vunpack.c.h.b16 %v2968
  %v3289 = vunpack.c.l.b16 %v2969
  %v3290 = vunpack.c.h.b16 %v2969
  %v3291 = vunpack.c.l.b16 %v2970
  %v3292 = vunpack.c.h.b16 %v2970
  %v3293 = vunpack.c.l.b16 %v2971
  %v3294 = vunpack.c.h.b16 %v2971
  %v3295 = vunpack.c.l.b16 %v2972
  %v3296 = vunpack.c.h.b16 %v2972
  %v3297 = vunpack.c.l.b16 %v2973
  %v3298 = vunpack.c.h.b16 %v2973
  %v3299 = vpack.c.b16 %v3103, %v3099
  %v3300 = vpack.c.b16 %v3104, %v3100
  %v3301 = vpack.c.b16 %v3105, %v3101
  %v3302 = vpack.c.b16 %v3106, %v3102
  %v3303 = vpack.c.b16 %v3111, %v3107
  %v3304 = vpack.c.b16 %v3112, %v3108
  %v3305 = vpack.c.b16 %v3113, %v3109
  %v3306 = vpack.c.b16 %v3114, %v3110
  %v3307 = vpack.c.b16 %v3119, %v3115
  %v3308 = vpack.c.b16 %v3120, %v3116
  %v3309 = vpack.c.b16 %v3121, %v3117
  %v3310 = vpack.c.b16 %v3122, %v3118
  %v3311 = vpack.c.b16 %v3127, %v3123
  %v3312 = vpack.c.b16 %v3128, %v3124
  %v3313 = vpack.c.b16 %v3129, %v3125
  %v3314 = vpack.c.b16 %v3130, %v3126
  %v3315 = vpack.c.b16 %v3135, %v3131
  %v3316 = vpack.c.b16 %v3136, %v3132
  %v3317 = vpack.c.b16 %v3137, %v3133
  %v3318 = vpack.c.b16 %v3138, %v3134
  %v3319 = vpack.c.b16 %v3143, %v3139
  %v3320 = vpack.c.b16 %v3144, %v3140
  %v3321 = vpack.c.b16 %v3145, %v3141
  %v3322 = vpack.c.b16 %v3146, %v3142
  %v3323 = vpack.c.b16 %v3151, %v3147
  %v3324 = vpack.c.b16 %v3152, %v3148
  %v3325 = vpack.c.b16 %v3153, %v3149
  %v3326 = vpack.c.b16 %v3154, %v3150
  %v3327 = vpack.c.b16 %v3159, %v3155
  %v3328 = vpack.c.b16 %v3160, %v3156
  %v3329 = vpack.c.b16 %v3161, %v3157
  %v3330 = vpack.c.b16 %v3162, %v3158
  %v3331 = vpack.c.b16 %v3167, %v3163
  %v3332 = vpack.c.b16 %v3168, %v3164
  %v3333 = vpack.c.b16 %v3169, %v3165
  %v3334 = vpack.c.b16 %v3170, %v3166
  %v3335 = vpack.c.b16 %v3175, %v3171
  %v3336 = vpack.c.b16 %v3176, %v3172
  %v3337 = vpack.c.b16 %v3177, %v3173
  %v3338 = vpack.c.b16 %v3178, %v3174
  %v3339 = vpack.c.b16 %v3183, %v3179
  %v3340 = vpack.c.b16 %v3184, %v3180
  %v3341 = vpack.c.b16 %v3185, %v3181
  %v3342 = vpack.c.b16 %v3186, %v3182
  %v3343 = vpack.c.b16 %v3191, %v3187
  %v3344 = vpack.c.b16 %v3192, %v3188
  %v3345 = vpack.c.b16 %v3193, %v3189
  %v3346 = vpack.c.b16 %v3194, %v3190
  %v3347 = vpack.c.b16 %v3199, %v3195
  %v3348 = vpack.c.b16 %v3200, %v3196
  %v3349 = vpack.c.b16 %v3201, %v3197
  %v3350 = vpack.c.b16 %v3202, %v3198
  %v3351 = vpack.c.b16 %v3207, %v3203
  %v3352 = vpack.c.b16 %v3208, %v3204
  %v3353 = vpack.c.b16 %v3209, %v3205
  %v3354 = vpack.c.b16 %v3210, %v3206
  %v3355 = vpack.c.b16 %v3215, %v3211
  %v3356 = vpack.c.b16 %v3216, %v3212
  %v3357 = vpack.c.b16 %v3217, %v3213
  %v3358 = vpack.c.b16 %v3218, %v3214
  %v3359 = vpack.c.b16 %v3223, %v3219
  %v3360 = vpack.c.b16 %v3224, %v3220
  %v3361 = vpack.c.b16 %v3225, %v3221
  %v3362 = vpack.c.b16 %v3226, %v3222
  %v3363 = vpack.c.b16 %v3231, %v3227
  %v3364 = vpack.c.b16 %v3232, %v3228
  %v3365 = vpack.c.b16 %v3233, %v3229
  %v3366 = vpack.c.b16 %v3234, %v3230
  %v3367 = vpack.c.b16 %v3239, %v3235
  %v3368 = vpack.c.b16 %v3240, %v3236
  %v3369 = vpack.c.b16 %v3241, %v3237
  %v3370 = vpack.c.b16 %v3242, %v3238
  %v3371 = vpack.c.b16 %v3247, %v3243
  %v3372 = vpack.c.b16 %v3248, %v3244
  %v3373 = vpack.c.b16 %v3249, %v3245
  %v3374 = vpack.c.b16 %v3250, %v3246
  %v3375 = vpack.c.b16 %v3255, %v3251
  %v3376 = vpack.c.b16 %v3256, %v3252
  %v3377 = vpack.c.b16 %v3257, %v3253
  %v3378 = vpack.c.b16 %v3258, %v3254
  %v3379 = vpack.c.b16 %v3263, %v3259
  %v3380 = vpack.c.b16 %v3264, %v3260
  %v3381 = vpack.c.b16 %v3265, %v3261
  %v3382 = vpack.c.b16 %v3266, %v3262
  %v3383 = vpack.c.b16 %v3271, %v3267
  %v3384 = vpack.c.b16 %v3272, %v3268
  %v3385 = vpack.c.b16 %v3273, %v3269
  %v3386 = vpack.c.b16 %v3274, %v3270
  %v3387 = vpack.c.b16 %v3279, %v3275
  %v3388 = vpack.c.b16 %v3280, %v3276
  %v3389 = vpack.c.b16 %v3281, %v3277
  %v3390 = vpack.c.b16 %v3282, %v3278
  %v3391 = vpack.c.b16 %v3287, %v3283
  %v3392 = vpack.c.b16 %v3288, %v3284
  %v3393 = vpack.c.b16 %v3289, %v3285
  %v3394 = vpack.c.b16 %v3290, %v3286
  %v3395 = vpack.c.b16 %v3295, %v3291
  %v3396 = vpack.c.b16 %v3296, %v3292
  %v3397 = vpack.c.b16 %v3297, %v3293
  %v3398 = vpack.c.b16 %v3298, %v3294
  %v3475 = vsel %vm680, %v3302, 0
  %v3478 = vsel %vm680, %v3306, 0
  %v3481 = vsel %vm680, %v3310, 0
  %v3484 = vsel %vm680, %v3314, 0
  %v3487 = vsel %vm680, %v3318, 0
  %v3490 = vsel %vm680, %v3322, 0
  %v3493 = vsel %vm680, %v3326, 0
  %v3496 = vsel %vm680, %v3330, 0
  %v3499 = vsel %vm680, %v3334, 0
  %v3502 = vsel %vm680, %v3338, 0
  %v3505 = vsel %vm680, %v3342, 0
  %v3508 = vsel %vm680, %v3346, 0
  %v3511 = vsel %vm680, %v3350, 0
  %v3514 = vsel %vm680, %v3354, 0
  %v3517 = vsel %vm680, %v3358, 0
  %v3520 = vsel %vm680, %v3362, 0
  %v3523 = vsel %vm680, %v3366, 0
  %v3526 = vsel %vm680, %v3370, 0
  %v3529 = vsel %vm680, %v3374, 0
  %v3532 = vsel %vm680, %v3378, 0
  %v3535 = vsel %vm680, %v3382, 0
  %v3538 = vsel %vm680, %v3386, 0
  %v3541 = vsel %vm680, %v3390, 0
  %v3544 = vsel %vm680, %v3394, 0
  %v3547 = vsel %vm680, %v3398, 0
  %3549 = vmatprep.subr.bf16.mxu0 0
  %3550 = vmatpush1.bf16.msra.mxu0 %v2974
  %3551 = vmatprep.subr.bf16.mxu0 0
  %3552 = vmatpush1.bf16.msra.mxu0 %v2975
  %3553 = vmatprep.subr.bf16.mxu0 0
  %3554 = vmatpush1.bf16.msra.mxu0 %v2976
  %3555 = vmatprep.subr.bf16.mxu0 0
  %3556 = vmatpush1.bf16.msra.mxu0 %v2977
  %3557 = vmatprep.subr.bf16.mxu0 0
  %3558 = vmatpush1.bf16.msra.mxu0 %v2978
  %3559 = vmatprep.subr.bf16.mxu0 0
  %3560 = vmatpush1.bf16.msra.mxu0 %v2979
  %3561 = vmatprep.subr.bf16.mxu0 0
  %3562 = vmatpush1.bf16.msra.mxu0 %v2980
  %3563 = vmatprep.subr.bf16.mxu0 0
  %3564 = vmatpush1.bf16.msra.mxu0 %v2981
  %3565 = vmatprep.subr.bf16.mxu0 0
  %3566 = vmatpush1.bf16.msra.mxu0 %v2982
  %3567 = vmatprep.subr.bf16.mxu0 0
  %3568 = vmatpush1.bf16.msra.mxu0 %v2983
  %3569 = vmatprep.subr.bf16.mxu0 0
  %3570 = vmatpush1.bf16.msra.mxu0 %v2984
  %3571 = vmatprep.subr.bf16.mxu0 0
  %3572 = vmatpush1.bf16.msra.mxu0 %v2985
  %3573 = vmatprep.subr.bf16.mxu0 0
  %3574 = vmatpush1.bf16.msra.mxu0 %v2986
  %3575 = vmatprep.subr.bf16.mxu0 0
  %3576 = vmatpush1.bf16.msra.mxu0 %v2987
  %3577 = vmatprep.subr.bf16.mxu0 0
  %3578 = vmatpush1.bf16.msra.mxu0 %v2988
  %3579 = vmatprep.subr.bf16.mxu0 0
  %3580 = vmatpush1.bf16.msra.mxu0 %v2989
  %3581 = vmatprep.mubr.bf16.mxu0 %v3300
  %3582 = vmatmul.mubr.bf16.gmra.mrb[0].mxu0 %v3299
  %v3583 = vpop.f32.mrb[0].mxu0
  %v3584 = vadd.f32 0.0, %v3583
  %v3585 = vpop.f32.mrb[0].mxu0
  %v3586 = vpop.f32.mrb[0].mxu0
  %v3587 = vadd.f32 0.0, %v3586
  %v3588 = vpop.f32.mrb[0].mxu0
  %3589 = vmatprep.mubr.bf16.mxu0 %v3304
  %3590 = vmatmul.mubr.bf16.gmra.mrb[0].mxu0 %v3303
  %v3591 = vpop.f32.mrb[0].mxu0
  %v3592 = vadd.f32 0.0, %v3591
  %v3593 = vpop.f32.mrb[0].mxu0
  %v3594 = vpop.f32.mrb[0].mxu0
  %v3595 = vadd.f32 0.0, %v3594
  %v3596 = vpop.f32.mrb[0].mxu0
  %3597 = vmatprep.mubr.bf16.mxu0 %v3308
  %3598 = vmatmul.mubr.bf16.gmra.mrb[0].mxu0 %v3307
  %v3599 = vpop.f32.mrb[0].mxu0
  %v3600 = vadd.f32 0.0, %v3599
  %v3601 = vpop.f32.mrb[0].mxu0
  %v3602 = vpop.f32.mrb[0].mxu0
  %v3603 = vadd.f32 0.0, %v3602
  %v3604 = vpop.f32.mrb[0].mxu0
  %3605 = vmatprep.mubr.bf16.mxu0 %v3312
  %3606 = vmatmul.mubr.bf16.gmra.mrb[0].mxu0 %v3311
  %v3607 = vpop.f32.mrb[0].mxu0
  %v3608 = vadd.f32 0.0, %v3607
  %v3609 = vpop.f32.mrb[0].mxu0
  %v3610 = vpop.f32.mrb[0].mxu0
  %v3611 = vadd.f32 0.0, %v3610
  %v3612 = vpop.f32.mrb[0].mxu0
  %3613 = vmatprep.mubr.bf16.mxu0 %v3316
  %3614 = vmatmul.mubr.bf16.gmra.mrb[0].mxu0 %v3315
  %v3615 = vpop.f32.mrb[0].mxu0
  %v3616 = vadd.f32 0.0, %v3615
  %v3617 = vpop.f32.mrb[0].mxu0
  %v3618 = vpop.f32.mrb[0].mxu0
  %v3619 = vadd.f32 0.0, %v3618
  %v3620 = vpop.f32.mrb[0].mxu0
  %3621 = vmatprep.mubr.bf16.mxu0 %v3320
  %3622 = vmatmul.mubr.bf16.gmra.mrb[0].mxu0 %v3319
  %v3623 = vpop.f32.mrb[0].mxu0
  %v3624 = vadd.f32 0.0, %v3623
  %v3625 = vpop.f32.mrb[0].mxu0
  %v3626 = vpop.f32.mrb[0].mxu0
  %v3627 = vadd.f32 0.0, %v3626
  %v3628 = vpop.f32.mrb[0].mxu0
  %3629 = vmatprep.mubr.bf16.mxu0 %v3324
  %3630 = vmatmul.mubr.bf16.gmra.mrb[0].mxu0 %v3323
  %v3631 = vpop.f32.mrb[0].mxu0
  %v3632 = vadd.f32 0.0, %v3631
  %v3633 = vpop.f32.mrb[0].mxu0
  %v3634 = vpop.f32.mrb[0].mxu0
  %v3635 = vadd.f32 0.0, %v3634
  %v3636 = vpop.f32.mrb[0].mxu0
  %3637 = vmatprep.mubr.bf16.mxu0 %v3328
  %3638 = vmatmul.mubr.bf16.gmra.mrb[0].mxu0 %v3327
  %v3639 = vpop.f32.mrb[0].mxu0
  %v3640 = vadd.f32 0.0, %v3639
  %v3641 = vpop.f32.mrb[0].mxu0
  %v3642 = vpop.f32.mrb[0].mxu0
  %v3643 = vadd.f32 0.0, %v3642
  %v3644 = vpop.f32.mrb[0].mxu0
  %3645 = vmatprep.mubr.bf16.mxu0 %v3332
  %3646 = vmatmul.mubr.bf16.gmra.mrb[0].mxu0 %v3331
  %v3647 = vpop.f32.mrb[0].mxu0
  %v3648 = vadd.f32 0.0, %v3647
  %v3649 = vpop.f32.mrb[0].mxu0
  %v3650 = vpop.f32.mrb[0].mxu0
  %v3651 = vadd.f32 0.0, %v3650
  %v3652 = vpop.f32.mrb[0].mxu0
  %3653 = vmatprep.mubr.bf16.mxu0 %v3336
  %3654 = vmatmul.mubr.bf16.gmra.mrb[0].mxu0 %v3335
  %v3655 = vpop.f32.mrb[0].mxu0
  %v3656 = vadd.f32 0.0, %v3655
  %v3657 = vpop.f32.mrb[0].mxu0
  %v3658 = vpop.f32.mrb[0].mxu0
  %v3659 = vadd.f32 0.0, %v3658
  %v3660 = vpop.f32.mrb[0].mxu0
  %3661 = vmatprep.mubr.bf16.mxu0 %v3340
  %3662 = vmatmul.mubr.bf16.gmra.mrb[0].mxu0 %v3339
  %v3663 = vpop.f32.mrb[0].mxu0
  %v3664 = vadd.f32 0.0, %v3663
  %v3665 = vpop.f32.mrb[0].mxu0
  %v3666 = vpop.f32.mrb[0].mxu0
  %v3667 = vadd.f32 0.0, %v3666
  %v3668 = vpop.f32.mrb[0].mxu0
  %3669 = vmatprep.mubr.bf16.mxu0 %v3344
  %3670 = vmatmul.mubr.bf16.gmra.mrb[0].mxu0 %v3343
  %v3671 = vpop.f32.mrb[0].mxu0
  %v3672 = vadd.f32 0.0, %v3671
  %v3673 = vpop.f32.mrb[0].mxu0
  %v3674 = vpop.f32.mrb[0].mxu0
  %v3675 = vadd.f32 0.0, %v3674
  %v3676 = vpop.f32.mrb[0].mxu0
  %3677 = vmatprep.mubr.bf16.mxu0 %v3348
  %3678 = vmatmul.mubr.bf16.gmra.mrb[0].mxu0 %v3347
  %v3679 = vpop.f32.mrb[0].mxu0
  %v3680 = vadd.f32 0.0, %v3679
  %v3681 = vpop.f32.mrb[0].mxu0
  %v3682 = vpop.f32.mrb[0].mxu0
  %v3683 = vadd.f32 0.0, %v3682
  %v3684 = vpop.f32.mrb[0].mxu0
  %3685 = vmatprep.mubr.bf16.mxu0 %v3352
  %3686 = vmatmul.mubr.bf16.gmra.mrb[0].mxu0 %v3351
  %v3687 = vpop.f32.mrb[0].mxu0
  %v3688 = vadd.f32 0.0, %v3687
  %v3689 = vpop.f32.mrb[0].mxu0
  %v3690 = vpop.f32.mrb[0].mxu0
  %v3691 = vadd.f32 0.0, %v3690
  %v3692 = vpop.f32.mrb[0].mxu0
  %3693 = vmatprep.mubr.bf16.mxu0 %v3356
  %3694 = vmatmul.mubr.bf16.gmra.mrb[0].mxu0 %v3355
  %v3695 = vpop.f32.mrb[0].mxu0
  %v3696 = vadd.f32 0.0, %v3695
  %v3697 = vpop.f32.mrb[0].mxu0
  %v3698 = vpop.f32.mrb[0].mxu0
  %v3699 = vadd.f32 0.0, %v3698
  %v3700 = vpop.f32.mrb[0].mxu0
  %3701 = vmatprep.mubr.bf16.mxu0 %v3360
  %3702 = vmatmul.mubr.bf16.gmra.mrb[0].mxu0 %v3359
  %v3703 = vpop.f32.mrb[0].mxu0
  %v3704 = vadd.f32 0.0, %v3703
  %v3705 = vpop.f32.mrb[0].mxu0
  %v3706 = vpop.f32.mrb[0].mxu0
  %v3707 = vadd.f32 0.0, %v3706
  %v3708 = vpop.f32.mrb[0].mxu0
  %3709 = vmatprep.mubr.bf16.mxu0 %v3364
  %3710 = vmatmul.mubr.bf16.gmra.mrb[0].mxu0 %v3363
  %v3711 = vpop.f32.mrb[0].mxu0
  %v3712 = vadd.f32 0.0, %v3711
  %v3713 = vpop.f32.mrb[0].mxu0
  %v3714 = vpop.f32.mrb[0].mxu0
  %v3715 = vadd.f32 0.0, %v3714
  %v3716 = vpop.f32.mrb[0].mxu0
  %3717 = vmatprep.mubr.bf16.mxu0 %v3368
  %3718 = vmatmul.mubr.bf16.gmra.mrb[0].mxu0 %v3367
  %v3719 = vpop.f32.mrb[0].mxu0
  %v3720 = vadd.f32 0.0, %v3719
  %v3721 = vpop.f32.mrb[0].mxu0
  %v3722 = vpop.f32.mrb[0].mxu0
  %v3723 = vadd.f32 0.0, %v3722
  %v3724 = vpop.f32.mrb[0].mxu0
  %3725 = vmatprep.mubr.bf16.mxu0 %v3372
  %3726 = vmatmul.mubr.bf16.gmra.mrb[0].mxu0 %v3371
  %v3727 = vpop.f32.mrb[0].mxu0
  %v3728 = vadd.f32 0.0, %v3727
  %v3729 = vpop.f32.mrb[0].mxu0
  %v3730 = vpop.f32.mrb[0].mxu0
  %v3731 = vadd.f32 0.0, %v3730
  %v3732 = vpop.f32.mrb[0].mxu0
  %3733 = vmatprep.mubr.bf16.mxu0 %v3376
  %3734 = vmatmul.mubr.bf16.gmra.mrb[0].mxu0 %v3375
  %v3735 = vpop.f32.mrb[0].mxu0
  %v3736 = vadd.f32 0.0, %v3735
  %v3737 = vpop.f32.mrb[0].mxu0
  %v3738 = vpop.f32.mrb[0].mxu0
  %v3739 = vadd.f32 0.0, %v3738
  %v3740 = vpop.f32.mrb[0].mxu0
  %3741 = vmatprep.mubr.bf16.mxu0 %v3380
  %3742 = vmatmul.mubr.bf16.gmra.mrb[0].mxu0 %v3379
  %v3743 = vpop.f32.mrb[0].mxu0
  %v3744 = vadd.f32 0.0, %v3743
  %v3745 = vpop.f32.mrb[0].mxu0
  %v3746 = vpop.f32.mrb[0].mxu0
  %v3747 = vadd.f32 0.0, %v3746
  %v3748 = vpop.f32.mrb[0].mxu0
  %3749 = vmatprep.mubr.bf16.mxu0 %v3384
  %3750 = vmatmul.mubr.bf16.gmra.mrb[0].mxu0 %v3383
  %v3751 = vpop.f32.mrb[0].mxu0
  %v3752 = vadd.f32 0.0, %v3751
  %v3753 = vpop.f32.mrb[0].mxu0
  %v3754 = vpop.f32.mrb[0].mxu0
  %v3755 = vadd.f32 0.0, %v3754
  %v3756 = vpop.f32.mrb[0].mxu0
  %3757 = vmatprep.mubr.bf16.mxu0 %v3388
  %3758 = vmatmul.mubr.bf16.gmra.mrb[0].mxu0 %v3387
  %v3759 = vpop.f32.mrb[0].mxu0
  %v3760 = vadd.f32 0.0, %v3759
  %v3761 = vpop.f32.mrb[0].mxu0
  %v3762 = vpop.f32.mrb[0].mxu0
  %v3763 = vadd.f32 0.0, %v3762
  %v3764 = vpop.f32.mrb[0].mxu0
  %3765 = vmatprep.mubr.bf16.mxu0 %v3392
  %3766 = vmatmul.mubr.bf16.gmra.mrb[0].mxu0 %v3391
  %v3767 = vpop.f32.mrb[0].mxu0
  %v3768 = vadd.f32 0.0, %v3767
  %v3769 = vpop.f32.mrb[0].mxu0
  %v3770 = vpop.f32.mrb[0].mxu0
  %v3771 = vadd.f32 0.0, %v3770
  %v3772 = vpop.f32.mrb[0].mxu0
  %3773 = vmatprep.mubr.bf16.mxu0 %v3396
  %3774 = vmatmul.mubr.bf16.gmra.mrb[0].mxu0 %v3395
  %v3775 = vpop.f32.mrb[0].mxu0
  %v3776 = vadd.f32 0.0, %v3775
  %v3777 = vpop.f32.mrb[0].mxu0
  %v3778 = vpop.f32.mrb[0].mxu0
  %v3779 = vadd.f32 0.0, %v3778
  %v3780 = vpop.f32.mrb[0].mxu0
  %3781 = vdwg.mxu0
  %3782 = vmatprep.subr.bf16.mxu0 0
  %3783 = vmatpush1.bf16.msra.mxu0 %v2990
  %3784 = vmatprep.subr.bf16.mxu0 0
  %3785 = vmatpush1.bf16.msra.mxu0 %v2991
  %3786 = vmatprep.subr.bf16.mxu0 0
  %3787 = vmatpush1.bf16.msra.mxu0 %v2992
  %3788 = vmatprep.subr.bf16.mxu0 0
  %3789 = vmatpush1.bf16.msra.mxu0 %v2993
  %3790 = vmatprep.subr.bf16.mxu0 0
  %3791 = vmatpush1.bf16.msra.mxu0 %v2994
  %3792 = vmatprep.subr.bf16.mxu0 0
  %3793 = vmatpush1.bf16.msra.mxu0 %v2995
  %3794 = vmatprep.subr.bf16.mxu0 0
  %3795 = vmatpush1.bf16.msra.mxu0 %v2996
  %3796 = vmatprep.subr.bf16.mxu0 0
  %3797 = vmatpush1.bf16.msra.mxu0 %v2997
  %3798 = vmatprep.subr.bf16.mxu0 0
  %3799 = vmatpush1.bf16.msra.mxu0 %v2998
  %3800 = vmatprep.subr.bf16.mxu0 0
  %3801 = vmatpush1.bf16.msra.mxu0 0
  %3802 = vmatprep.subr.bf16.mxu0 0
  %3803 = vmatpush1.bf16.msra.mxu0 0
  %3804 = vmatprep.subr.bf16.mxu0 0
  %3805 = vmatpush1.bf16.msra.mxu0 0
  %3806 = vmatprep.subr.bf16.mxu0 0
  %3807 = vmatpush1.bf16.msra.mxu0 0
  %3808 = vmatprep.subr.bf16.mxu0 0
  %3809 = vmatpush1.bf16.msra.mxu0 0
  %3810 = vmatprep.subr.bf16.mxu0 0
  %3811 = vmatpush1.bf16.msra.mxu0 0
  %3812 = vmatprep.subr.bf16.mxu0 0
  %3813 = vmatpush1.bf16.msra.mxu0 0
  %3814 = vmatprep.mubr.bf16.mxu0 %v3475
  %3815 = vmatmul.mubr.bf16.gmra.mrb[0].mxu0 %v3301
  %v3816 = vpop.f32.mrb[0].mxu0
  %v3817 = vadd.f32 %v3584, %v3816
  %v3818 = vpop.f32.mrb[0].mxu0
  %v3819 = vpop.f32.mrb[0].mxu0
  %v3820 = vadd.f32 %v3587, %v3819
  %v3821 = vpop.f32.mrb[0].mxu0
  %3822 = vmatprep.mubr.bf16.mxu0 %v3478
  %3823 = vmatmul.mubr.bf16.gmra.mrb[0].mxu0 %v3305
  %v3824 = vpop.f32.mrb[0].mxu0
  %v3825 = vadd.f32 %v3592, %v3824
  %v3826 = vpop.f32.mrb[0].mxu0
  %v3827 = vpop.f32.mrb[0].mxu0
  %v3828 = vadd.f32 %v3595, %v3827
  %v3829 = vpop.f32.mrb[0].mxu0
  %3830 = vmatprep.mubr.bf16.mxu0 %v3481
  %3831 = vmatmul.mubr.bf16.gmra.mrb[0].mxu0 %v3309
  %v3832 = vpop.f32.mrb[0].mxu0
  %v3833 = vadd.f32 %v3600, %v3832
  %v3834 = vpop.f32.mrb[0].mxu0
  %v3835 = vpop.f32.mrb[0].mxu0
  %v3836 = vadd.f32 %v3603, %v3835
  %v3837 = vpop.f32.mrb[0].mxu0
  %3838 = vmatprep.mubr.bf16.mxu0 %v3484
  %3839 = vmatmul.mubr.bf16.gmra.mrb[0].mxu0 %v3313
  %v3840 = vpop.f32.mrb[0].mxu0
  %v3841 = vadd.f32 %v3608, %v3840
  %v3842 = vpop.f32.mrb[0].mxu0
  %v3843 = vpop.f32.mrb[0].mxu0
  %v3844 = vadd.f32 %v3611, %v3843
  %v3845 = vpop.f32.mrb[0].mxu0
  %3846 = vmatprep.mubr.bf16.mxu0 %v3487
  %3847 = vmatmul.mubr.bf16.gmra.mrb[0].mxu0 %v3317
  %v3848 = vpop.f32.mrb[0].mxu0
  %v3849 = vadd.f32 %v3616, %v3848
  %v3850 = vpop.f32.mrb[0].mxu0
  %v3851 = vpop.f32.mrb[0].mxu0
  %v3852 = vadd.f32 %v3619, %v3851
  %v3853 = vpop.f32.mrb[0].mxu0
  %3854 = vmatprep.mubr.bf16.mxu0 %v3490
  %3855 = vmatmul.mubr.bf16.gmra.mrb[0].mxu0 %v3321
  %v3856 = vpop.f32.mrb[0].mxu0
  %v3857 = vadd.f32 %v3624, %v3856
  %v3858 = vpop.f32.mrb[0].mxu0
  %v3859 = vpop.f32.mrb[0].mxu0
  %v3860 = vadd.f32 %v3627, %v3859
  %v3861 = vpop.f32.mrb[0].mxu0
  %3862 = vmatprep.mubr.bf16.mxu0 %v3493
  %3863 = vmatmul.mubr.bf16.gmra.mrb[0].mxu0 %v3325
  %v3864 = vpop.f32.mrb[0].mxu0
  %v3865 = vadd.f32 %v3632, %v3864
  %v3866 = vpop.f32.mrb[0].mxu0
  %v3867 = vpop.f32.mrb[0].mxu0
  %v3868 = vadd.f32 %v3635, %v3867
  %v3869 = vpop.f32.mrb[0].mxu0
  %3870 = vmatprep.mubr.bf16.mxu0 %v3496
  %3871 = vmatmul.mubr.bf16.gmra.mrb[0].mxu0 %v3329
  %v3872 = vpop.f32.mrb[0].mxu0
  %v3873 = vadd.f32 %v3640, %v3872
  %v3874 = vpop.f32.mrb[0].mxu0
  %v3875 = vpop.f32.mrb[0].mxu0
  %v3876 = vadd.f32 %v3643, %v3875
  %v3877 = vpop.f32.mrb[0].mxu0
  %3878 = vmatprep.mubr.bf16.mxu0 %v3499
  %3879 = vmatmul.mubr.bf16.gmra.mrb[0].mxu0 %v3333
  %v3880 = vpop.f32.mrb[0].mxu0
  %v3881 = vadd.f32 %v3648, %v3880
  %v3882 = vpop.f32.mrb[0].mxu0
  %v3883 = vpop.f32.mrb[0].mxu0
  %v3884 = vadd.f32 %v3651, %v3883
  %v3885 = vpop.f32.mrb[0].mxu0
  %3886 = vmatprep.mubr.bf16.mxu0 %v3502
  %3887 = vmatmul.mubr.bf16.gmra.mrb[0].mxu0 %v3337
  %v3888 = vpop.f32.mrb[0].mxu0
  %v3889 = vadd.f32 %v3656, %v3888
  %v3890 = vpop.f32.mrb[0].mxu0
  %v3891 = vpop.f32.mrb[0].mxu0
  %v3892 = vadd.f32 %v3659, %v3891
  %v3893 = vpop.f32.mrb[0].mxu0
  %3894 = vmatprep.mubr.bf16.mxu0 %v3505
  %3895 = vmatmul.mubr.bf16.gmra.mrb[0].mxu0 %v3341
  %v3896 = vpop.f32.mrb[0].mxu0
  %v3897 = vadd.f32 %v3664, %v3896
  %v3898 = vpop.f32.mrb[0].mxu0
  %v3899 = vpop.f32.mrb[0].mxu0
  %v3900 = vadd.f32 %v3667, %v3899
  %v3901 = vpop.f32.mrb[0].mxu0
  %3902 = vmatprep.mubr.bf16.mxu0 %v3508
  %3903 = vmatmul.mubr.bf16.gmra.mrb[0].mxu0 %v3345
  %v3904 = vpop.f32.mrb[0].mxu0
  %v3905 = vadd.f32 %v3672, %v3904
  %v3906 = vpop.f32.mrb[0].mxu0
  %v3907 = vpop.f32.mrb[0].mxu0
  %v3908 = vadd.f32 %v3675, %v3907
  %v3909 = vpop.f32.mrb[0].mxu0
  %3910 = vmatprep.mubr.bf16.mxu0 %v3511
  %3911 = vmatmul.mubr.bf16.gmra.mrb[0].mxu0 %v3349
  %v3912 = vpop.f32.mrb[0].mxu0
  %v3913 = vadd.f32 %v3680, %v3912
  %v3914 = vpop.f32.mrb[0].mxu0
  %v3915 = vpop.f32.mrb[0].mxu0
  %v3916 = vadd.f32 %v3683, %v3915
  %v3917 = vpop.f32.mrb[0].mxu0
  %3918 = vmatprep.mubr.bf16.mxu0 %v3514
  %3919 = vmatmul.mubr.bf16.gmra.mrb[0].mxu0 %v3353
  %v3920 = vpop.f32.mrb[0].mxu0
  %v3921 = vadd.f32 %v3688, %v3920
  %v3922 = vpop.f32.mrb[0].mxu0
  %v3923 = vpop.f32.mrb[0].mxu0
  %v3924 = vadd.f32 %v3691, %v3923
  %v3925 = vpop.f32.mrb[0].mxu0
  %3926 = vmatprep.mubr.bf16.mxu0 %v3517
  %3927 = vmatmul.mubr.bf16.gmra.mrb[0].mxu0 %v3357
  %v3928 = vpop.f32.mrb[0].mxu0
  %v3929 = vadd.f32 %v3696, %v3928
  %v3930 = vpop.f32.mrb[0].mxu0
  %v3931 = vpop.f32.mrb[0].mxu0
  %v3932 = vadd.f32 %v3699, %v3931
  %v3933 = vpop.f32.mrb[0].mxu0
  %3934 = vmatprep.mubr.bf16.mxu0 %v3520
  %3935 = vmatmul.mubr.bf16.gmra.mrb[0].mxu0 %v3361
  %v3936 = vpop.f32.mrb[0].mxu0
  %v3937 = vadd.f32 %v3704, %v3936
  %v3938 = vpop.f32.mrb[0].mxu0
  %v3939 = vpop.f32.mrb[0].mxu0
  %v3940 = vadd.f32 %v3707, %v3939
  %v3941 = vpop.f32.mrb[0].mxu0
  %3942 = vmatprep.mubr.bf16.mxu0 %v3523
  %3943 = vmatmul.mubr.bf16.gmra.mrb[0].mxu0 %v3365
  %v3944 = vpop.f32.mrb[0].mxu0
  %v3945 = vadd.f32 %v3712, %v3944
  %v3946 = vpop.f32.mrb[0].mxu0
  %v3947 = vpop.f32.mrb[0].mxu0
  %v3948 = vadd.f32 %v3715, %v3947
  %v3949 = vpop.f32.mrb[0].mxu0
  %3950 = vmatprep.mubr.bf16.mxu0 %v3526
  %3951 = vmatmul.mubr.bf16.gmra.mrb[0].mxu0 %v3369
  %v3952 = vpop.f32.mrb[0].mxu0
  %v3953 = vadd.f32 %v3720, %v3952
  %v3954 = vpop.f32.mrb[0].mxu0
  %v3955 = vpop.f32.mrb[0].mxu0
  %v3956 = vadd.f32 %v3723, %v3955
  %v3957 = vpop.f32.mrb[0].mxu0
  %3958 = vmatprep.mubr.bf16.mxu0 %v3529
  %3959 = vmatmul.mubr.bf16.gmra.mrb[0].mxu0 %v3373
  %v3960 = vpop.f32.mrb[0].mxu0
  %v3961 = vadd.f32 %v3728, %v3960
  %v3962 = vpop.f32.mrb[0].mxu0
  %v3963 = vpop.f32.mrb[0].mxu0
  %v3964 = vadd.f32 %v3731, %v3963
  %v3965 = vpop.f32.mrb[0].mxu0
  %3966 = vmatprep.mubr.bf16.mxu0 %v3532
  %3967 = vmatmul.mubr.bf16.gmra.mrb[0].mxu0 %v3377
  %v3968 = vpop.f32.mrb[0].mxu0
  %v3969 = vadd.f32 %v3736, %v3968
  %v3970 = vpop.f32.mrb[0].mxu0
  %v3971 = vpop.f32.mrb[0].mxu0
  %v3972 = vadd.f32 %v3739, %v3971
  %v3973 = vpop.f32.mrb[0].mxu0
  %3974 = vmatprep.mubr.bf16.mxu0 %v3535
  %3975 = vmatmul.mubr.bf16.gmra.mrb[0].mxu0 %v3381
  %v3976 = vpop.f32.mrb[0].mxu0
  %v3977 = vadd.f32 %v3744, %v3976
  %v3978 = vpop.f32.mrb[0].mxu0
  %v3979 = vpop.f32.mrb[0].mxu0
  %v3980 = vadd.f32 %v3747, %v3979
  %v3981 = vpop.f32.mrb[0].mxu0
  %3982 = vmatprep.mubr.bf16.mxu0 %v3538
  %3983 = vmatmul.mubr.bf16.gmra.mrb[0].mxu0 %v3385
  %v3984 = vpop.f32.mrb[0].mxu0
  %v3985 = vadd.f32 %v3752, %v3984
  %v3986 = vpop.f32.mrb[0].mxu0
  %v3987 = vpop.f32.mrb[0].mxu0
  %v3988 = vadd.f32 %v3755, %v3987
  %v3989 = vpop.f32.mrb[0].mxu0
  %3990 = vmatprep.mubr.bf16.mxu0 %v3541
  %3991 = vmatmul.mubr.bf16.gmra.mrb[0].mxu0 %v3389
  %v3992 = vpop.f32.mrb[0].mxu0
  %v3993 = vadd.f32 %v3760, %v3992
  %v3994 = vpop.f32.mrb[0].mxu0
  %v3995 = vpop.f32.mrb[0].mxu0
  %v3996 = vadd.f32 %v3763, %v3995
  %v3997 = vpop.f32.mrb[0].mxu0
  %3998 = vmatprep.mubr.bf16.mxu0 %v3544
  %3999 = vmatmul.mubr.bf16.gmra.mrb[0].mxu0 %v3393
  %v4000 = vpop.f32.mrb[0].mxu0
  %v4001 = vadd.f32 %v3768, %v4000
  %v4002 = vpop.f32.mrb[0].mxu0
  %v4003 = vpop.f32.mrb[0].mxu0
  %v4004 = vadd.f32 %v3771, %v4003
  %v4005 = vpop.f32.mrb[0].mxu0
  %4006 = vmatprep.mubr.bf16.mxu0 %v3547
  %4007 = vmatmul.mubr.bf16.gmra.mrb[0].mxu0 %v3397
  %v4008 = vpop.f32.mrb[0].mxu0
  %v4009 = vadd.f32 %v3776, %v4008
  %v4010 = vpop.f32.mrb[0].mxu0
  %v4011 = vpop.f32.mrb[0].mxu0
  %v4012 = vadd.f32 %v3779, %v4011
  %v4013 = vpop.f32.mrb[0].mxu0
  %4014 = vdwg.mxu0
  %v4015 = vsel %vm1222, %v3817, 0.0
  %4016 = vadd.xlane.f32.xlu0 %v4015
  %v4017 = vpop.xlane.xlu0 %4016
  %v4018 = vsel %vm1222, %v3820, 0.0
  %4019 = vadd.xlane.f32.xlu0 %v4018
  %v4020 = vpop.xlane.xlu0 %4019
  %v4021 = vsel %vm1222, %v3825, 0.0
  %4022 = vadd.xlane.f32.xlu0 %v4021
  %v4023 = vpop.xlane.xlu0 %4022
  %v4024 = vsel %vm1222, %v3828, 0.0
  %4025 = vadd.xlane.f32.xlu0 %v4024
  %v4026 = vpop.xlane.xlu0 %4025
  %v4027 = vsel %vm1222, %v3833, 0.0
  %4028 = vadd.xlane.f32.xlu0 %v4027
  %v4029 = vpop.xlane.xlu0 %4028
  %v4030 = vsel %vm1222, %v3836, 0.0
  %4031 = vadd.xlane.f32.xlu0 %v4030
  %v4032 = vpop.xlane.xlu0 %4031
  %v4033 = vsel %vm1222, %v3841, 0.0
  %4034 = vadd.xlane.f32.xlu0 %v4033
  %v4035 = vpop.xlane.xlu0 %4034
  %v4036 = vsel %vm1222, %v3844, 0.0
  %4037 = vadd.xlane.f32.xlu0 %v4036
  %v4038 = vpop.xlane.xlu0 %4037
  %v4039 = vsel %vm1222, %v3849, 0.0
  %4040 = vadd.xlane.f32.xlu0 %v4039
  %v4041 = vpop.xlane.xlu0 %4040
  %v4042 = vsel %vm1222, %v3852, 0.0
  %4043 = vadd.xlane.f32.xlu0 %v4042
  %v4044 = vpop.xlane.xlu0 %4043
  %v4045 = vsel %vm1222, %v3857, 0.0
  %4046 = vadd.xlane.f32.xlu0 %v4045
  %v4047 = vpop.xlane.xlu0 %4046
  %v4048 = vsel %vm1222, %v3860, 0.0
  %4049 = vadd.xlane.f32.xlu0 %v4048
  %v4050 = vpop.xlane.xlu0 %4049
  %v4051 = vsel %vm1222, %v3865, 0.0
  %4052 = vadd.xlane.f32.xlu0 %v4051
  %v4053 = vpop.xlane.xlu0 %4052
  %v4054 = vsel %vm1222, %v3868, 0.0
  %4055 = vadd.xlane.f32.xlu0 %v4054
  %v4056 = vpop.xlane.xlu0 %4055
  %v4057 = vsel %vm1222, %v3873, 0.0
  %4058 = vadd.xlane.f32.xlu0 %v4057
  %v4059 = vpop.xlane.xlu0 %4058
  %v4060 = vsel %vm1222, %v3876, 0.0
  %4061 = vadd.xlane.f32.xlu0 %v4060
  %v4062 = vpop.xlane.xlu0 %4061
  %v4063 = vsel %vm1222, %v3881, 0.0
  %4064 = vadd.xlane.f32.xlu0 %v4063
  %v4065 = vpop.xlane.xlu0 %4064
  %v4066 = vsel %vm1222, %v3884, 0.0
  %4067 = vadd.xlane.f32.xlu0 %v4066
  %v4068 = vpop.xlane.xlu0 %4067
  %v4069 = vsel %vm1222, %v3889, 0.0
  %4070 = vadd.xlane.f32.xlu0 %v4069
  %v4071 = vpop.xlane.xlu0 %4070
  %v4072 = vsel %vm1222, %v3892, 0.0
  %4073 = vadd.xlane.f32.xlu0 %v4072
  %v4074 = vpop.xlane.xlu0 %4073
  %v4075 = vsel %vm1222, %v3897, 0.0
  %4076 = vadd.xlane.f32.xlu0 %v4075
  %v4077 = vpop.xlane.xlu0 %4076
  %v4078 = vsel %vm1222, %v3900, 0.0
  %4079 = vadd.xlane.f32.xlu0 %v4078
  %v4080 = vpop.xlane.xlu0 %4079
  %v4081 = vsel %vm1222, %v3905, 0.0
  %4082 = vadd.xlane.f32.xlu0 %v4081
  %v4083 = vpop.xlane.xlu0 %4082
  %v4084 = vsel %vm1222, %v3908, 0.0
  %4085 = vadd.xlane.f32.xlu0 %v4084
  %v4086 = vpop.xlane.xlu0 %4085
  %v4087 = vsel %vm1222, %v3913, 0.0
  %4088 = vadd.xlane.f32.xlu0 %v4087
  %v4089 = vpop.xlane.xlu0 %4088
  %v4090 = vsel %vm1222, %v3916, 0.0
  %4091 = vadd.xlane.f32.xlu0 %v4090
  %v4092 = vpop.xlane.xlu0 %4091
  %v4093 = vsel %vm1222, %v3921, 0.0
  %4094 = vadd.xlane.f32.xlu0 %v4093
  %v4095 = vpop.xlane.xlu0 %4094
  %v4096 = vsel %vm1222, %v3924, 0.0
  %4097 = vadd.xlane.f32.xlu0 %v4096
  %v4098 = vpop.xlane.xlu0 %4097
  %v4099 = vsel %vm1222, %v3929, 0.0
  %4100 = vadd.xlane.f32.xlu0 %v4099
  %v4101 = vpop.xlane.xlu0 %4100
  %v4102 = vsel %vm1222, %v3932, 0.0
  %4103 = vadd.xlane.f32.xlu0 %v4102
  %v4104 = vpop.xlane.xlu0 %4103
  %v4105 = vsel %vm1222, %v3937, 0.0
  %4106 = vadd.xlane.f32.xlu0 %v4105
  %v4107 = vpop.xlane.xlu0 %4106
  %v4108 = vsel %vm1222, %v3940, 0.0
  %4109 = vadd.xlane.f32.xlu0 %v4108
  %v4110 = vpop.xlane.xlu0 %4109
  %v4111 = vsel %vm1222, %v3945, 0.0
  %4112 = vadd.xlane.f32.xlu0 %v4111
  %v4113 = vpop.xlane.xlu0 %4112
  %v4114 = vsel %vm1222, %v3948, 0.0
  %4115 = vadd.xlane.f32.xlu0 %v4114
  %v4116 = vpop.xlane.xlu0 %4115
  %v4117 = vsel %vm1222, %v3953, 0.0
  %4118 = vadd.xlane.f32.xlu0 %v4117
  %v4119 = vpop.xlane.xlu0 %4118
  %v4120 = vsel %vm1222, %v3956, 0.0
  %4121 = vadd.xlane.f32.xlu0 %v4120
  %v4122 = vpop.xlane.xlu0 %4121
  %v4123 = vsel %vm1222, %v3961, 0.0
  %4124 = vadd.xlane.f32.xlu0 %v4123
  %v4125 = vpop.xlane.xlu0 %4124
  %v4126 = vsel %vm1222, %v3964, 0.0
  %4127 = vadd.xlane.f32.xlu0 %v4126
  %v4128 = vpop.xlane.xlu0 %4127
  %v4129 = vsel %vm1222, %v3969, 0.0
  %4130 = vadd.xlane.f32.xlu0 %v4129
  %v4131 = vpop.xlane.xlu0 %4130
  %v4132 = vsel %vm1222, %v3972, 0.0
  %4133 = vadd.xlane.f32.xlu0 %v4132
  %v4134 = vpop.xlane.xlu0 %4133
  %v4135 = vsel %vm1222, %v3977, 0.0
  %4136 = vadd.xlane.f32.xlu0 %v4135
  %v4137 = vpop.xlane.xlu0 %4136
  %v4138 = vsel %vm1222, %v3980, 0.0
  %4139 = vadd.xlane.f32.xlu0 %v4138
  %v4140 = vpop.xlane.xlu0 %4139
  %v4141 = vsel %vm1222, %v3985, 0.0
  %4142 = vadd.xlane.f32.xlu0 %v4141
  %v4143 = vpop.xlane.xlu0 %4142
  %v4144 = vsel %vm1222, %v3988, 0.0
  %4145 = vadd.xlane.f32.xlu0 %v4144
  %v4146 = vpop.xlane.xlu0 %4145
  %v4147 = vsel %vm1222, %v3993, 0.0
  %4148 = vadd.xlane.f32.xlu0 %v4147
  %v4149 = vpop.xlane.xlu0 %4148
  %v4150 = vsel %vm1222, %v3996, 0.0
  %4151 = vadd.xlane.f32.xlu0 %v4150
  %v4152 = vpop.xlane.xlu0 %4151
  %v4153 = vsel %vm1222, %v4001, 0.0
  %4154 = vadd.xlane.f32.xlu0 %v4153
  %v4155 = vpop.xlane.xlu0 %4154
  %v4156 = vsel %vm1222, %v4004, 0.0
  %4157 = vadd.xlane.f32.xlu0 %v4156
  %v4158 = vpop.xlane.xlu0 %4157
  %v4159 = vsel %vm1222, %v4009, 0.0
  %4160 = vadd.xlane.f32.xlu0 %v4159
  %v4161 = vpop.xlane.xlu0 %4160
  %v4162 = vsel %vm1222, %v4012, 0.0
  %4163 = vadd.xlane.f32.xlu0 %v4162
  %v4164 = vpop.xlane.xlu0 %4163
  %v4165 = vmul.f32 %v4017, %v1373
  %v4166 = vmul.f32 %v4020, %v1373
  %v4167 = vmul.f32 %v4023, %v1373
  %v4168 = vmul.f32 %v4026, %v1373
  %v4169 = vmul.f32 %v4029, %v1373
  %v4170 = vmul.f32 %v4032, %v1373
  %v4171 = vmul.f32 %v4035, %v1373
  %v4172 = vmul.f32 %v4038, %v1373
  %v4173 = vmul.f32 %v4041, %v1373
  %v4174 = vmul.f32 %v4044, %v1373
  %v4175 = vmul.f32 %v4047, %v1373
  %v4176 = vmul.f32 %v4050, %v1373
  %v4177 = vmul.f32 %v4053, %v1373
  %v4178 = vmul.f32 %v4056, %v1373
  %v4179 = vmul.f32 %v4059, %v1373
  %v4180 = vmul.f32 %v4062, %v1373
  %v4181 = vmul.f32 %v4065, %v1373
  %v4182 = vmul.f32 %v4068, %v1373
  %v4183 = vmul.f32 %v4071, %v1373
  %v4184 = vmul.f32 %v4074, %v1373
  %v4185 = vmul.f32 %v4077, %v1373
  %v4186 = vmul.f32 %v4080, %v1373
  %v4187 = vmul.f32 %v4083, %v1373
  %v4188 = vmul.f32 %v4086, %v1373
  %v4189 = vmul.f32 %v4089, %v1373
  %v4190 = vmul.f32 %v4092, %v1373
  %v4191 = vmul.f32 %v4095, %v1373
  %v4192 = vmul.f32 %v4098, %v1373
  %v4193 = vmul.f32 %v4101, %v1373
  %v4194 = vmul.f32 %v4104, %v1373
  %v4195 = vmul.f32 %v4107, %v1373
  %v4196 = vmul.f32 %v4110, %v1373
  %v4197 = vmul.f32 %v4113, %v1373
  %v4198 = vmul.f32 %v4116, %v1373
  %v4199 = vmul.f32 %v4119, %v1373
  %v4200 = vmul.f32 %v4122, %v1373
  %v4201 = vmul.f32 %v4125, %v1373
  %v4202 = vmul.f32 %v4128, %v1373
  %v4203 = vmul.f32 %v4131, %v1373
  %v4204 = vmul.f32 %v4134, %v1373
  %v4205 = vmul.f32 %v4137, %v1373
  %v4206 = vmul.f32 %v4140, %v1373
  %v4207 = vmul.f32 %v4143, %v1373
  %v4208 = vmul.f32 %v4146, %v1373
  %v4209 = vmul.f32 %v4149, %v1373
  %v4210 = vmul.f32 %v4152, %v1373
  %v4211 = vmul.f32 %v4155, %v1373
  %v4212 = vmul.f32 %v4158, %v1373
  %v4213 = vmul.f32 %v4161, %v1373
  %v4214 = vmul.f32 %v4164, %v1373
  %v4215 = vmul.f32 %v3817, %v3817
  %v4216 = vmul.f32 %v3820, %v3820
  %v4217 = vmul.f32 %v3825, %v3825
  %v4218 = vmul.f32 %v3828, %v3828
  %v4219 = vmul.f32 %v3833, %v3833
  %v4220 = vmul.f32 %v3836, %v3836
  %v4221 = vmul.f32 %v3841, %v3841
  %v4222 = vmul.f32 %v3844, %v3844
  %v4223 = vmul.f32 %v3849, %v3849
  %v4224 = vmul.f32 %v3852, %v3852
  %v4225 = vmul.f32 %v3857, %v3857
  %v4226 = vmul.f32 %v3860, %v3860
  %v4227 = vmul.f32 %v3865, %v3865
  %v4228 = vmul.f32 %v3868, %v3868
  %v4229 = vmul.f32 %v3873, %v3873
  %v4230 = vmul.f32 %v3876, %v3876
  %v4231 = vmul.f32 %v3881, %v3881
  %v4232 = vmul.f32 %v3884, %v3884
  %v4233 = vmul.f32 %v3889, %v3889
  %v4234 = vmul.f32 %v3892, %v3892
  %v4235 = vmul.f32 %v3897, %v3897
  %v4236 = vmul.f32 %v3900, %v3900
  %v4237 = vmul.f32 %v3905, %v3905
  %v4238 = vmul.f32 %v3908, %v3908
  %v4239 = vmul.f32 %v3913, %v3913
  %v4240 = vmul.f32 %v3916, %v3916
  %v4241 = vmul.f32 %v3921, %v3921
  %v4242 = vmul.f32 %v3924, %v3924
  %v4243 = vmul.f32 %v3929, %v3929
  %v4244 = vmul.f32 %v3932, %v3932
  %v4245 = vmul.f32 %v3937, %v3937
  %v4246 = vmul.f32 %v3940, %v3940
  %v4247 = vmul.f32 %v3945, %v3945
  %v4248 = vmul.f32 %v3948, %v3948
  %v4249 = vmul.f32 %v3953, %v3953
  %v4250 = vmul.f32 %v3956, %v3956
  %v4251 = vmul.f32 %v3961, %v3961
  %v4252 = vmul.f32 %v3964, %v3964
  %v4253 = vmul.f32 %v3969, %v3969
  %v4254 = vmul.f32 %v3972, %v3972
  %v4255 = vmul.f32 %v3977, %v3977
  %v4256 = vmul.f32 %v3980, %v3980
  %v4257 = vmul.f32 %v3985, %v3985
  %v4258 = vmul.f32 %v3988, %v3988
  %v4259 = vmul.f32 %v3993, %v3993
  %v4260 = vmul.f32 %v3996, %v3996
  %v4261 = vmul.f32 %v4001, %v4001
  %v4262 = vmul.f32 %v4004, %v4004
  %v4263 = vmul.f32 %v4009, %v4009
  %v4264 = vmul.f32 %v4012, %v4012
  %v4265 = vsel %vm1222, %v4215, 0.0
  %4266 = vadd.xlane.f32.xlu0 %v4265
  %v4267 = vpop.xlane.xlu0 %4266
  %v4268 = vsel %vm1222, %v4216, 0.0
  %4269 = vadd.xlane.f32.xlu0 %v4268
  %v4270 = vpop.xlane.xlu0 %4269
  %v4271 = vsel %vm1222, %v4217, 0.0
  %4272 = vadd.xlane.f32.xlu0 %v4271
  %v4273 = vpop.xlane.xlu0 %4272
  %v4274 = vsel %vm1222, %v4218, 0.0
  %4275 = vadd.xlane.f32.xlu0 %v4274
  %v4276 = vpop.xlane.xlu0 %4275
  %v4277 = vsel %vm1222, %v4219, 0.0
  %4278 = vadd.xlane.f32.xlu0 %v4277
  %v4279 = vpop.xlane.xlu0 %4278
  %v4280 = vsel %vm1222, %v4220, 0.0
  %4281 = vadd.xlane.f32.xlu0 %v4280
  %v4282 = vpop.xlane.xlu0 %4281
  %v4283 = vsel %vm1222, %v4221, 0.0
  %4284 = vadd.xlane.f32.xlu0 %v4283
  %v4285 = vpop.xlane.xlu0 %4284
  %v4286 = vsel %vm1222, %v4222, 0.0
  %4287 = vadd.xlane.f32.xlu0 %v4286
  %v4288 = vpop.xlane.xlu0 %4287
  %v4289 = vsel %vm1222, %v4223, 0.0
  %4290 = vadd.xlane.f32.xlu0 %v4289
  %v4291 = vpop.xlane.xlu0 %4290
  %v4292 = vsel %vm1222, %v4224, 0.0
  %4293 = vadd.xlane.f32.xlu0 %v4292
  %v4294 = vpop.xlane.xlu0 %4293
  %v4295 = vsel %vm1222, %v4225, 0.0
  %4296 = vadd.xlane.f32.xlu0 %v4295
  %v4297 = vpop.xlane.xlu0 %4296
  %v4298 = vsel %vm1222, %v4226, 0.0
  %4299 = vadd.xlane.f32.xlu0 %v4298
  %v4300 = vpop.xlane.xlu0 %4299
  %v4301 = vsel %vm1222, %v4227, 0.0
  %4302 = vadd.xlane.f32.xlu0 %v4301
  %v4303 = vpop.xlane.xlu0 %4302
  %v4304 = vsel %vm1222, %v4228, 0.0
  %4305 = vadd.xlane.f32.xlu0 %v4304
  %v4306 = vpop.xlane.xlu0 %4305
  %v4307 = vsel %vm1222, %v4229, 0.0
  %4308 = vadd.xlane.f32.xlu0 %v4307
  %v4309 = vpop.xlane.xlu0 %4308
  %v4310 = vsel %vm1222, %v4230, 0.0
  %4311 = vadd.xlane.f32.xlu0 %v4310
  %v4312 = vpop.xlane.xlu0 %4311
  %v4313 = vsel %vm1222, %v4231, 0.0
  %4314 = vadd.xlane.f32.xlu0 %v4313
  %v4315 = vpop.xlane.xlu0 %4314
  %v4316 = vsel %vm1222, %v4232, 0.0
  %4317 = vadd.xlane.f32.xlu0 %v4316
  %v4318 = vpop.xlane.xlu0 %4317
  %v4319 = vsel %vm1222, %v4233, 0.0
  %4320 = vadd.xlane.f32.xlu0 %v4319
  %v4321 = vpop.xlane.xlu0 %4320
  %v4322 = vsel %vm1222, %v4234, 0.0
  %4323 = vadd.xlane.f32.xlu0 %v4322
  %v4324 = vpop.xlane.xlu0 %4323
  %v4325 = vsel %vm1222, %v4235, 0.0
  %4326 = vadd.xlane.f32.xlu0 %v4325
  %v4327 = vpop.xlane.xlu0 %4326
  %v4328 = vsel %vm1222, %v4236, 0.0
  %4329 = vadd.xlane.f32.xlu0 %v4328
  %v4330 = vpop.xlane.xlu0 %4329
  %v4331 = vsel %vm1222, %v4237, 0.0
  %4332 = vadd.xlane.f32.xlu0 %v4331
  %v4333 = vpop.xlane.xlu0 %4332
  %v4334 = vsel %vm1222, %v4238, 0.0
  %4335 = vadd.xlane.f32.xlu0 %v4334
  %v4336 = vpop.xlane.xlu0 %4335
  %v4337 = vsel %vm1222, %v4239, 0.0
  %4338 = vadd.xlane.f32.xlu0 %v4337
  %v4339 = vpop.xlane.xlu0 %4338
  %v4340 = vsel %vm1222, %v4240, 0.0
  %4341 = vadd.xlane.f32.xlu0 %v4340
  %v4342 = vpop.xlane.xlu0 %4341
  %v4343 = vsel %vm1222, %v4241, 0.0
  %4344 = vadd.xlane.f32.xlu0 %v4343
  %v4345 = vpop.xlane.xlu0 %4344
  %v4346 = vsel %vm1222, %v4242, 0.0
  %4347 = vadd.xlane.f32.xlu0 %v4346
  %v4348 = vpop.xlane.xlu0 %4347
  %v4349 = vsel %vm1222, %v4243, 0.0
  %4350 = vadd.xlane.f32.xlu0 %v4349
  %v4351 = vpop.xlane.xlu0 %4350
  %v4352 = vsel %vm1222, %v4244, 0.0
  %4353 = vadd.xlane.f32.xlu0 %v4352
  %v4354 = vpop.xlane.xlu0 %4353
  %v4355 = vsel %vm1222, %v4245, 0.0
  %4356 = vadd.xlane.f32.xlu0 %v4355
  %v4357 = vpop.xlane.xlu0 %4356
  %v4358 = vsel %vm1222, %v4246, 0.0
  %4359 = vadd.xlane.f32.xlu0 %v4358
  %v4360 = vpop.xlane.xlu0 %4359
  %v4361 = vsel %vm1222, %v4247, 0.0
  %4362 = vadd.xlane.f32.xlu0 %v4361
  %v4363 = vpop.xlane.xlu0 %4362
  %v4364 = vsel %vm1222, %v4248, 0.0
  %4365 = vadd.xlane.f32.xlu0 %v4364
  %v4366 = vpop.xlane.xlu0 %4365
  %v4367 = vsel %vm1222, %v4249, 0.0
  %4368 = vadd.xlane.f32.xlu0 %v4367
  %v4369 = vpop.xlane.xlu0 %4368
  %v4370 = vsel %vm1222, %v4250, 0.0
  %4371 = vadd.xlane.f32.xlu0 %v4370
  %v4372 = vpop.xlane.xlu0 %4371
  %v4373 = vsel %vm1222, %v4251, 0.0
  %4374 = vadd.xlane.f32.xlu0 %v4373
  %v4375 = vpop.xlane.xlu0 %4374
  %v4376 = vsel %vm1222, %v4252, 0.0
  %4377 = vadd.xlane.f32.xlu0 %v4376
  %v4378 = vpop.xlane.xlu0 %4377
  %v4379 = vsel %vm1222, %v4253, 0.0
  %4380 = vadd.xlane.f32.xlu0 %v4379
  %v4381 = vpop.xlane.xlu0 %4380
  %v4382 = vsel %vm1222, %v4254, 0.0
  %4383 = vadd.xlane.f32.xlu0 %v4382
  %v4384 = vpop.xlane.xlu0 %4383
  %v4385 = vsel %vm1222, %v4255, 0.0
  %4386 = vadd.xlane.f32.xlu0 %v4385
  %v4387 = vpop.xlane.xlu0 %4386
  %v4388 = vsel %vm1222, %v4256, 0.0
  %4389 = vadd.xlane.f32.xlu0 %v4388
  %v4390 = vpop.xlane.xlu0 %4389
  %v4391 = vsel %vm1222, %v4257, 0.0
  %4392 = vadd.xlane.f32.xlu0 %v4391
  %v4393 = vpop.xlane.xlu0 %4392
  %v4394 = vsel %vm1222, %v4258, 0.0
  %4395 = vadd.xlane.f32.xlu0 %v4394
  %v4396 = vpop.xlane.xlu0 %4395
  %v4397 = vsel %vm1222, %v4259, 0.0
  %4398 = vadd.xlane.f32.xlu0 %v4397
  %v4399 = vpop.xlane.xlu0 %4398
  %v4400 = vsel %vm1222, %v4260, 0.0
  %4401 = vadd.xlane.f32.xlu0 %v4400
  %v4402 = vpop.xlane.xlu0 %4401
  %v4403 = vsel %vm1222, %v4261, 0.0
  %4404 = vadd.xlane.f32.xlu0 %v4403
  %v4405 = vpop.xlane.xlu0 %4404
  %v4406 = vsel %vm1222, %v4262, 0.0
  %4407 = vadd.xlane.f32.xlu0 %v4406
  %v4408 = vpop.xlane.xlu0 %4407
  %v4409 = vsel %vm1222, %v4263, 0.0
  %4410 = vadd.xlane.f32.xlu0 %v4409
  %v4411 = vpop.xlane.xlu0 %4410
  %v4412 = vsel %vm1222, %v4264, 0.0
  %4413 = vadd.xlane.f32.xlu0 %v4412
  %v4414 = vpop.xlane.xlu0 %4413
  %v4415 = vmul.f32 %v4267, %v1373
  %v4416 = vmul.f32 %v4270, %v1373
  %v4417 = vmul.f32 %v4273, %v1373
  %v4418 = vmul.f32 %v4276, %v1373
  %v4419 = vmul.f32 %v4279, %v1373
  %v4420 = vmul.f32 %v4282, %v1373
  %v4421 = vmul.f32 %v4285, %v1373
  %v4422 = vmul.f32 %v4288, %v1373
  %v4423 = vmul.f32 %v4291, %v1373
  %v4424 = vmul.f32 %v4294, %v1373
  %v4425 = vmul.f32 %v4297, %v1373
  %v4426 = vmul.f32 %v4300, %v1373
  %v4427 = vmul.f32 %v4303, %v1373
  %v4428 = vmul.f32 %v4306, %v1373
  %v4429 = vmul.f32 %v4309, %v1373
  %v4430 = vmul.f32 %v4312, %v1373
  %v4431 = vmul.f32 %v4315, %v1373
  %v4432 = vmul.f32 %v4318, %v1373
  %v4433 = vmul.f32 %v4321, %v1373
  %v4434 = vmul.f32 %v4324, %v1373
  %v4435 = vmul.f32 %v4327, %v1373
  %v4436 = vmul.f32 %v4330, %v1373
  %v4437 = vmul.f32 %v4333, %v1373
  %v4438 = vmul.f32 %v4336, %v1373
  %v4439 = vmul.f32 %v4339, %v1373
  %v4440 = vmul.f32 %v4342, %v1373
  %v4441 = vmul.f32 %v4345, %v1373
  %v4442 = vmul.f32 %v4348, %v1373
  %v4443 = vmul.f32 %v4351, %v1373
  %v4444 = vmul.f32 %v4354, %v1373
  %v4445 = vmul.f32 %v4357, %v1373
  %v4446 = vmul.f32 %v4360, %v1373
  %v4447 = vmul.f32 %v4363, %v1373
  %v4448 = vmul.f32 %v4366, %v1373
  %v4449 = vmul.f32 %v4369, %v1373
  %v4450 = vmul.f32 %v4372, %v1373
  %v4451 = vmul.f32 %v4375, %v1373
  %v4452 = vmul.f32 %v4378, %v1373
  %v4453 = vmul.f32 %v4381, %v1373
  %v4454 = vmul.f32 %v4384, %v1373
  %v4455 = vmul.f32 %v4387, %v1373
  %v4456 = vmul.f32 %v4390, %v1373
  %v4457 = vmul.f32 %v4393, %v1373
  %v4458 = vmul.f32 %v4396, %v1373
  %v4459 = vmul.f32 %v4399, %v1373
  %v4460 = vmul.f32 %v4402, %v1373
  %v4461 = vmul.f32 %v4405, %v1373
  %v4462 = vmul.f32 %v4408, %v1373
  %v4463 = vmul.f32 %v4411, %v1373
  %v4464 = vmul.f32 %v4414, %v1373
  %v4465 = vmul.f32 %v4165, %v4165
  %v4466 = vmul.f32 %v4166, %v4166
  %v4467 = vmul.f32 %v4167, %v4167
  %v4468 = vmul.f32 %v4168, %v4168
  %v4469 = vmul.f32 %v4169, %v4169
  %v4470 = vmul.f32 %v4170, %v4170
  %v4471 = vmul.f32 %v4171, %v4171
  %v4472 = vmul.f32 %v4172, %v4172
  %v4473 = vmul.f32 %v4173, %v4173
  %v4474 = vmul.f32 %v4174, %v4174
  %v4475 = vmul.f32 %v4175, %v4175
  %v4476 = vmul.f32 %v4176, %v4176
  %v4477 = vmul.f32 %v4177, %v4177
  %v4478 = vmul.f32 %v4178, %v4178
  %v4479 = vmul.f32 %v4179, %v4179
  %v4480 = vmul.f32 %v4180, %v4180
  %v4481 = vmul.f32 %v4181, %v4181
  %v4482 = vmul.f32 %v4182, %v4182
  %v4483 = vmul.f32 %v4183, %v4183
  %v4484 = vmul.f32 %v4184, %v4184
  %v4485 = vmul.f32 %v4185, %v4185
  %v4486 = vmul.f32 %v4186, %v4186
  %v4487 = vmul.f32 %v4187, %v4187
  %v4488 = vmul.f32 %v4188, %v4188
  %v4489 = vmul.f32 %v4189, %v4189
  %v4490 = vmul.f32 %v4190, %v4190
  %v4491 = vmul.f32 %v4191, %v4191
  %v4492 = vmul.f32 %v4192, %v4192
  %v4493 = vmul.f32 %v4193, %v4193
  %v4494 = vmul.f32 %v4194, %v4194
  %v4495 = vmul.f32 %v4195, %v4195
  %v4496 = vmul.f32 %v4196, %v4196
  %v4497 = vmul.f32 %v4197, %v4197
  %v4498 = vmul.f32 %v4198, %v4198
  %v4499 = vmul.f32 %v4199, %v4199
  %v4500 = vmul.f32 %v4200, %v4200
  %v4501 = vmul.f32 %v4201, %v4201
  %v4502 = vmul.f32 %v4202, %v4202
  %v4503 = vmul.f32 %v4203, %v4203
  %v4504 = vmul.f32 %v4204, %v4204
  %v4505 = vmul.f32 %v4205, %v4205
  %v4506 = vmul.f32 %v4206, %v4206
  %v4507 = vmul.f32 %v4207, %v4207
  %v4508 = vmul.f32 %v4208, %v4208
  %v4509 = vmul.f32 %v4209, %v4209
  %v4510 = vmul.f32 %v4210, %v4210
  %v4511 = vmul.f32 %v4211, %v4211
  %v4512 = vmul.f32 %v4212, %v4212
  %v4513 = vmul.f32 %v4213, %v4213
  %v4514 = vmul.f32 %v4214, %v4214
  %v4515 = vsub.f32 %v4415, %v4465
  %v4516 = vsub.f32 %v4416, %v4466
  %v4517 = vsub.f32 %v4417, %v4467
  %v4518 = vsub.f32 %v4418, %v4468
  %v4519 = vsub.f32 %v4419, %v4469
  %v4520 = vsub.f32 %v4420, %v4470
  %v4521 = vsub.f32 %v4421, %v4471
  %v4522 = vsub.f32 %v4422, %v4472
  %v4523 = vsub.f32 %v4423, %v4473
  %v4524 = vsub.f32 %v4424, %v4474
  %v4525 = vsub.f32 %v4425, %v4475
  %v4526 = vsub.f32 %v4426, %v4476
  %v4527 = vsub.f32 %v4427, %v4477
  %v4528 = vsub.f32 %v4428, %v4478
  %v4529 = vsub.f32 %v4429, %v4479
  %v4530 = vsub.f32 %v4430, %v4480
  %v4531 = vsub.f32 %v4431, %v4481
  %v4532 = vsub.f32 %v4432, %v4482
  %v4533 = vsub.f32 %v4433, %v4483
  %v4534 = vsub.f32 %v4434, %v4484
  %v4535 = vsub.f32 %v4435, %v4485
  %v4536 = vsub.f32 %v4436, %v4486
  %v4537 = vsub.f32 %v4437, %v4487
  %v4538 = vsub.f32 %v4438, %v4488
  %v4539 = vsub.f32 %v4439, %v4489
  %v4540 = vsub.f32 %v4440, %v4490
  %v4541 = vsub.f32 %v4441, %v4491
  %v4542 = vsub.f32 %v4442, %v4492
  %v4543 = vsub.f32 %v4443, %v4493
  %v4544 = vsub.f32 %v4444, %v4494
  %v4545 = vsub.f32 %v4445, %v4495
  %v4546 = vsub.f32 %v4446, %v4496
  %v4547 = vsub.f32 %v4447, %v4497
  %v4548 = vsub.f32 %v4448, %v4498
  %v4549 = vsub.f32 %v4449, %v4499
  %v4550 = vsub.f32 %v4450, %v4500
  %v4551 = vsub.f32 %v4451, %v4501
  %v4552 = vsub.f32 %v4452, %v4502
  %v4553 = vsub.f32 %v4453, %v4503
  %v4554 = vsub.f32 %v4454, %v4504
  %v4555 = vsub.f32 %v4455, %v4505
  %v4556 = vsub.f32 %v4456, %v4506
  %v4557 = vsub.f32 %v4457, %v4507
  %v4558 = vsub.f32 %v4458, %v4508
  %v4559 = vsub.f32 %v4459, %v4509
  %v4560 = vsub.f32 %v4460, %v4510
  %v4561 = vsub.f32 %v4461, %v4511
  %v4562 = vsub.f32 %v4462, %v4512
  %v4563 = vsub.f32 %v4463, %v4513
  %v4564 = vsub.f32 %v4464, %v4514
  %v4565 = vld [vmem:[%s6] sm:$0xff]
  %v4566 = vld [vmem:[%s6 + $0x8] sm:$0xff]
  %v4567 = vld [vmem:[%s6 + $0x10] sm:$0xff]
  %v4568 = vld [vmem:[%s6 + $0x18] sm:$0xff]
  %v4569 = vld [vmem:[%s6 + $0x20] sm:$0xff]
  %v4570 = vld [vmem:[%s6 + $0x28] sm:$0xff]
  %v4571 = vld [vmem:[%s6 + $0x30] sm:$0xff]
  %v4572 = vld [vmem:[%s6 + $0x38] sm:$0xff]
  %v4573 = vld [vmem:[%s6 + $0x40] sm:$0xff]
  %v4574 = vld [vmem:[%s6 + $0x48] sm:$0xff]
  %v4575 = vld [vmem:[%s6 + $0x50] sm:$0xff]
  %v4576 = vld [vmem:[%s6 + $0x58] sm:$0xff]
  %v4577 = vld [vmem:[%s6 + $0x60] sm:$0xff]
  %v4578 = vld [vmem:[%s6 + $0x68] sm:$0xff]
  %v4579 = vld [vmem:[%s6 + $0x70] sm:$0xff]
  %v4580 = vld [vmem:[%s6 + $0x78] sm:$0xff]
  %v4581 = vld [vmem:[%s6 + $0x80] sm:$0xff]
  %v4582 = vld [vmem:[%s6 + $0x88] sm:$0xff]
  %v4583 = vld [vmem:[%s6 + $0x90] sm:$0xff]
  %v4584 = vld [vmem:[%s6 + $0x98] sm:$0xff]
  %v4585 = vld [vmem:[%s6 + $0xa0] sm:$0xff]
  %v4586 = vld [vmem:[%s6 + $0xa8] sm:$0xff]
  %v4587 = vld [vmem:[%s6 + $0xb0] sm:$0xff]
  %v4588 = vld [vmem:[%s6 + $0xb8] sm:$0xff]
  %v4589 = vld [vmem:[%s6 + $0xc0] sm:$0xff]
  %v4590 = vld [vmem:[%s6 + $0xc8] sm:$0xff]
  %v4591 = vld [vmem:[%s6 + $0xd0] sm:$0xff]
  %v4592 = vld [vmem:[%s6 + $0xd8] sm:$0xff]
  %v4593 = vld [vmem:[%s6 + $0xe0] sm:$0xff]
  %v4594 = vld [vmem:[%s6 + $0xe8] sm:$0xff]
  %v4595 = vld [vmem:[%s6 + $0xf0] sm:$0xff]
  %v4596 = vld [vmem:[%s6 + $0xf8] sm:$0xff]
  %v4597 = vld [vmem:[%s6 + $0x100] sm:$0xff]
  %v4598 = vld [vmem:[%s6 + $0x108] sm:$0xff]
  %v4599 = vld [vmem:[%s6 + $0x110] sm:$0xff]
  %v4600 = vld [vmem:[%s6 + $0x118] sm:$0xff]
  %v4601 = vld [vmem:[%s6 + $0x120] sm:$0xff]
  %v4602 = vld [vmem:[%s6 + $0x128] sm:$0xff]
  %v4603 = vld [vmem:[%s6 + $0x130] sm:$0xff]
  %v4604 = vld [vmem:[%s6 + $0x138] sm:$0xff]
  %v4605 = vld [vmem:[%s6 + $0x140] sm:$0xff]
  %v4606 = vld [vmem:[%s6 + $0x148] sm:$0xff]
  %v4607 = vld [vmem:[%s6 + $0x150] sm:$0xff]
  %v4608 = vld [vmem:[%s6 + $0x158] sm:$0xff]
  %v4609 = vld [vmem:[%s6 + $0x160] sm:$0xff]
  %v4610 = vld [vmem:[%s6 + $0x168] sm:$0xff]
  %v4611 = vld [vmem:[%s6 + $0x170] sm:$0xff]
  %v4612 = vld [vmem:[%s6 + $0x178] sm:$0xff]
  %v4613 = vld [vmem:[%s6 + $0x180] sm:$0xff]
  %v4614 = vld [vmem:[%s6 + $0x188] sm:$0xff]
  %v4615 = vadd.f32 %v4515, 1e-05
  %v4616 = vadd.f32 %v4516, 1e-05
  %v4617 = vadd.f32 %v4517, 1e-05
  %v4618 = vadd.f32 %v4518, 1e-05
  %v4619 = vadd.f32 %v4519, 1e-05
  %v4620 = vadd.f32 %v4520, 1e-05
  %v4621 = vadd.f32 %v4521, 1e-05
  %v4622 = vadd.f32 %v4522, 1e-05
  %v4623 = vadd.f32 %v4523, 1e-05
  %v4624 = vadd.f32 %v4524, 1e-05
  %v4625 = vadd.f32 %v4525, 1e-05
  %v4626 = vadd.f32 %v4526, 1e-05
  %v4627 = vadd.f32 %v4527, 1e-05
  %v4628 = vadd.f32 %v4528, 1e-05
  %v4629 = vadd.f32 %v4529, 1e-05
  %v4630 = vadd.f32 %v4530, 1e-05
  %v4631 = vadd.f32 %v4531, 1e-05
  %v4632 = vadd.f32 %v4532, 1e-05
  %v4633 = vadd.f32 %v4533, 1e-05
  %v4634 = vadd.f32 %v4534, 1e-05
  %v4635 = vadd.f32 %v4535, 1e-05
  %v4636 = vadd.f32 %v4536, 1e-05
  %v4637 = vadd.f32 %v4537, 1e-05
  %v4638 = vadd.f32 %v4538, 1e-05
  %v4639 = vadd.f32 %v4539, 1e-05
  %v4640 = vadd.f32 %v4540, 1e-05
  %v4641 = vadd.f32 %v4541, 1e-05
  %v4642 = vadd.f32 %v4542, 1e-05
  %v4643 = vadd.f32 %v4543, 1e-05
  %v4644 = vadd.f32 %v4544, 1e-05
  %v4645 = vadd.f32 %v4545, 1e-05
  %v4646 = vadd.f32 %v4546, 1e-05
  %v4647 = vadd.f32 %v4547, 1e-05
  %v4648 = vadd.f32 %v4548, 1e-05
  %v4649 = vadd.f32 %v4549, 1e-05
  %v4650 = vadd.f32 %v4550, 1e-05
  %v4651 = vadd.f32 %v4551, 1e-05
  %v4652 = vadd.f32 %v4552, 1e-05
  %v4653 = vadd.f32 %v4553, 1e-05
  %v4654 = vadd.f32 %v4554, 1e-05
  %v4655 = vadd.f32 %v4555, 1e-05
  %v4656 = vadd.f32 %v4556, 1e-05
  %v4657 = vadd.f32 %v4557, 1e-05
  %v4658 = vadd.f32 %v4558, 1e-05
  %v4659 = vadd.f32 %v4559, 1e-05
  %v4660 = vadd.f32 %v4560, 1e-05
  %v4661 = vadd.f32 %v4561, 1e-05
  %v4662 = vadd.f32 %v4562, 1e-05
  %v4663 = vadd.f32 %v4563, 1e-05
  %v4664 = vadd.f32 %v4564, 1e-05
  %v4665 = vrsqrt.pop %v4615
  %v4666 = vrsqrt.pop %v4616
  %v4667 = vrsqrt.pop %v4617
  %v4668 = vrsqrt.pop %v4618
  %v4669 = vrsqrt.pop %v4619
  %v4670 = vrsqrt.pop %v4620
  %v4671 = vrsqrt.pop %v4621
  %v4672 = vrsqrt.pop %v4622
  %v4673 = vrsqrt.pop %v4623
  %v4674 = vrsqrt.pop %v4624
  %v4675 = vrsqrt.pop %v4625
  %v4676 = vrsqrt.pop %v4626
  %v4677 = vrsqrt.pop %v4627
  %v4678 = vrsqrt.pop %v4628
  %v4679 = vrsqrt.pop %v4629
  %v4680 = vrsqrt.pop %v4630
  %v4681 = vrsqrt.pop %v4631
  %v4682 = vrsqrt.pop %v4632
  %v4683 = vrsqrt.pop %v4633
  %v4684 = vrsqrt.pop %v4634
  %v4685 = vrsqrt.pop %v4635
  %v4686 = vrsqrt.pop %v4636
  %v4687 = vrsqrt.pop %v4637
  %v4688 = vrsqrt.pop %v4638
  %v4689 = vrsqrt.pop %v4639
  %v4690 = vrsqrt.pop %v4640
  %v4691 = vrsqrt.pop %v4641
  %v4692 = vrsqrt.pop %v4642
  %v4693 = vrsqrt.pop %v4643
  %v4694 = vrsqrt.pop %v4644
  %v4695 = vrsqrt.pop %v4645
  %v4696 = vrsqrt.pop %v4646
  %v4697 = vrsqrt.pop %v4647
  %v4698 = vrsqrt.pop %v4648
  %v4699 = vrsqrt.pop %v4649
  %v4700 = vrsqrt.pop %v4650
  %v4701 = vrsqrt.pop %v4651
  %v4702 = vrsqrt.pop %v4652
  %v4703 = vrsqrt.pop %v4653
  %v4704 = vrsqrt.pop %v4654
  %v4705 = vrsqrt.pop %v4655
  %v4706 = vrsqrt.pop %v4656
  %v4707 = vrsqrt.pop %v4657
  %v4708 = vrsqrt.pop %v4658
  %v4709 = vrsqrt.pop %v4659
  %v4710 = vrsqrt.pop %v4660
  %v4711 = vrsqrt.pop %v4661
  %v4712 = vrsqrt.pop %v4662
  %v4713 = vrsqrt.pop %v4663
  %v4714 = vrsqrt.pop %v4664
  %v4715 = vmul.f32 %v4565, %v4665
  %v4716 = vmul.f32 %v4566, %v4666
  %v4717 = vmul.f32 %v4567, %v4667
  %v4718 = vmul.f32 %v4568, %v4668
  %v4719 = vmul.f32 %v4569, %v4669
  %v4720 = vmul.f32 %v4570, %v4670
  %v4721 = vmul.f32 %v4571, %v4671
  %v4722 = vmul.f32 %v4572, %v4672
  %v4723 = vmul.f32 %v4573, %v4673
  %v4724 = vmul.f32 %v4574, %v4674
  %v4725 = vmul.f32 %v4575, %v4675
  %v4726 = vmul.f32 %v4576, %v4676
  %v4727 = vmul.f32 %v4577, %v4677
  %v4728 = vmul.f32 %v4578, %v4678
  %v4729 = vmul.f32 %v4579, %v4679
  %v4730 = vmul.f32 %v4580, %v4680
  %v4731 = vmul.f32 %v4581, %v4681
  %v4732 = vmul.f32 %v4582, %v4682
  %v4733 = vmul.f32 %v4583, %v4683
  %v4734 = vmul.f32 %v4584, %v4684
  %v4735 = vmul.f32 %v4585, %v4685
  %v4736 = vmul.f32 %v4586, %v4686
  %v4737 = vmul.f32 %v4587, %v4687
  %v4738 = vmul.f32 %v4588, %v4688
  %v4739 = vmul.f32 %v4589, %v4689
  %v4740 = vmul.f32 %v4590, %v4690
  %v4741 = vmul.f32 %v4591, %v4691
  %v4742 = vmul.f32 %v4592, %v4692
  %v4743 = vmul.f32 %v4593, %v4693
  %v4744 = vmul.f32 %v4594, %v4694
  %v4745 = vmul.f32 %v4595, %v4695
  %v4746 = vmul.f32 %v4596, %v4696
  %v4747 = vmul.f32 %v4597, %v4697
  %v4748 = vmul.f32 %v4598, %v4698
  %v4749 = vmul.f32 %v4599, %v4699
  %v4750 = vmul.f32 %v4600, %v4700
  %v4751 = vmul.f32 %v4601, %v4701
  %v4752 = vmul.f32 %v4602, %v4702
  %v4753 = vmul.f32 %v4603, %v4703
  %v4754 = vmul.f32 %v4604, %v4704
  %v4755 = vmul.f32 %v4605, %v4705
  %v4756 = vmul.f32 %v4606, %v4706
  %v4757 = vmul.f32 %v4607, %v4707
  %v4758 = vmul.f32 %v4608, %v4708
  %v4759 = vmul.f32 %v4609, %v4709
  %v4760 = vmul.f32 %v4610, %v4710
  %v4761 = vmul.f32 %v4611, %v4711
  %v4762 = vmul.f32 %v4612, %v4712
  %v4763 = vmul.f32 %v4613, %v4713
  %v4764 = vmul.f32 %v4614, %v4714
  %v4765 = vld [vmem:[%s7] sm:$0xff]
  %v4766 = vld [vmem:[%s7 + $0x8] sm:$0xff]
  %v4767 = vld [vmem:[%s7 + $0x10] sm:$0xff]
  %v4768 = vld [vmem:[%s7 + $0x18] sm:$0xff]
  %v4769 = vld [vmem:[%s7 + $0x20] sm:$0xff]
  %v4770 = vld [vmem:[%s7 + $0x28] sm:$0xff]
  %v4771 = vld [vmem:[%s7 + $0x30] sm:$0xff]
  %v4772 = vld [vmem:[%s7 + $0x38] sm:$0xff]
  %v4773 = vld [vmem:[%s7 + $0x40] sm:$0xff]
  %v4774 = vld [vmem:[%s7 + $0x48] sm:$0xff]
  %v4775 = vld [vmem:[%s7 + $0x50] sm:$0xff]
  %v4776 = vld [vmem:[%s7 + $0x58] sm:$0xff]
  %v4777 = vld [vmem:[%s7 + $0x60] sm:$0xff]
  %v4778 = vld [vmem:[%s7 + $0x68] sm:$0xff]
  %v4779 = vld [vmem:[%s7 + $0x70] sm:$0xff]
  %v4780 = vld [vmem:[%s7 + $0x78] sm:$0xff]
  %v4781 = vld [vmem:[%s7 + $0x80] sm:$0xff]
  %v4782 = vld [vmem:[%s7 + $0x88] sm:$0xff]
  %v4783 = vld [vmem:[%s7 + $0x90] sm:$0xff]
  %v4784 = vld [vmem:[%s7 + $0x98] sm:$0xff]
  %v4785 = vld [vmem:[%s7 + $0xa0] sm:$0xff]
  %v4786 = vld [vmem:[%s7 + $0xa8] sm:$0xff]
  %v4787 = vld [vmem:[%s7 + $0xb0] sm:$0xff]
  %v4788 = vld [vmem:[%s7 + $0xb8] sm:$0xff]
  %v4789 = vld [vmem:[%s7 + $0xc0] sm:$0xff]
  %v4790 = vld [vmem:[%s7 + $0xc8] sm:$0xff]
  %v4791 = vld [vmem:[%s7 + $0xd0] sm:$0xff]
  %v4792 = vld [vmem:[%s7 + $0xd8] sm:$0xff]
  %v4793 = vld [vmem:[%s7 + $0xe0] sm:$0xff]
  %v4794 = vld [vmem:[%s7 + $0xe8] sm:$0xff]
  %v4795 = vld [vmem:[%s7 + $0xf0] sm:$0xff]
  %v4796 = vld [vmem:[%s7 + $0xf8] sm:$0xff]
  %v4797 = vld [vmem:[%s7 + $0x100] sm:$0xff]
  %v4798 = vld [vmem:[%s7 + $0x108] sm:$0xff]
  %v4799 = vld [vmem:[%s7 + $0x110] sm:$0xff]
  %v4800 = vld [vmem:[%s7 + $0x118] sm:$0xff]
  %v4801 = vld [vmem:[%s7 + $0x120] sm:$0xff]
  %v4802 = vld [vmem:[%s7 + $0x128] sm:$0xff]
  %v4803 = vld [vmem:[%s7 + $0x130] sm:$0xff]
  %v4804 = vld [vmem:[%s7 + $0x138] sm:$0xff]
  %v4805 = vld [vmem:[%s7 + $0x140] sm:$0xff]
  %v4806 = vld [vmem:[%s7 + $0x148] sm:$0xff]
  %v4807 = vld [vmem:[%s7 + $0x150] sm:$0xff]
  %v4808 = vld [vmem:[%s7 + $0x158] sm:$0xff]
  %v4809 = vld [vmem:[%s7 + $0x160] sm:$0xff]
  %v4810 = vld [vmem:[%s7 + $0x168] sm:$0xff]
  %v4811 = vld [vmem:[%s7 + $0x170] sm:$0xff]
  %v4812 = vld [vmem:[%s7 + $0x178] sm:$0xff]
  %v4813 = vld [vmem:[%s7 + $0x180] sm:$0xff]
  %v4814 = vld [vmem:[%s7 + $0x188] sm:$0xff]
  %v4815 = vmul.f32 %v4165, %v4715
  %v4816 = vmul.f32 %v4166, %v4716
  %v4817 = vmul.f32 %v4167, %v4717
  %v4818 = vmul.f32 %v4168, %v4718
  %v4819 = vmul.f32 %v4169, %v4719
  %v4820 = vmul.f32 %v4170, %v4720
  %v4821 = vmul.f32 %v4171, %v4721
  %v4822 = vmul.f32 %v4172, %v4722
  %v4823 = vmul.f32 %v4173, %v4723
  %v4824 = vmul.f32 %v4174, %v4724
  %v4825 = vmul.f32 %v4175, %v4725
  %v4826 = vmul.f32 %v4176, %v4726
  %v4827 = vmul.f32 %v4177, %v4727
  %v4828 = vmul.f32 %v4178, %v4728
  %v4829 = vmul.f32 %v4179, %v4729
  %v4830 = vmul.f32 %v4180, %v4730
  %v4831 = vmul.f32 %v4181, %v4731
  %v4832 = vmul.f32 %v4182, %v4732
  %v4833 = vmul.f32 %v4183, %v4733
  %v4834 = vmul.f32 %v4184, %v4734
  %v4835 = vmul.f32 %v4185, %v4735
  %v4836 = vmul.f32 %v4186, %v4736
  %v4837 = vmul.f32 %v4187, %v4737
  %v4838 = vmul.f32 %v4188, %v4738
  %v4839 = vmul.f32 %v4189, %v4739
  %v4840 = vmul.f32 %v4190, %v4740
  %v4841 = vmul.f32 %v4191, %v4741
  %v4842 = vmul.f32 %v4192, %v4742
  %v4843 = vmul.f32 %v4193, %v4743
  %v4844 = vmul.f32 %v4194, %v4744
  %v4845 = vmul.f32 %v4195, %v4745
  %v4846 = vmul.f32 %v4196, %v4746
  %v4847 = vmul.f32 %v4197, %v4747
  %v4848 = vmul.f32 %v4198, %v4748
  %v4849 = vmul.f32 %v4199, %v4749
  %v4850 = vmul.f32 %v4200, %v4750
  %v4851 = vmul.f32 %v4201, %v4751
  %v4852 = vmul.f32 %v4202, %v4752
  %v4853 = vmul.f32 %v4203, %v4753
  %v4854 = vmul.f32 %v4204, %v4754
  %v4855 = vmul.f32 %v4205, %v4755
  %v4856 = vmul.f32 %v4206, %v4756
  %v4857 = vmul.f32 %v4207, %v4757
  %v4858 = vmul.f32 %v4208, %v4758
  %v4859 = vmul.f32 %v4209, %v4759
  %v4860 = vmul.f32 %v4210, %v4760
  %v4861 = vmul.f32 %v4211, %v4761
  %v4862 = vmul.f32 %v4212, %v4762
  %v4863 = vmul.f32 %v4213, %v4763
  %v4864 = vmul.f32 %v4214, %v4764
  %v4865 = vsub.f32 %v4765, %v4815
  %v4866 = vsub.f32 %v4766, %v4816
  %v4867 = vsub.f32 %v4767, %v4817
  %v4868 = vsub.f32 %v4768, %v4818
  %v4869 = vsub.f32 %v4769, %v4819
  %v4870 = vsub.f32 %v4770, %v4820
  %v4871 = vsub.f32 %v4771, %v4821
  %v4872 = vsub.f32 %v4772, %v4822
  %v4873 = vsub.f32 %v4773, %v4823
  %v4874 = vsub.f32 %v4774, %v4824
  %v4875 = vsub.f32 %v4775, %v4825
  %v4876 = vsub.f32 %v4776, %v4826
  %v4877 = vsub.f32 %v4777, %v4827
  %v4878 = vsub.f32 %v4778, %v4828
  %v4879 = vsub.f32 %v4779, %v4829
  %v4880 = vsub.f32 %v4780, %v4830
  %v4881 = vsub.f32 %v4781, %v4831
  %v4882 = vsub.f32 %v4782, %v4832
  %v4883 = vsub.f32 %v4783, %v4833
  %v4884 = vsub.f32 %v4784, %v4834
  %v4885 = vsub.f32 %v4785, %v4835
  %v4886 = vsub.f32 %v4786, %v4836
  %v4887 = vsub.f32 %v4787, %v4837
  %v4888 = vsub.f32 %v4788, %v4838
  %v4889 = vsub.f32 %v4789, %v4839
  %v4890 = vsub.f32 %v4790, %v4840
  %v4891 = vsub.f32 %v4791, %v4841
  %v4892 = vsub.f32 %v4792, %v4842
  %v4893 = vsub.f32 %v4793, %v4843
  %v4894 = vsub.f32 %v4794, %v4844
  %v4895 = vsub.f32 %v4795, %v4845
  %v4896 = vsub.f32 %v4796, %v4846
  %v4897 = vsub.f32 %v4797, %v4847
  %v4898 = vsub.f32 %v4798, %v4848
  %v4899 = vsub.f32 %v4799, %v4849
  %v4900 = vsub.f32 %v4800, %v4850
  %v4901 = vsub.f32 %v4801, %v4851
  %v4902 = vsub.f32 %v4802, %v4852
  %v4903 = vsub.f32 %v4803, %v4853
  %v4904 = vsub.f32 %v4804, %v4854
  %v4905 = vsub.f32 %v4805, %v4855
  %v4906 = vsub.f32 %v4806, %v4856
  %v4907 = vsub.f32 %v4807, %v4857
  %v4908 = vsub.f32 %v4808, %v4858
  %v4909 = vsub.f32 %v4809, %v4859
  %v4910 = vsub.f32 %v4810, %v4860
  %v4911 = vsub.f32 %v4811, %v4861
  %v4912 = vsub.f32 %v4812, %v4862
  %v4913 = vsub.f32 %v4813, %v4863
  %v4914 = vsub.f32 %v4814, %v4864
  %4916 = vset.pattern.permute.xlu0 0
  %4917 = vperm.xlu0 %4916, %v4715
  %v4918 = vpop.permute.xlu0 %4917
  %4921 = vset.pattern.permute.xlu0 0
  %4922 = vperm.xlu0 %4921, %v4716
  %v4923 = vpop.permute.xlu0 %4922
  %4926 = vset.pattern.permute.xlu0 0
  %4927 = vperm.xlu0 %4926, %v4717
  %v4928 = vpop.permute.xlu0 %4927
  %4931 = vset.pattern.permute.xlu0 0
  %4932 = vperm.xlu0 %4931, %v4718
  %v4933 = vpop.permute.xlu0 %4932
  %4936 = vset.pattern.permute.xlu0 0
  %4937 = vperm.xlu0 %4936, %v4719
  %v4938 = vpop.permute.xlu0 %4937
  %4941 = vset.pattern.permute.xlu0 0
  %4942 = vperm.xlu0 %4941, %v4720
  %v4943 = vpop.permute.xlu0 %4942
  %4946 = vset.pattern.permute.xlu0 0
  %4947 = vperm.xlu0 %4946, %v4721
  %v4948 = vpop.permute.xlu0 %4947
  %4951 = vset.pattern.permute.xlu0 0
  %4952 = vperm.xlu0 %4951, %v4722
  %v4953 = vpop.permute.xlu0 %4952
  %4956 = vset.pattern.permute.xlu0 0
  %4957 = vperm.xlu0 %4956, %v4723
  %v4958 = vpop.permute.xlu0 %4957
  %4961 = vset.pattern.permute.xlu0 0
  %4962 = vperm.xlu0 %4961, %v4724
  %v4963 = vpop.permute.xlu0 %4962
  %4966 = vset.pattern.permute.xlu0 0
  %4967 = vperm.xlu0 %4966, %v4725
  %v4968 = vpop.permute.xlu0 %4967
  %4971 = vset.pattern.permute.xlu0 0
  %4972 = vperm.xlu0 %4971, %v4726
  %v4973 = vpop.permute.xlu0 %4972
  %4976 = vset.pattern.permute.xlu0 0
  %4977 = vperm.xlu0 %4976, %v4727
  %v4978 = vpop.permute.xlu0 %4977
  %4981 = vset.pattern.permute.xlu0 0
  %4982 = vperm.xlu0 %4981, %v4728
  %v4983 = vpop.permute.xlu0 %4982
  %4986 = vset.pattern.permute.xlu0 0
  %4987 = vperm.xlu0 %4986, %v4729
  %v4988 = vpop.permute.xlu0 %4987
  %4991 = vset.pattern.permute.xlu0 0
  %4992 = vperm.xlu0 %4991, %v4730
  %v4993 = vpop.permute.xlu0 %4992
  %4996 = vset.pattern.permute.xlu0 0
  %4997 = vperm.xlu0 %4996, %v4731
  %v4998 = vpop.permute.xlu0 %4997
  %5001 = vset.pattern.permute.xlu0 0
  %5002 = vperm.xlu0 %5001, %v4732
  %v5003 = vpop.permute.xlu0 %5002
  %5006 = vset.pattern.permute.xlu0 0
  %5007 = vperm.xlu0 %5006, %v4733
  %v5008 = vpop.permute.xlu0 %5007
  %5011 = vset.pattern.permute.xlu0 0
  %5012 = vperm.xlu0 %5011, %v4734
  %v5013 = vpop.permute.xlu0 %5012
  %5016 = vset.pattern.permute.xlu0 0
  %5017 = vperm.xlu0 %5016, %v4735
  %v5018 = vpop.permute.xlu0 %5017
  %5021 = vset.pattern.permute.xlu0 0
  %5022 = vperm.xlu0 %5021, %v4736
  %v5023 = vpop.permute.xlu0 %5022
  %5026 = vset.pattern.permute.xlu0 0
  %5027 = vperm.xlu0 %5026, %v4737
  %v5028 = vpop.permute.xlu0 %5027
  %5031 = vset.pattern.permute.xlu0 0
  %5032 = vperm.xlu0 %5031, %v4738
  %v5033 = vpop.permute.xlu0 %5032
  %5036 = vset.pattern.permute.xlu0 0
  %5037 = vperm.xlu0 %5036, %v4739
  %v5038 = vpop.permute.xlu0 %5037
  %5041 = vset.pattern.permute.xlu0 0
  %5042 = vperm.xlu0 %5041, %v4740
  %v5043 = vpop.permute.xlu0 %5042
  %5046 = vset.pattern.permute.xlu0 0
  %5047 = vperm.xlu0 %5046, %v4741
  %v5048 = vpop.permute.xlu0 %5047
  %5051 = vset.pattern.permute.xlu0 0
  %5052 = vperm.xlu0 %5051, %v4742
  %v5053 = vpop.permute.xlu0 %5052
  %5056 = vset.pattern.permute.xlu0 0
  %5057 = vperm.xlu0 %5056, %v4743
  %v5058 = vpop.permute.xlu0 %5057
  %5061 = vset.pattern.permute.xlu0 0
  %5062 = vperm.xlu0 %5061, %v4744
  %v5063 = vpop.permute.xlu0 %5062
  %5066 = vset.pattern.permute.xlu0 0
  %5067 = vperm.xlu0 %5066, %v4745
  %v5068 = vpop.permute.xlu0 %5067
  %5071 = vset.pattern.permute.xlu0 0
  %5072 = vperm.xlu0 %5071, %v4746
  %v5073 = vpop.permute.xlu0 %5072
  %5076 = vset.pattern.permute.xlu0 0
  %5077 = vperm.xlu0 %5076, %v4747
  %v5078 = vpop.permute.xlu0 %5077
  %5081 = vset.pattern.permute.xlu0 0
  %5082 = vperm.xlu0 %5081, %v4748
  %v5083 = vpop.permute.xlu0 %5082
  %5086 = vset.pattern.permute.xlu0 0
  %5087 = vperm.xlu0 %5086, %v4749
  %v5088 = vpop.permute.xlu0 %5087
  %5091 = vset.pattern.permute.xlu0 0
  %5092 = vperm.xlu0 %5091, %v4750
  %v5093 = vpop.permute.xlu0 %5092
  %5096 = vset.pattern.permute.xlu0 0
  %5097 = vperm.xlu0 %5096, %v4751
  %v5098 = vpop.permute.xlu0 %5097
  %5101 = vset.pattern.permute.xlu0 0
  %5102 = vperm.xlu0 %5101, %v4752
  %v5103 = vpop.permute.xlu0 %5102
  %5106 = vset.pattern.permute.xlu0 0
  %5107 = vperm.xlu0 %5106, %v4753
  %v5108 = vpop.permute.xlu0 %5107
  %5111 = vset.pattern.permute.xlu0 0
  %5112 = vperm.xlu0 %5111, %v4754
  %v5113 = vpop.permute.xlu0 %5112
  %5116 = vset.pattern.permute.xlu0 0
  %5117 = vperm.xlu0 %5116, %v4755
  %v5118 = vpop.permute.xlu0 %5117
  %5121 = vset.pattern.permute.xlu0 0
  %5122 = vperm.xlu0 %5121, %v4756
  %v5123 = vpop.permute.xlu0 %5122
  %5126 = vset.pattern.permute.xlu0 0
  %5127 = vperm.xlu0 %5126, %v4757
  %v5128 = vpop.permute.xlu0 %5127
  %5131 = vset.pattern.permute.xlu0 0
  %5132 = vperm.xlu0 %5131, %v4758
  %v5133 = vpop.permute.xlu0 %5132
  %5136 = vset.pattern.permute.xlu0 0
  %5137 = vperm.xlu0 %5136, %v4759
  %v5138 = vpop.permute.xlu0 %5137
  %5141 = vset.pattern.permute.xlu0 0
  %5142 = vperm.xlu0 %5141, %v4760
  %v5143 = vpop.permute.xlu0 %5142
  %5146 = vset.pattern.permute.xlu0 0
  %5147 = vperm.xlu0 %5146, %v4761
  %v5148 = vpop.permute.xlu0 %5147
  %5151 = vset.pattern.permute.xlu0 0
  %5152 = vperm.xlu0 %5151, %v4762
  %v5153 = vpop.permute.xlu0 %5152
  %5156 = vset.pattern.permute.xlu0 0
  %5157 = vperm.xlu0 %5156, %v4763
  %v5158 = vpop.permute.xlu0 %5157
  %5161 = vset.pattern.permute.xlu0 0
  %5162 = vperm.xlu0 %5161, %v4764
  %v5163 = vpop.permute.xlu0 %5162
  %v5165 = vmul.f32 %v3817, %v4918
  %v5166 = vmul.f32 %v3820, %v4923
  %v5167 = vmul.f32 %v3825, %v4928
  %v5168 = vmul.f32 %v3828, %v4933
  %v5169 = vmul.f32 %v3833, %v4938
  %v5170 = vmul.f32 %v3836, %v4943
  %v5171 = vmul.f32 %v3841, %v4948
  %v5172 = vmul.f32 %v3844, %v4953
  %v5173 = vmul.f32 %v3849, %v4958
  %v5174 = vmul.f32 %v3852, %v4963
  %v5175 = vmul.f32 %v3857, %v4968
  %v5176 = vmul.f32 %v3860, %v4973
  %v5177 = vmul.f32 %v3865, %v4978
  %v5178 = vmul.f32 %v3868, %v4983
  %v5179 = vmul.f32 %v3873, %v4988
  %v5180 = vmul.f32 %v3876, %v4993
  %v5181 = vmul.f32 %v3881, %v4998
  %v5182 = vmul.f32 %v3884, %v5003
  %v5183 = vmul.f32 %v3889, %v5008
  %v5184 = vmul.f32 %v3892, %v5013
  %v5185 = vmul.f32 %v3897, %v5018
  %v5186 = vmul.f32 %v3900, %v5023
  %v5187 = vmul.f32 %v3905, %v5028
  %v5188 = vmul.f32 %v3908, %v5033
  %v5189 = vmul.f32 %v3913, %v5038
  %v5190 = vmul.f32 %v3916, %v5043
  %v5191 = vmul.f32 %v3921, %v5048
  %v5192 = vmul.f32 %v3924, %v5053
  %v5193 = vmul.f32 %v3929, %v5058
  %v5194 = vmul.f32 %v3932, %v5063
  %v5195 = vmul.f32 %v3937, %v5068
  %v5196 = vmul.f32 %v3940, %v5073
  %v5197 = vmul.f32 %v3945, %v5078
  %v5198 = vmul.f32 %v3948, %v5083
  %v5199 = vmul.f32 %v3953, %v5088
  %v5200 = vmul.f32 %v3956, %v5093
  %v5201 = vmul.f32 %v3961, %v5098
  %v5202 = vmul.f32 %v3964, %v5103
  %v5203 = vmul.f32 %v3969, %v5108
  %v5204 = vmul.f32 %v3972, %v5113
  %v5205 = vmul.f32 %v3977, %v5118
  %v5206 = vmul.f32 %v3980, %v5123
  %v5207 = vmul.f32 %v3985, %v5128
  %v5208 = vmul.f32 %v3988, %v5133
  %v5209 = vmul.f32 %v3993, %v5138
  %v5210 = vmul.f32 %v3996, %v5143
  %v5211 = vmul.f32 %v4001, %v5148
  %v5212 = vmul.f32 %v4004, %v5153
  %v5213 = vmul.f32 %v4009, %v5158
  %v5214 = vmul.f32 %v4012, %v5163
  %5216 = vset.pattern.permute.xlu0 0
  %5217 = vperm.xlu0 %5216, %v4865
  %v5218 = vpop.permute.xlu0 %5217
  %5221 = vset.pattern.permute.xlu0 0
  %5222 = vperm.xlu0 %5221, %v4866
  %v5223 = vpop.permute.xlu0 %5222
  %5226 = vset.pattern.permute.xlu0 0
  %5227 = vperm.xlu0 %5226, %v4867
  %v5228 = vpop.permute.xlu0 %5227
  %5231 = vset.pattern.permute.xlu0 0
  %5232 = vperm.xlu0 %5231, %v4868
  %v5233 = vpop.permute.xlu0 %5232
  %5236 = vset.pattern.permute.xlu0 0
  %5237 = vperm.xlu0 %5236, %v4869
  %v5238 = vpop.permute.xlu0 %5237
  %5241 = vset.pattern.permute.xlu0 0
  %5242 = vperm.xlu0 %5241, %v4870
  %v5243 = vpop.permute.xlu0 %5242
  %5246 = vset.pattern.permute.xlu0 0
  %5247 = vperm.xlu0 %5246, %v4871
  %v5248 = vpop.permute.xlu0 %5247
  %5251 = vset.pattern.permute.xlu0 0
  %5252 = vperm.xlu0 %5251, %v4872
  %v5253 = vpop.permute.xlu0 %5252
  %5256 = vset.pattern.permute.xlu0 0
  %5257 = vperm.xlu0 %5256, %v4873
  %v5258 = vpop.permute.xlu0 %5257
  %5261 = vset.pattern.permute.xlu0 0
  %5262 = vperm.xlu0 %5261, %v4874
  %v5263 = vpop.permute.xlu0 %5262
  %5266 = vset.pattern.permute.xlu0 0
  %5267 = vperm.xlu0 %5266, %v4875
  %v5268 = vpop.permute.xlu0 %5267
  %5271 = vset.pattern.permute.xlu0 0
  %5272 = vperm.xlu0 %5271, %v4876
  %v5273 = vpop.permute.xlu0 %5272
  %5276 = vset.pattern.permute.xlu0 0
  %5277 = vperm.xlu0 %5276, %v4877
  %v5278 = vpop.permute.xlu0 %5277
  %5281 = vset.pattern.permute.xlu0 0
  %5282 = vperm.xlu0 %5281, %v4878
  %v5283 = vpop.permute.xlu0 %5282
  %5286 = vset.pattern.permute.xlu0 0
  %5287 = vperm.xlu0 %5286, %v4879
  %v5288 = vpop.permute.xlu0 %5287
  %5291 = vset.pattern.permute.xlu0 0
  %5292 = vperm.xlu0 %5291, %v4880
  %v5293 = vpop.permute.xlu0 %5292
  %5296 = vset.pattern.permute.xlu0 0
  %5297 = vperm.xlu0 %5296, %v4881
  %v5298 = vpop.permute.xlu0 %5297
  %5301 = vset.pattern.permute.xlu0 0
  %5302 = vperm.xlu0 %5301, %v4882
  %v5303 = vpop.permute.xlu0 %5302
  %5306 = vset.pattern.permute.xlu0 0
  %5307 = vperm.xlu0 %5306, %v4883
  %v5308 = vpop.permute.xlu0 %5307
  %5311 = vset.pattern.permute.xlu0 0
  %5312 = vperm.xlu0 %5311, %v4884
  %v5313 = vpop.permute.xlu0 %5312
  %5316 = vset.pattern.permute.xlu0 0
  %5317 = vperm.xlu0 %5316, %v4885
  %v5318 = vpop.permute.xlu0 %5317
  %5321 = vset.pattern.permute.xlu0 0
  %5322 = vperm.xlu0 %5321, %v4886
  %v5323 = vpop.permute.xlu0 %5322
  %5326 = vset.pattern.permute.xlu0 0
  %5327 = vperm.xlu0 %5326, %v4887
  %v5328 = vpop.permute.xlu0 %5327
  %5331 = vset.pattern.permute.xlu0 0
  %5332 = vperm.xlu0 %5331, %v4888
  %v5333 = vpop.permute.xlu0 %5332
  %5336 = vset.pattern.permute.xlu0 0
  %5337 = vperm.xlu0 %5336, %v4889
  %v5338 = vpop.permute.xlu0 %5337
  %5341 = vset.pattern.permute.xlu0 0
  %5342 = vperm.xlu0 %5341, %v4890
  %v5343 = vpop.permute.xlu0 %5342
  %5346 = vset.pattern.permute.xlu0 0
  %5347 = vperm.xlu0 %5346, %v4891
  %v5348 = vpop.permute.xlu0 %5347
  %5351 = vset.pattern.permute.xlu0 0
  %5352 = vperm.xlu0 %5351, %v4892
  %v5353 = vpop.permute.xlu0 %5352
  %5356 = vset.pattern.permute.xlu0 0
  %5357 = vperm.xlu0 %5356, %v4893
  %v5358 = vpop.permute.xlu0 %5357
  %5361 = vset.pattern.permute.xlu0 0
  %5362 = vperm.xlu0 %5361, %v4894
  %v5363 = vpop.permute.xlu0 %5362
  %5366 = vset.pattern.permute.xlu0 0
  %5367 = vperm.xlu0 %5366, %v4895
  %v5368 = vpop.permute.xlu0 %5367
  %5371 = vset.pattern.permute.xlu0 0
  %5372 = vperm.xlu0 %5371, %v4896
  %v5373 = vpop.permute.xlu0 %5372
  %5376 = vset.pattern.permute.xlu0 0
  %5377 = vperm.xlu0 %5376, %v4897
  %v5378 = vpop.permute.xlu0 %5377
  %5381 = vset.pattern.permute.xlu0 0
  %5382 = vperm.xlu0 %5381, %v4898
  %v5383 = vpop.permute.xlu0 %5382
  %5386 = vset.pattern.permute.xlu0 0
  %5387 = vperm.xlu0 %5386, %v4899
  %v5388 = vpop.permute.xlu0 %5387
  %5391 = vset.pattern.permute.xlu0 0
  %5392 = vperm.xlu0 %5391, %v4900
  %v5393 = vpop.permute.xlu0 %5392
  %5396 = vset.pattern.permute.xlu0 0
  %5397 = vperm.xlu0 %5396, %v4901
  %v5398 = vpop.permute.xlu0 %5397
  %5401 = vset.pattern.permute.xlu0 0
  %5402 = vperm.xlu0 %5401, %v4902
  %v5403 = vpop.permute.xlu0 %5402
  %5406 = vset.pattern.permute.xlu0 0
  %5407 = vperm.xlu0 %5406, %v4903
  %v5408 = vpop.permute.xlu0 %5407
  %5411 = vset.pattern.permute.xlu0 0
  %5412 = vperm.xlu0 %5411, %v4904
  %v5413 = vpop.permute.xlu0 %5412
  %5416 = vset.pattern.permute.xlu0 0
  %5417 = vperm.xlu0 %5416, %v4905
  %v5418 = vpop.permute.xlu0 %5417
  %5421 = vset.pattern.permute.xlu0 0
  %5422 = vperm.xlu0 %5421, %v4906
  %v5423 = vpop.permute.xlu0 %5422
  %5426 = vset.pattern.permute.xlu0 0
  %5427 = vperm.xlu0 %5426, %v4907
  %v5428 = vpop.permute.xlu0 %5427
  %5431 = vset.pattern.permute.xlu0 0
  %5432 = vperm.xlu0 %5431, %v4908
  %v5433 = vpop.permute.xlu0 %5432
  %5436 = vset.pattern.permute.xlu0 0
  %5437 = vperm.xlu0 %5436, %v4909
  %v5438 = vpop.permute.xlu0 %5437
  %5441 = vset.pattern.permute.xlu0 0
  %5442 = vperm.xlu0 %5441, %v4910
  %v5443 = vpop.permute.xlu0 %5442
  %5446 = vset.pattern.permute.xlu0 0
  %5447 = vperm.xlu0 %5446, %v4911
  %v5448 = vpop.permute.xlu0 %5447
  %5451 = vset.pattern.permute.xlu0 0
  %5452 = vperm.xlu0 %5451, %v4912
  %v5453 = vpop.permute.xlu0 %5452
  %5456 = vset.pattern.permute.xlu0 0
  %5457 = vperm.xlu0 %5456, %v4913
  %v5458 = vpop.permute.xlu0 %5457
  %5461 = vset.pattern.permute.xlu0 0
  %5462 = vperm.xlu0 %5461, %v4914
  %v5463 = vpop.permute.xlu0 %5462
  %v5465 = vadd.f32 %v5165, %v5218
  %v5466 = vadd.f32 %v5166, %v5223
  %v5467 = vadd.f32 %v5167, %v5228
  %v5468 = vadd.f32 %v5168, %v5233
  %v5469 = vadd.f32 %v5169, %v5238
  %v5470 = vadd.f32 %v5170, %v5243
  %v5471 = vadd.f32 %v5171, %v5248
  %v5472 = vadd.f32 %v5172, %v5253
  %v5473 = vadd.f32 %v5173, %v5258
  %v5474 = vadd.f32 %v5174, %v5263
  %v5475 = vadd.f32 %v5175, %v5268
  %v5476 = vadd.f32 %v5176, %v5273
  %v5477 = vadd.f32 %v5177, %v5278
  %v5478 = vadd.f32 %v5178, %v5283
  %v5479 = vadd.f32 %v5179, %v5288
  %v5480 = vadd.f32 %v5180, %v5293
  %v5481 = vadd.f32 %v5181, %v5298
  %v5482 = vadd.f32 %v5182, %v5303
  %v5483 = vadd.f32 %v5183, %v5308
  %v5484 = vadd.f32 %v5184, %v5313
  %v5485 = vadd.f32 %v5185, %v5318
  %v5486 = vadd.f32 %v5186, %v5323
  %v5487 = vadd.f32 %v5187, %v5328
  %v5488 = vadd.f32 %v5188, %v5333
  %v5489 = vadd.f32 %v5189, %v5338
  %v5490 = vadd.f32 %v5190, %v5343
  %v5491 = vadd.f32 %v5191, %v5348
  %v5492 = vadd.f32 %v5192, %v5353
  %v5493 = vadd.f32 %v5193, %v5358
  %v5494 = vadd.f32 %v5194, %v5363
  %v5495 = vadd.f32 %v5195, %v5368
  %v5496 = vadd.f32 %v5196, %v5373
  %v5497 = vadd.f32 %v5197, %v5378
  %v5498 = vadd.f32 %v5198, %v5383
  %v5499 = vadd.f32 %v5199, %v5388
  %v5500 = vadd.f32 %v5200, %v5393
  %v5501 = vadd.f32 %v5201, %v5398
  %v5502 = vadd.f32 %v5202, %v5403
  %v5503 = vadd.f32 %v5203, %v5408
  %v5504 = vadd.f32 %v5204, %v5413
  %v5505 = vadd.f32 %v5205, %v5418
  %v5506 = vadd.f32 %v5206, %v5423
  %v5507 = vadd.f32 %v5207, %v5428
  %v5508 = vadd.f32 %v5208, %v5433
  %v5509 = vadd.f32 %v5209, %v5438
  %v5510 = vadd.f32 %v5210, %v5443
  %v5511 = vadd.f32 %v5211, %v5448
  %v5512 = vadd.f32 %v5212, %v5453
  %v5513 = vadd.f32 %v5213, %v5458
  %v5514 = vadd.f32 %v5214, %v5463
  %5515 = vst.msk [vmem:[%s8] sm:$0xff] %vm1222, %v5465
  %5516 = vst.msk [vmem:[%s8 + $0x8] sm:$0xff] %vm1222, %v5466
  %5517 = vst.msk [vmem:[%s8 + $0x10] sm:$0xff] %vm1222, %v5467
  %5518 = vst.msk [vmem:[%s8 + $0x18] sm:$0xff] %vm1222, %v5468
  %5519 = vst.msk [vmem:[%s8 + $0x20] sm:$0xff] %vm1222, %v5469
  %5520 = vst.msk [vmem:[%s8 + $0x28] sm:$0xff] %vm1222, %v5470
  %5521 = vst.msk [vmem:[%s8 + $0x30] sm:$0xff] %vm1222, %v5471
  %5522 = vst.msk [vmem:[%s8 + $0x38] sm:$0xff] %vm1222, %v5472
  %5523 = vst.msk [vmem:[%s8 + $0x40] sm:$0xff] %vm1222, %v5473
  %5524 = vst.msk [vmem:[%s8 + $0x48] sm:$0xff] %vm1222, %v5474
  %5525 = vst.msk [vmem:[%s8 + $0x50] sm:$0xff] %vm1222, %v5475
  %5526 = vst.msk [vmem:[%s8 + $0x58] sm:$0xff] %vm1222, %v5476
  %5527 = vst.msk [vmem:[%s8 + $0x60] sm:$0xff] %vm1222, %v5477
  %5528 = vst.msk [vmem:[%s8 + $0x68] sm:$0xff] %vm1222, %v5478
  %5529 = vst.msk [vmem:[%s8 + $0x70] sm:$0xff] %vm1222, %v5479
  %5530 = vst.msk [vmem:[%s8 + $0x78] sm:$0xff] %vm1222, %v5480
  %5531 = vst.msk [vmem:[%s8 + $0x80] sm:$0xff] %vm1222, %v5481
  %5532 = vst.msk [vmem:[%s8 + $0x88] sm:$0xff] %vm1222, %v5482
  %5533 = vst.msk [vmem:[%s8 + $0x90] sm:$0xff] %vm1222, %v5483
  %5534 = vst.msk [vmem:[%s8 + $0x98] sm:$0xff] %vm1222, %v5484
  %5535 = vst.msk [vmem:[%s8 + $0xa0] sm:$0xff] %vm1222, %v5485
  %5536 = vst.msk [vmem:[%s8 + $0xa8] sm:$0xff] %vm1222, %v5486
  %5537 = vst.msk [vmem:[%s8 + $0xb0] sm:$0xff] %vm1222, %v5487
  %5538 = vst.msk [vmem:[%s8 + $0xb8] sm:$0xff] %vm1222, %v5488
  %5539 = vst.msk [vmem:[%s8 + $0xc0] sm:$0xff] %vm1222, %v5489
  %5540 = vst.msk [vmem:[%s8 + $0xc8] sm:$0xff] %vm1222, %v5490
  %5541 = vst.msk [vmem:[%s8 + $0xd0] sm:$0xff] %vm1222, %v5491
  %5542 = vst.msk [vmem:[%s8 + $0xd8] sm:$0xff] %vm1222, %v5492
  %5543 = vst.msk [vmem:[%s8 + $0xe0] sm:$0xff] %vm1222, %v5493
  %5544 = vst.msk [vmem:[%s8 + $0xe8] sm:$0xff] %vm1222, %v5494
  %5545 = vst.msk [vmem:[%s8 + $0xf0] sm:$0xff] %vm1222, %v5495
  %5546 = vst.msk [vmem:[%s8 + $0xf8] sm:$0xff] %vm1222, %v5496
  %5547 = vst.msk [vmem:[%s8 + $0x100] sm:$0xff] %vm1222, %v5497
  %5548 = vst.msk [vmem:[%s8 + $0x108] sm:$0xff] %vm1222, %v5498
  %5549 = vst.msk [vmem:[%s8 + $0x110] sm:$0xff] %vm1222, %v5499
  %5550 = vst.msk [vmem:[%s8 + $0x118] sm:$0xff] %vm1222, %v5500
  %5551 = vst.msk [vmem:[%s8 + $0x120] sm:$0xff] %vm1222, %v5501
  %5552 = vst.msk [vmem:[%s8 + $0x128] sm:$0xff] %vm1222, %v5502
  %5553 = vst.msk [vmem:[%s8 + $0x130] sm:$0xff] %vm1222, %v5503
  %5554 = vst.msk [vmem:[%s8 + $0x138] sm:$0xff] %vm1222, %v5504
  %5555 = vst.msk [vmem:[%s8 + $0x140] sm:$0xff] %vm1222, %v5505
  %5556 = vst.msk [vmem:[%s8 + $0x148] sm:$0xff] %vm1222, %v5506
  %5557 = vst.msk [vmem:[%s8 + $0x150] sm:$0xff] %vm1222, %v5507
  %5558 = vst.msk [vmem:[%s8 + $0x158] sm:$0xff] %vm1222, %v5508
  %5559 = vst.msk [vmem:[%s8 + $0x160] sm:$0xff] %vm1222, %v5509
  %5560 = vst.msk [vmem:[%s8 + $0x168] sm:$0xff] %vm1222, %v5510
  %5561 = vst.msk [vmem:[%s8 + $0x170] sm:$0xff] %vm1222, %v5511
  %5562 = vst.msk [vmem:[%s8 + $0x178] sm:$0xff] %vm1222, %v5512
  %5563 = vst.msk [vmem:[%s8 + $0x180] sm:$0xff] %vm1222, %v5513
  %5564 = vst.msk [vmem:[%s8 + $0x188] sm:$0xff] %vm1222, %v5514
  // Predicated region
  $region34: #{fused_block.1} parent=0 // pred_check
    _
  $region35: #{fused_block.1} parent=0 // pred_check_branch
    %5566 = sbr.rel (0) target = $region37
  $region36: #{fused_block.1} parent=0 // pred_region
    _
  $region37: #{fused_block.1} parent=0 // pred_fallthru
    _
  // Predicated region
  $region38: #{fused_block.1} parent=0 // pred_check
    _
  $region39: #{fused_block.1} parent=0 // pred_check_branch
    %5568 = sbr.rel (0) target = $region41
  $region40: #{fused_block.1} parent=0 // pred_region
    _
  $region41: #{fused_block.1} parent=0 // pred_fallthru
    _

</llo_original>
